<compile_context>
chip_gen: v7x
topology: tpu7x:2x2x1
jax: 0.10.0
libtpu: 0.0.40
codegen_flags: <defaults>
</compile_context>

<pallas_src>
import functools
import math

import jax
import jax.numpy as jnp
from jax.experimental import pallas as pl
from jax.experimental.pallas import tpu as pltpu


def _mha_kernel(a_ref, b_ref,
                wq_ref, bq_ref, wkv_ref, bkv_ref,
                wo_ref, bo_ref, gamma_ref, beta_ref,
                out_ref, *, num_heads, head_dim, eps):
    H = num_heads * head_dim

    a = a_ref[0]                                   # (Sa, H) f32 — residual / LN input
    a_bf = a.astype(jnp.bfloat16)
    b_bf = b_ref[0].astype(jnp.bfloat16)           # (Sb, H)

    # Full-width projections (bf16 operands, f32 accumulation).
    # Wq already carries the 1/sqrt(head_dim) scale.
    q = jnp.dot(a_bf, wq_ref[...], preferred_element_type=jnp.float32) + bq_ref[...]     # (Sa, H)
    kv = jnp.dot(b_bf, wkv_ref[...], preferred_element_type=jnp.float32) + bkv_ref[...]  # (Sb, 2H)

    q_bf = q.astype(jnp.bfloat16)
    kv_bf = kv.astype(jnp.bfloat16)

    ctx_heads = []
    for n in range(num_heads):                     # static, fully-unrolled head loop
        lo = n * head_dim
        qh = q_bf[:, lo:lo + head_dim]             # (Sa, hd)
        kh = kv_bf[:, lo:lo + head_dim]            # (Sb, hd)
        vh = kv_bf[:, H + lo:H + lo + head_dim]    # (Sb, hd)

        # scores = (q / sqrt(hd)) @ k^T   (contract on hd; no materialized k.T)
        scores = jax.lax.dot_general(
            qh, kh, (((1,), (1,)), ((), ())),
            preferred_element_type=jnp.float32)    # (Sa, Sb) f32

        # Numerically-stable softmax with deferred normalization:
        # normalize the small (Sa, hd) context instead of the (Sa, Sb) probs.
        m = jnp.max(scores, axis=-1, keepdims=True)
        e = jnp.exp(scores - m)
        denom = jnp.sum(e, axis=-1, keepdims=True)
        ctx = jnp.dot(e.astype(jnp.bfloat16), vh,
                      preferred_element_type=jnp.float32)          # (Sa, hd)
        ctx_heads.append(ctx * pl.reciprocal(denom, approx=True))

    ctx_all = jnp.concatenate(ctx_heads, axis=-1)                  # (Sa, H) f32

    # Single full-width (K=128) dense output projection == einsum('bfnd,ndh->bfh').
    proj = jnp.dot(ctx_all.astype(jnp.bfloat16), wo_ref[...],
                   preferred_element_type=jnp.float32) + bo_ref[...]

    # residual + LayerNorm, fused, f32.
    x = a + proj
    mean = jnp.mean(x, axis=-1, keepdims=True)
    xc = x - mean
    var = jnp.mean(xc * xc, axis=-1, keepdims=True)
    inv = jax.lax.rsqrt(var + eps)
    out_ref[0] = (xc * inv) * gamma_ref[...] + beta_ref[...]


def mha_pallas(a, b, wq, bq, wkv, bkv, wo, bo, gamma, beta, *, num_heads, eps=1e-12):
    """a: (B, Sa, H)  b: (B, Sb, H)  ->  layernormed_context_layer: (B, Sa, H)."""
    B, Sa, H = a.shape
    Sb = b.shape[1]
    hd = H // num_heads

    kernel = functools.partial(_mha_kernel, num_heads=num_heads, head_dim=hd, eps=eps)

    return pl.pallas_call(
        kernel,
        out_shape=jax.ShapeDtypeStruct((B, Sa, H), jnp.float32),
        grid_spec=pltpu.PrefetchScalarGridSpec(
            num_scalar_prefetch=0,
            grid=(B,),
            in_specs=[
                pl.BlockSpec((1, Sa, H), lambda bi: (bi, 0, 0)),   # a (queries input)
                pl.BlockSpec((1, Sb, H), lambda bi: (bi, 0, 0)),   # b (keys/values input)
                # Weights / biases: constant block index -> fetched once, VMEM-resident.
                pl.BlockSpec((H, H),     lambda bi: (0, 0)),       # Wq.T * scale
                pl.BlockSpec((1, H),     lambda bi: (0, 0)),       # bq * scale
                pl.BlockSpec((H, 2 * H), lambda bi: (0, 0)),       # [Wk.T | Wv.T]
                pl.BlockSpec((1, 2 * H), lambda bi: (0, 0)),       # [bk | bv]
                pl.BlockSpec((H, H),     lambda bi: (0, 0)),       # Wd.T
                pl.BlockSpec((1, H),     lambda bi: (0, 0)),       # bd
                pl.BlockSpec((1, H),     lambda bi: (0, 0)),       # LN gamma
                pl.BlockSpec((1, H),     lambda bi: (0, 0)),       # LN beta
            ],
            out_specs=pl.BlockSpec((1, Sa, H), lambda bi: (bi, 0, 0)),
        ),
        compiler_params=pltpu.CompilerParams(
            dimension_semantics=("parallel",),
            vmem_limit_bytes=32 * 1024 * 1024),
    )(a, b, wq, bq, wkv, bkv, wo, bo, gamma, beta)


# ----------------------------------------------------------------------------
# Parameter init / packing (PyTorch nn.Linear convention: y = x @ W.T + b)
# ----------------------------------------------------------------------------
def init_params(key, H):
    std = 1.0 / math.sqrt(H)

    def uni(k, shape):
        return jax.random.uniform(k, shape, jnp.float32, -std, std)

    ks = jax.random.split(key, 8)
    return dict(
        Wq=uni(ks[0], (H, H)), bq=uni(ks[1], (H,)),
        Wk=uni(ks[2], (H, H)), bk=uni(ks[3], (H,)),
        Wv=uni(ks[4], (H, H)), bv=uni(ks[5], (H,)),
        Wd=uni(ks[6], (H, H)), bd=uni(ks[7], (H,)),
        gamma=jnp.ones((H,), jnp.float32),     # LayerNorm default init
        beta=jnp.zeros((H,), jnp.float32),
    )


def prepare_params(p, nh):
    """One-time weight prep: transpose to (in, out), fuse K|V, fold attention scale
    into Wq/bq, cast matmul weights to bf16 (biases / LN params stay f32)."""
    H = p["Wq"].shape[0]
    hd = H // nh
    scale = 1.0 / math.sqrt(hd)

    wq = (p["Wq"].T * scale).astype(jnp.bfloat16)                               # (H, H)
    bq = (p["bq"] * scale).reshape(1, H).astype(jnp.float32)
    wkv = jnp.concatenate([p["Wk"].T, p["Wv"].T], axis=1).astype(jnp.bfloat16)  # (H, 2H)
    bkv = jnp.concatenate([p["bk"], p["bv"]]).reshape(1, 2 * H).astype(jnp.float32)
    wo = p["Wd"].T.astype(jnp.bfloat16)                                         # (H, H)
    bo = p["bd"].reshape(1, H).astype(jnp.float32)
    gamma = p["gamma"].reshape(1, H).astype(jnp.float32)
    beta = p["beta"].reshape(1, H).astype(jnp.float32)
    return wq, bq, wkv, bkv, wo, bo, gamma, beta


# ----------------------------------------------------------------------------
# Pure-JAX reference (replica of MHA.forward, dropout = identity, no masks)
# ----------------------------------------------------------------------------
def mha_reference(a, b, p, nh, eps):
    B, Sa, H = a.shape
    hd = H // nh

    q = a @ p["Wq"].T + p["bq"]
    k = b @ p["Wk"].T + p["bk"]
    v = b @ p["Wv"].T + p["bv"]

    def split(x):
        Bx, Sx, _ = x.shape
        return x.reshape(Bx, Sx, nh, hd).transpose(0, 2, 1, 3)   # (B, nh, S, hd)

    qh, kh, vh = split(q), split(k), split(v)
    scores = jnp.einsum('bnqd,bnkd->bnqk', qh, kh) / math.sqrt(hd)
    probs = jax.nn.softmax(scores, axis=-1)
    ctx = jnp.einsum('bnqk,bnkd->bnqd', probs, vh)
    ctx = ctx.transpose(0, 2, 1, 3).reshape(B, Sa, H)
    proj = ctx @ p["Wd"].T + p["bd"]
    x = a + proj
    mean = x.mean(-1, keepdims=True)
    var = ((x - mean) ** 2).mean(-1, keepdims=True)
    return (x - mean) / jnp.sqrt(var + eps) * p["gamma"] + p["beta"]


if __name__ == "__main__":
    # Small config: hidden=128 (lane-dense), 4 heads, head_dim=32, seq=128, batch=2
    # (batch >= 2 keeps both v7x TensorCores busy via the "parallel" grid axis).
    B, S, H, NH = 2, 128, 128, 4
    EPS = 1e-12

    key = jax.random.PRNGKey(0)
    ka, kb, kp = jax.random.split(key, 3)
    input_ids_a = jax.random.normal(ka, (B, S, H), jnp.float32)
    input_ids_b = jax.random.normal(kb, (B, S, H), jnp.float32)

    params = init_params(kp, H)
    packed = prepare_params(params, NH)

    out = mha_pallas(input_ids_a, input_ids_b, *packed, num_heads=NH, eps=EPS)
    out = jax.block_until_ready(out)

    ref = mha_reference(input_ids_a, input_ids_b, params, NH, EPS)
    assert out.shape == (B, S, H)
    err = float(jnp.max(jnp.abs(out - ref)))
    assert jnp.allclose(out, ref, atol=2e-2, rtol=2e-2), f"mismatch vs reference (max err {err})"

    print("KERNEL_OK")
</pallas_src>

<mosaic_0001>
module attributes {stable_mosaic.version = 11 : i64} {
  func.func @_mha_kernel(%arg0: i32, %arg1: memref<1x128x128xf32, #tpu.memory_space<vmem>>, %arg2: memref<1x128x128xf32, #tpu.memory_space<vmem>>, %arg3: memref<128x128xbf16, #tpu.memory_space<vmem>>, %arg4: memref<1x128xf32, #tpu.memory_space<vmem>>, %arg5: memref<128x256xbf16, #tpu.memory_space<vmem>>, %arg6: memref<1x256xf32, #tpu.memory_space<vmem>>, %arg7: memref<128x128xbf16, #tpu.memory_space<vmem>>, %arg8: memref<1x128xf32, #tpu.memory_space<vmem>>, %arg9: memref<1x128xf32, #tpu.memory_space<vmem>>, %arg10: memref<1x128xf32, #tpu.memory_space<vmem>>, %arg11: memref<1x128x128xf32, #tpu.memory_space<vmem>>) attributes {dimension_semantics = [#tpu.dimension_semantics<parallel>], iteration_bounds = array<i64: 2>, scalar_prefetch = 0 : i64, scratch_operands = 0 : i64, tpu.core_type = #tpu.core_type<tc>, window_params = [{transform_indices = @transform_0, window_bounds = array<i64: 1, 128, 128>}, {transform_indices = @transform_1, window_bounds = array<i64: 1, 128, 128>}, {pipeline_mode = #tpu.pipeline_mode<synchronous>, transform_indices = @transform_2, window_bounds = array<i64: 128, 128>}, {pipeline_mode = #tpu.pipeline_mode<synchronous>, transform_indices = @transform_3, window_bounds = array<i64: 1, 128>}, {pipeline_mode = #tpu.pipeline_mode<synchronous>, transform_indices = @transform_4, window_bounds = array<i64: 128, 256>}, {pipeline_mode = #tpu.pipeline_mode<synchronous>, transform_indices = @transform_5, window_bounds = array<i64: 1, 256>}, {pipeline_mode = #tpu.pipeline_mode<synchronous>, transform_indices = @transform_6, window_bounds = array<i64: 128, 128>}, {pipeline_mode = #tpu.pipeline_mode<synchronous>, transform_indices = @transform_7, window_bounds = array<i64: 1, 128>}, {pipeline_mode = #tpu.pipeline_mode<synchronous>, transform_indices = @transform_8, window_bounds = array<i64: 1, 128>}, {pipeline_mode = #tpu.pipeline_mode<synchronous>, transform_indices = @transform_9, window_bounds = array<i64: 1, 128>}, {transform_indices = @transform_10, window_bounds = array<i64: 1, 128, 128>}]} {
    %c0 = arith.constant 0 : index
    %c0_0 = arith.constant 0 : index
    %c0_1 = arith.constant 0 : index
    %0 = vector.load %arg1[%c0, %c0_0, %c0_1] : memref<1x128x128xf32, #tpu.memory_space<vmem>>, vector<1x128x128xf32>
    %1 = vector.shape_cast %0 : vector<1x128x128xf32> to vector<128x128xf32>
    %2 = arith.truncf %1 : vector<128x128xf32> to vector<128x128xbf16>
    %c0_2 = arith.constant 0 : index
    %c0_3 = arith.constant 0 : index
    %c0_4 = arith.constant 0 : index
    %3 = vector.load %arg2[%c0_2, %c0_3, %c0_4] : memref<1x128x128xf32, #tpu.memory_space<vmem>>, vector<1x128x128xf32>
    %4 = vector.shape_cast %3 : vector<1x128x128xf32> to vector<128x128xf32>
    %5 = arith.truncf %4 : vector<128x128xf32> to vector<128x128xbf16>
    %c0_5 = arith.constant 0 : index
    %c0_6 = arith.constant 0 : index
    %6 = vector.load %arg3[%c0_5, %c0_6] : memref<128x128xbf16, #tpu.memory_space<vmem>>, vector<128x128xbf16>
    %cst = arith.constant dense<0.000000e+00> : vector<128x128xf32>
    %7 = tpu.matmul %2, %6, %cst {dimension_numbers = #tpu.dot_dimension_numbers<[1], [0], [0], [1], [0, 0, 1, 1], [], []>} : vector<128x128xbf16>, vector<128x128xbf16>, vector<128x128xf32> -> vector<128x128xf32>
    %c0_7 = arith.constant 0 : index
    %c0_8 = arith.constant 0 : index
    %8 = vector.load %arg4[%c0_7, %c0_8] : memref<1x128xf32, #tpu.memory_space<vmem>>, vector<1x128xf32>
    %9 = vector.broadcast %8 : vector<1x128xf32> to vector<128x128xf32>
    %10 = arith.addf %7, %9 : vector<128x128xf32>
    %c0_9 = arith.constant 0 : index
    %c0_10 = arith.constant 0 : index
    %11 = vector.load %arg5[%c0_9, %c0_10] : memref<128x256xbf16, #tpu.memory_space<vmem>>, vector<128x256xbf16>
    %cst_11 = arith.constant dense<0.000000e+00> : vector<128x256xf32>
    %12 = tpu.matmul %5, %11, %cst_11 {dimension_numbers = #tpu.dot_dimension_numbers<[1], [0], [0], [1], [0, 0, 1, 1], [], []>} : vector<128x128xbf16>, vector<128x256xbf16>, vector<128x256xf32> -> vector<128x256xf32>
    %c0_12 = arith.constant 0 : index
    %c0_13 = arith.constant 0 : index
    %13 = vector.load %arg6[%c0_12, %c0_13] : memref<1x256xf32, #tpu.memory_space<vmem>>, vector<1x256xf32>
    %14 = vector.broadcast %13 : vector<1x256xf32> to vector<128x256xf32>
    %15 = arith.addf %12, %14 : vector<128x256xf32>
    %16 = arith.truncf %10 : vector<128x128xf32> to vector<128x128xbf16>
    %17 = arith.truncf %15 : vector<128x256xf32> to vector<128x256xbf16>
    %18 = vector.extract_strided_slice %16 {offsets = [0, 0], sizes = [128, 32], strides = [1, 1]} : vector<128x128xbf16> to vector<128x32xbf16>
    %19 = vector.extract_strided_slice %17 {offsets = [0, 0], sizes = [128, 32], strides = [1, 1]} : vector<128x256xbf16> to vector<128x32xbf16>
    %20 = vector.extract_strided_slice %17 {offsets = [0, 128], sizes = [128, 32], strides = [1, 1]} : vector<128x256xbf16> to vector<128x32xbf16>
    %cst_14 = arith.constant dense<0.000000e+00> : vector<128x128xf32>
    %21 = tpu.matmul %18, %19, %cst_14 {dimension_numbers = #tpu.dot_dimension_numbers<[1], [1], [0], [0], [0, 0, 1, 0], [], []>} : vector<128x32xbf16>, vector<128x32xbf16>, vector<128x128xf32> -> vector<128x128xf32>
    %cst_15 = arith.constant dense<0xFF800000> : vector<128xf32>
    %22 = vector.multi_reduction <maximumf>, %21, %cst_15 [1] : vector<128x128xf32> to vector<128xf32>
    %23 = vector.shape_cast %22 : vector<128xf32> to vector<128x1xf32>
    %24 = vector.broadcast %23 : vector<128x1xf32> to vector<128x128xf32>
    %25 = arith.subf %21, %24 : vector<128x128xf32>
    %26 = math.exp %25 : vector<128x128xf32>
    %cst_16 = arith.constant dense<0.000000e+00> : vector<128xf32>
    %27 = vector.multi_reduction <add>, %26, %cst_16 [1] : vector<128x128xf32> to vector<128xf32>
    %28 = vector.shape_cast %27 : vector<128xf32> to vector<128x1xf32>
    %29 = arith.truncf %26 : vector<128x128xf32> to vector<128x128xbf16>
    %cst_17 = arith.constant dense<0.000000e+00> : vector<128x32xf32>
    %30 = tpu.matmul %29, %20, %cst_17 {dimension_numbers = #tpu.dot_dimension_numbers<[1], [0], [0], [1], [0, 0, 1, 1], [], []>} : vector<128x128xbf16>, vector<128x32xbf16>, vector<128x32xf32> -> vector<128x32xf32>
    %31 = tpu.reciprocal %28 {approx = true} : vector<128x1xf32> -> vector<128x1xf32>
    %32 = vector.broadcast %31 : vector<128x1xf32> to vector<128x32xf32>
    %33 = arith.mulf %30, %32 : vector<128x32xf32>
    %34 = vector.extract_strided_slice %16 {offsets = [0, 32], sizes = [128, 32], strides = [1, 1]} : vector<128x128xbf16> to vector<128x32xbf16>
    %35 = vector.extract_strided_slice %17 {offsets = [0, 32], sizes = [128, 32], strides = [1, 1]} : vector<128x256xbf16> to vector<128x32xbf16>
    %36 = vector.extract_strided_slice %17 {offsets = [0, 160], sizes = [128, 32], strides = [1, 1]} : vector<128x256xbf16> to vector<128x32xbf16>
    %cst_18 = arith.constant dense<0.000000e+00> : vector<128x128xf32>
    %37 = tpu.matmul %34, %35, %cst_18 {dimension_numbers = #tpu.dot_dimension_numbers<[1], [1], [0], [0], [0, 0, 1, 0], [], []>} : vector<128x32xbf16>, vector<128x32xbf16>, vector<128x128xf32> -> vector<128x128xf32>
    %cst_19 = arith.constant dense<0xFF800000> : vector<128xf32>
    %38 = vector.multi_reduction <maximumf>, %37, %cst_19 [1] : vector<128x128xf32> to vector<128xf32>
    %39 = vector.shape_cast %38 : vector<128xf32> to vector<128x1xf32>
    %40 = vector.broadcast %39 : vector<128x1xf32> to vector<128x128xf32>
    %41 = arith.subf %37, %40 : vector<128x128xf32>
    %42 = math.exp %41 : vector<128x128xf32>
    %cst_20 = arith.constant dense<0.000000e+00> : vector<128xf32>
    %43 = vector.multi_reduction <add>, %42, %cst_20 [1] : vector<128x128xf32> to vector<128xf32>
    %44 = vector.shape_cast %43 : vector<128xf32> to vector<128x1xf32>
    %45 = arith.truncf %42 : vector<128x128xf32> to vector<128x128xbf16>
    %cst_21 = arith.constant dense<0.000000e+00> : vector<128x32xf32>
    %46 = tpu.matmul %45, %36, %cst_21 {dimension_numbers = #tpu.dot_dimension_numbers<[1], [0], [0], [1], [0, 0, 1, 1], [], []>} : vector<128x128xbf16>, vector<128x32xbf16>, vector<128x32xf32> -> vector<128x32xf32>
    %47 = tpu.reciprocal %44 {approx = true} : vector<128x1xf32> -> vector<128x1xf32>
    %48 = vector.broadcast %47 : vector<128x1xf32> to vector<128x32xf32>
    %49 = arith.mulf %46, %48 : vector<128x32xf32>
    %50 = vector.extract_strided_slice %16 {offsets = [0, 64], sizes = [128, 32], strides = [1, 1]} : vector<128x128xbf16> to vector<128x32xbf16>
    %51 = vector.extract_strided_slice %17 {offsets = [0, 64], sizes = [128, 32], strides = [1, 1]} : vector<128x256xbf16> to vector<128x32xbf16>
    %52 = vector.extract_strided_slice %17 {offsets = [0, 192], sizes = [128, 32], strides = [1, 1]} : vector<128x256xbf16> to vector<128x32xbf16>
    %cst_22 = arith.constant dense<0.000000e+00> : vector<128x128xf32>
    %53 = tpu.matmul %50, %51, %cst_22 {dimension_numbers = #tpu.dot_dimension_numbers<[1], [1], [0], [0], [0, 0, 1, 0], [], []>} : vector<128x32xbf16>, vector<128x32xbf16>, vector<128x128xf32> -> vector<128x128xf32>
    %cst_23 = arith.constant dense<0xFF800000> : vector<128xf32>
    %54 = vector.multi_reduction <maximumf>, %53, %cst_23 [1] : vector<128x128xf32> to vector<128xf32>
    %55 = vector.shape_cast %54 : vector<128xf32> to vector<128x1xf32>
    %56 = vector.broadcast %55 : vector<128x1xf32> to vector<128x128xf32>
    %57 = arith.subf %53, %56 : vector<128x128xf32>
    %58 = math.exp %57 : vector<128x128xf32>
    %cst_24 = arith.constant dense<0.000000e+00> : vector<128xf32>
    %59 = vector.multi_reduction <add>, %58, %cst_24 [1] : vector<128x128xf32> to vector<128xf32>
    %60 = vector.shape_cast %59 : vector<128xf32> to vector<128x1xf32>
    %61 = arith.truncf %58 : vector<128x128xf32> to vector<128x128xbf16>
    %cst_25 = arith.constant dense<0.000000e+00> : vector<128x32xf32>
    %62 = tpu.matmul %61, %52, %cst_25 {dimension_numbers = #tpu.dot_dimension_numbers<[1], [0], [0], [1], [0, 0, 1, 1], [], []>} : vector<128x128xbf16>, vector<128x32xbf16>, vector<128x32xf32> -> vector<128x32xf32>
    %63 = tpu.reciprocal %60 {approx = true} : vector<128x1xf32> -> vector<128x1xf32>
    %64 = vector.broadcast %63 : vector<128x1xf32> to vector<128x32xf32>
    %65 = arith.mulf %62, %64 : vector<128x32xf32>
    %66 = vector.extract_strided_slice %16 {offsets = [0, 96], sizes = [128, 32], strides = [1, 1]} : vector<128x128xbf16> to vector<128x32xbf16>
    %67 = vector.extract_strided_slice %17 {offsets = [0, 96], sizes = [128, 32], strides = [1, 1]} : vector<128x256xbf16> to vector<128x32xbf16>
    %68 = vector.extract_strided_slice %17 {offsets = [0, 224], sizes = [128, 32], strides = [1, 1]} : vector<128x256xbf16> to vector<128x32xbf16>
    %cst_26 = arith.constant dense<0.000000e+00> : vector<128x128xf32>
    %69 = tpu.matmul %66, %67, %cst_26 {dimension_numbers = #tpu.dot_dimension_numbers<[1], [1], [0], [0], [0, 0, 1, 0], [], []>} : vector<128x32xbf16>, vector<128x32xbf16>, vector<128x128xf32> -> vector<128x128xf32>
    %cst_27 = arith.constant dense<0xFF800000> : vector<128xf32>
    %70 = vector.multi_reduction <maximumf>, %69, %cst_27 [1] : vector<128x128xf32> to vector<128xf32>
    %71 = vector.shape_cast %70 : vector<128xf32> to vector<128x1xf32>
    %72 = vector.broadcast %71 : vector<128x1xf32> to vector<128x128xf32>
    %73 = arith.subf %69, %72 : vector<128x128xf32>
    %74 = math.exp %73 : vector<128x128xf32>
    %cst_28 = arith.constant dense<0.000000e+00> : vector<128xf32>
    %75 = vector.multi_reduction <add>, %74, %cst_28 [1] : vector<128x128xf32> to vector<128xf32>
    %76 = vector.shape_cast %75 : vector<128xf32> to vector<128x1xf32>
    %77 = arith.truncf %74 : vector<128x128xf32> to vector<128x128xbf16>
    %cst_29 = arith.constant dense<0.000000e+00> : vector<128x32xf32>
    %78 = tpu.matmul %77, %68, %cst_29 {dimension_numbers = #tpu.dot_dimension_numbers<[1], [0], [0], [1], [0, 0, 1, 1], [], []>} : vector<128x128xbf16>, vector<128x32xbf16>, vector<128x32xf32> -> vector<128x32xf32>
    %79 = tpu.reciprocal %76 {approx = true} : vector<128x1xf32> -> vector<128x1xf32>
    %80 = vector.broadcast %79 : vector<128x1xf32> to vector<128x32xf32>
    %81 = arith.mulf %78, %80 : vector<128x32xf32>
    %82 = tpu.concatenate %33, %49, %65, %81 in 1 : vector<128x32xf32>, vector<128x32xf32>, vector<128x32xf32>, vector<128x32xf32> -> vector<128x128xf32>
    %83 = arith.truncf %82 : vector<128x128xf32> to vector<128x128xbf16>
    %c0_30 = arith.constant 0 : index
    %c0_31 = arith.constant 0 : index
    %84 = vector.load %arg7[%c0_30, %c0_31] : memref<128x128xbf16, #tpu.memory_space<vmem>>, vector<128x128xbf16>
    %cst_32 = arith.constant dense<0.000000e+00> : vector<128x128xf32>
    %85 = tpu.matmul %83, %84, %cst_32 {dimension_numbers = #tpu.dot_dimension_numbers<[1], [0], [0], [1], [0, 0, 1, 1], [], []>} : vector<128x128xbf16>, vector<128x128xbf16>, vector<128x128xf32> -> vector<128x128xf32>
    %c0_33 = arith.constant 0 : index
    %c0_34 = arith.constant 0 : index
    %86 = vector.load %arg8[%c0_33, %c0_34] : memref<1x128xf32, #tpu.memory_space<vmem>>, vector<1x128xf32>
    %87 = vector.broadcast %86 : vector<1x128xf32> to vector<128x128xf32>
    %88 = arith.addf %85, %87 : vector<128x128xf32>
    %89 = arith.addf %1, %88 : vector<128x128xf32>
    %cst_35 = arith.constant dense<0.000000e+00> : vector<128xf32>
    %90 = vector.multi_reduction <add>, %89, %cst_35 [1] : vector<128x128xf32> to vector<128xf32>
    %91 = vector.shape_cast %90 : vector<128xf32> to vector<128x1xf32>
    %cst_36 = arith.constant 1.280000e+02 : f32
    %92 = vector.broadcast %cst_36 : f32 to vector<128x1xf32>
    %93 = arith.divf %91, %92 : vector<128x1xf32>
    %94 = vector.broadcast %93 : vector<128x1xf32> to vector<128x128xf32>
    %95 = arith.subf %89, %94 : vector<128x128xf32>
    %96 = arith.mulf %95, %95 : vector<128x128xf32>
    %cst_37 = arith.constant dense<0.000000e+00> : vector<128xf32>
    %97 = vector.multi_reduction <add>, %96, %cst_37 [1] : vector<128x128xf32> to vector<128xf32>
    %98 = vector.shape_cast %97 : vector<128xf32> to vector<128x1xf32>
    %cst_38 = arith.constant 1.280000e+02 : f32
    %99 = vector.broadcast %cst_38 : f32 to vector<128x1xf32>
    %100 = arith.divf %98, %99 : vector<128x1xf32>
    %cst_39 = arith.constant 9.99999996E-13 : f32
    %101 = vector.broadcast %cst_39 : f32 to vector<128x1xf32>
    %102 = arith.addf %100, %101 : vector<128x1xf32>
    %103 = math.rsqrt %102 : vector<128x1xf32>
    %104 = vector.broadcast %103 : vector<128x1xf32> to vector<128x128xf32>
    %105 = arith.mulf %95, %104 : vector<128x128xf32>
    %c0_40 = arith.constant 0 : index
    %c0_41 = arith.constant 0 : index
    %106 = vector.load %arg9[%c0_40, %c0_41] : memref<1x128xf32, #tpu.memory_space<vmem>>, vector<1x128xf32>
    %107 = vector.broadcast %106 : vector<1x128xf32> to vector<128x128xf32>
    %108 = arith.mulf %105, %107 : vector<128x128xf32>
    %c0_42 = arith.constant 0 : index
    %c0_43 = arith.constant 0 : index
    %109 = vector.load %arg10[%c0_42, %c0_43] : memref<1x128xf32, #tpu.memory_space<vmem>>, vector<1x128xf32>
    %110 = vector.broadcast %109 : vector<1x128xf32> to vector<128x128xf32>
    %111 = arith.addf %108, %110 : vector<128x128xf32>
    %c0_44 = arith.constant 0 : index
    %c0_45 = arith.constant 0 : index
    %c0_46 = arith.constant 0 : index
    %112 = vector.load %arg11[%c0_44, %c0_45, %c0_46] : memref<1x128x128xf32, #tpu.memory_space<vmem>>, vector<1x128x128xf32>
    %113 = vector.shape_cast %112 : vector<1x128x128xf32> to vector<128x128xf32>
    %114 = vector.shape_cast %111 : vector<128x128xf32> to vector<1x128x128xf32>
    tpu.vector_store %arg11[%c0_44, %c0_45, %c0_46], %114 {strides = array<i32>} : memref<1x128x128xf32, #tpu.memory_space<vmem>>, vector<1x128x128xf32>,
    return
  }
  func.func @transform_0(%arg0: i32) -> (i32, i32, i32) {
    %c0_i32 = arith.constant 0 : i32
    %c0_i32_0 = arith.constant 0 : i32
    %c0_i32_1 = arith.constant 0 : i32
    return %arg0, %c0_i32, %c0_i32_0 : i32, i32, i32
  }
  func.func @transform_1(%arg0: i32) -> (i32, i32, i32) {
    %c0_i32 = arith.constant 0 : i32
    %c0_i32_0 = arith.constant 0 : i32
    %c0_i32_1 = arith.constant 0 : i32
    return %arg0, %c0_i32, %c0_i32_0 : i32, i32, i32
  }
  func.func @transform_2(%arg0: i32) -> (i32, i32) {
    %c0_i32 = arith.constant 0 : i32
    %c0_i32_0 = arith.constant 0 : i32
    %c0_i32_1 = arith.constant 0 : i32
    return %c0_i32, %c0_i32_0 : i32, i32
  }
  func.func @transform_3(%arg0: i32) -> (i32, i32) {
    %c0_i32 = arith.constant 0 : i32
    %c0_i32_0 = arith.constant 0 : i32
    %c0_i32_1 = arith.constant 0 : i32
    return %c0_i32, %c0_i32_0 : i32, i32
  }
  func.func @transform_4(%arg0: i32) -> (i32, i32) {
    %c0_i32 = arith.constant 0 : i32
    %c0_i32_0 = arith.constant 0 : i32
    %c0_i32_1 = arith.constant 0 : i32
    return %c0_i32, %c0_i32_0 : i32, i32
  }
  func.func @transform_5(%arg0: i32) -> (i32, i32) {
    %c0_i32 = arith.constant 0 : i32
    %c0_i32_0 = arith.constant 0 : i32
    %c0_i32_1 = arith.constant 0 : i32
    return %c0_i32, %c0_i32_0 : i32, i32
  }
  func.func @transform_6(%arg0: i32) -> (i32, i32) {
    %c0_i32 = arith.constant 0 : i32
    %c0_i32_0 = arith.constant 0 : i32
    %c0_i32_1 = arith.constant 0 : i32
    return %c0_i32, %c0_i32_0 : i32, i32
  }
  func.func @transform_7(%arg0: i32) -> (i32, i32) {
    %c0_i32 = arith.constant 0 : i32
    %c0_i32_0 = arith.constant 0 : i32
    %c0_i32_1 = arith.constant 0 : i32
    return %c0_i32, %c0_i32_0 : i32, i32
  }
  func.func @transform_8(%arg0: i32) -> (i32, i32) {
    %c0_i32 = arith.constant 0 : i32
    %c0_i32_0 = arith.constant 0 : i32
    %c0_i32_1 = arith.constant 0 : i32
    return %c0_i32, %c0_i32_0 : i32, i32
  }
  func.func @transform_9(%arg0: i32) -> (i32, i32) {
    %c0_i32 = arith.constant 0 : i32
    %c0_i32_0 = arith.constant 0 : i32
    %c0_i32_1 = arith.constant 0 : i32
    return %c0_i32, %c0_i32_0 : i32, i32
  }
  func.func @transform_10(%arg0: i32) -> (i32, i32, i32) {
    %c0_i32 = arith.constant 0 : i32
    %c0_i32_0 = arith.constant 0 : i32
    %c0_i32_1 = arith.constant 0 : i32
    return %arg0, %c0_i32, %c0_i32_0 : i32, i32, i32
  }
}

</mosaic_0001>

<llo_original>
// kernel: tpu_custom_call.1
$region0: #{tpu_custom_call.1}
  #allocation0 [shape = 'u32[]', space=smem, size = 0x4, offset = 0x4, fixed_abs, tag = 'smem constant byte address 0x4 - core index']
  #allocation1 [shape = 'u32[144,128]{1,0:T(1,128)}', space=vmem, size = 0x12000, scoped, tag = 'internal scratch']
  %s0 = inlined_call_operand.hbm [shape: f32[2,128,128], index: 0, kind: input, shape index: {}]
  %s1 = inlined_call_operand.hbm [shape: f32[2,128,128], index: 1, kind: input, shape index: {}]
  %s2 = inlined_call_operand.hbm [shape: bf16[128,128], index: 2, kind: input, shape index: {}]
  %s3 = inlined_call_operand.vmem [shape: f32[1,128], index: 3, kind: input, shape index: {}]
  %s4 = inlined_call_operand.hbm [shape: bf16[128,256], index: 4, kind: input, shape index: {}]
  %s5 = inlined_call_operand.vmem [shape: f32[1,256], index: 5, kind: input, shape index: {}]
  %s6 = inlined_call_operand.hbm [shape: bf16[128,128], index: 6, kind: input, shape index: {}]
  %s7 = inlined_call_operand.vmem [shape: f32[1,128], index: 7, kind: input, shape index: {}]
  %s8 = inlined_call_operand.vmem [shape: f32[1,128], index: 8, kind: input, shape index: {}]
  %s9 = inlined_call_operand.vmem [shape: f32[1,128], index: 9, kind: input, shape index: {}]
  %s10 = inlined_call_operand.hbm [shape: f32[2,128,128], index: 10, kind: output, shape index: {}]
  %s11 = sld [smem:[#allocation0]]
  $region93: #{tpu_custom_call.1} parent=0
    _
  %s13 = ssub.s32 1, %s11
  %s14 = scalar_select 0, %s13, %s11
  $region1: #{tpu_custom_call.1} parent=0
    #allocation2 [shape = 'u8[131072]{0}', space=vmem, size = 0x20000, scoped, tag = 'input window, operand 0']
    #allocation3 [shape = 's32[2]{0}', space=sflag, size = 0x8, scoped, tag = 'scoped memory for tpu_custom_call.1']
    #allocation4 [shape = 's32[2]{0}', space=sflag, size = 0x8, scoped, tag = 'scoped memory for tpu_custom_call.1']
    #allocation5 [shape = 'u8[131072]{0}', space=vmem, size = 0x20000, scoped, tag = 'input window, operand 1']
    #allocation6 [shape = 's32[2]{0}', space=sflag, size = 0x8, scoped, tag = 'scoped memory for tpu_custom_call.1']
    #allocation7 [shape = 'u8[32768]{0}', space=vmem, size = 0x8000, scoped, tag = 'input window, operand 2, single buffered']
    #allocation8 [shape = 'u8[65536]{0}', space=vmem, size = 0x10000, scoped, tag = 'input window, operand 4, single buffered']
    #allocation9 [shape = 's32[1]{0}', space=sflag, size = 0x4, scoped, tag = 'scoped memory for tpu_custom_call.1']
    #allocation10 [shape = 'u8[32768]{0}', space=vmem, size = 0x8000, scoped, tag = 'input window, operand 6, single buffered']
    #allocation11 [shape = 'u8[131072]{0}', space=vmem, size = 0x20000, scoped, tag = 'output window, operand 0']
    %15 = vsyncpa [#allocation3], 0
    %s16 = scalar_lea.sflag [#allocation3], 1
    %17 = vsyncpa %s16, 0
    %18 = vsyncpa [#allocation6], 0
    %s19 = scalar_lea.sflag [#allocation6], 1
    %20 = vsyncpa %s19, 0
    %21 = vsyncpa [#allocation9], 0
    %22 = vsyncpa [#allocation4], 0
    %s23 = scalar_lea.sflag [#allocation4], 1
    %24 = vsyncpa %s23, 0
    loop: start=0, step=1, limit=4
    $region2: #{tpu_custom_call.1} parent=1 // loop_pre_header
      _
    $region3: #{tpu_custom_call.1} parent=1 // loop_header
      %s26 = sphi 0, %s30
      %p27 = scmp.ge.s32.totalorder %s26, 4
      %s36 = sphi 0, %s38
      %s39 = sphi 0, %s36
      %s40 = sphi 0, %s39
      %s56 = sphi 0, %s40
      %s62 = sphi 0, %s64
      %s65 = sphi 0, %s62
      %s66 = sphi 0, %s65
      %s82 = sphi 0, %s66
      %s86 = sphi 0, %s86
      %s88 = sphi 0, %s86
      %s89 = sphi 0, %s88
      %s103 = sphi 0, %s89
      %s107 = sphi 0, %s107
      %s109 = sphi 0, %s107
      %s110 = sphi 0, %s109
      %s124 = sphi 0, %s110
      %s128 = sphi 0, %s128
      %s130 = sphi 0, %s128
      %s131 = sphi 0, %s130
      %s145 = sphi 0, %s131
      %s149 = sphi 0, %s149
      %s151 = sphi 0, %s149
      %s152 = sphi 0, %s151
      %s166 = sphi 0, %s152
      %s170 = sphi 0, %s170
      %s172 = sphi 0, %s170
      %s173 = sphi 0, %s172
      %s187 = sphi 0, %s173
      %s191 = sphi 0, %s191
      %s193 = sphi 0, %s191
      %s194 = sphi 0, %s193
      %s208 = sphi 0, %s194
      %s212 = sphi 0, %s212
      %s214 = sphi 0, %s212
      %s215 = sphi 0, %s214
      %s229 = sphi 0, %s215
      %s233 = sphi 0, %s233
      %s235 = sphi 0, %s233
      %s236 = sphi 0, %s235
      %s250 = sphi 0, %s236
      %s256 = sphi 0, %s258
      %s259 = sphi 0, %s256
      %s260 = sphi 0, %s259
      %s276 = sphi 0, %s260
    $region4: #{tpu_custom_call.1} parent=1 // loop_header_branch
      %29 = sbr.rel (%p27) target = $region8
    $region5: #{tpu_custom_call.1} parent=1 // loop_body
      %s31 = ssub.s32 %s26, 1
      %s32 = ssub.s32 %s26, 2
      %s33 = sadd.s32 %s26, 1
      %s34 = ssub.s32 %s26, %s33
      %p35 = scmp.eq.s32.totalorder %s34, 0
      %s37 = sadd.s32 %s36, 1
      %s38 = scalar_select %p35, %s36, %s37
      %p41 = pneg %p35
      %p42 = scmp.eq.s32.totalorder %s26, 1
      %p43 = por %p41, %p42
      %p44 = scmp.ne.s32.totalorder %s36, %s39
      %p45 = scmp.eq.s32.totalorder %s26, 0
      %p46 = por %p44, %p45
      %p47 = scmp.ne.s32.totalorder %s36, %s39
      %p48 = scmp.eq.s32.totalorder %s31, 1
      %p49 = por %p47, %p48
      %p50 = scmp.ne.s32.totalorder %s39, %s40
      %p51 = scmp.eq.s32.totalorder %s31, 0
      %p52 = por %p50, %p51
      %p53 = scmp.ne.s32.totalorder %s39, %s40
      %p54 = scmp.eq.s32.totalorder %s32, 1
      %p55 = por %p53, %p54
      %p57 = scmp.ne.s32.totalorder %s40, %s56
      %p58 = scmp.eq.s32.totalorder %s32, 0
      %p59 = por %p57, %p58
      %s60 = ssub.s32 %s26, %s33
      %p61 = scmp.eq.s32.totalorder %s60, 0
      %s63 = sadd.s32 %s62, 1
      %s64 = scalar_select %p61, %s62, %s63
      %p67 = pneg %p61
      %p68 = scmp.eq.s32.totalorder %s26, 1
      %p69 = por %p67, %p68
      %p70 = scmp.ne.s32.totalorder %s62, %s65
      %p71 = scmp.eq.s32.totalorder %s26, 0
      %p72 = por %p70, %p71
      %p73 = scmp.ne.s32.totalorder %s62, %s65
      %p74 = scmp.eq.s32.totalorder %s31, 1
      %p75 = por %p73, %p74
      %p76 = scmp.ne.s32.totalorder %s65, %s66
      %p77 = scmp.eq.s32.totalorder %s31, 0
      %p78 = por %p76, %p77
      %p79 = scmp.ne.s32.totalorder %s65, %s66
      %p80 = scmp.eq.s32.totalorder %s32, 1
      %p81 = por %p79, %p80
      %p83 = scmp.ne.s32.totalorder %s66, %s82
      %p84 = scmp.eq.s32.totalorder %s32, 0
      %p85 = por %p83, %p84
      %s87 = sadd.s32 %s86, 1
      %p90 = scmp.eq.s32.totalorder %s26, 1
      %p91 = scmp.ne.s32.totalorder %s86, %s88
      %p92 = scmp.eq.s32.totalorder %s26, 0
      %p93 = por %p91, %p92
      %p94 = scmp.ne.s32.totalorder %s86, %s88
      %p95 = scmp.eq.s32.totalorder %s31, 1
      %p96 = por %p94, %p95
      %p97 = scmp.ne.s32.totalorder %s88, %s89
      %p98 = scmp.eq.s32.totalorder %s31, 0
      %p99 = por %p97, %p98
      %p100 = scmp.ne.s32.totalorder %s88, %s89
      %p101 = scmp.eq.s32.totalorder %s32, 1
      %p102 = por %p100, %p101
      %p104 = scmp.ne.s32.totalorder %s89, %s103
      %p105 = scmp.eq.s32.totalorder %s32, 0
      %p106 = por %p104, %p105
      %s108 = sadd.s32 %s107, 1
      %p111 = scmp.eq.s32.totalorder %s26, 1
      %p112 = scmp.ne.s32.totalorder %s107, %s109
      %p113 = scmp.eq.s32.totalorder %s26, 0
      %p114 = por %p112, %p113
      %p115 = scmp.ne.s32.totalorder %s107, %s109
      %p116 = scmp.eq.s32.totalorder %s31, 1
      %p117 = por %p115, %p116
      %p118 = scmp.ne.s32.totalorder %s109, %s110
      %p119 = scmp.eq.s32.totalorder %s31, 0
      %p120 = por %p118, %p119
      %p121 = scmp.ne.s32.totalorder %s109, %s110
      %p122 = scmp.eq.s32.totalorder %s32, 1
      %p123 = por %p121, %p122
      %p125 = scmp.ne.s32.totalorder %s110, %s124
      %p126 = scmp.eq.s32.totalorder %s32, 0
      %p127 = por %p125, %p126
      %s129 = sadd.s32 %s128, 1
      %p132 = scmp.eq.s32.totalorder %s26, 1
      %p133 = scmp.ne.s32.totalorder %s128, %s130
      %p134 = scmp.eq.s32.totalorder %s26, 0
      %p135 = por %p133, %p134
      %p136 = scmp.ne.s32.totalorder %s128, %s130
      %p137 = scmp.eq.s32.totalorder %s31, 1
      %p138 = por %p136, %p137
      %p139 = scmp.ne.s32.totalorder %s130, %s131
      %p140 = scmp.eq.s32.totalorder %s31, 0
      %p141 = por %p139, %p140
      %p142 = scmp.ne.s32.totalorder %s130, %s131
      %p143 = scmp.eq.s32.totalorder %s32, 1
      %p144 = por %p142, %p143
      %p146 = scmp.ne.s32.totalorder %s131, %s145
      %p147 = scmp.eq.s32.totalorder %s32, 0
      %p148 = por %p146, %p147
      %s150 = sadd.s32 %s149, 1
      %p153 = scmp.eq.s32.totalorder %s26, 1
      %p154 = scmp.ne.s32.totalorder %s149, %s151
      %p155 = scmp.eq.s32.totalorder %s26, 0
      %p156 = por %p154, %p155
      %p157 = scmp.ne.s32.totalorder %s149, %s151
      %p158 = scmp.eq.s32.totalorder %s31, 1
      %p159 = por %p157, %p158
      %p160 = scmp.ne.s32.totalorder %s151, %s152
      %p161 = scmp.eq.s32.totalorder %s31, 0
      %p162 = por %p160, %p161
      %p163 = scmp.ne.s32.totalorder %s151, %s152
      %p164 = scmp.eq.s32.totalorder %s32, 1
      %p165 = por %p163, %p164
      %p167 = scmp.ne.s32.totalorder %s152, %s166
      %p168 = scmp.eq.s32.totalorder %s32, 0
      %p169 = por %p167, %p168
      %s171 = sadd.s32 %s170, 1
      %p174 = scmp.eq.s32.totalorder %s26, 1
      %p175 = scmp.ne.s32.totalorder %s170, %s172
      %p176 = scmp.eq.s32.totalorder %s26, 0
      %p177 = por %p175, %p176
      %p178 = scmp.ne.s32.totalorder %s170, %s172
      %p179 = scmp.eq.s32.totalorder %s31, 1
      %p180 = por %p178, %p179
      %p181 = scmp.ne.s32.totalorder %s172, %s173
      %p182 = scmp.eq.s32.totalorder %s31, 0
      %p183 = por %p181, %p182
      %p184 = scmp.ne.s32.totalorder %s172, %s173
      %p185 = scmp.eq.s32.totalorder %s32, 1
      %p186 = por %p184, %p185
      %p188 = scmp.ne.s32.totalorder %s173, %s187
      %p189 = scmp.eq.s32.totalorder %s32, 0
      %p190 = por %p188, %p189
      %s192 = sadd.s32 %s191, 1
      %p195 = scmp.eq.s32.totalorder %s26, 1
      %p196 = scmp.ne.s32.totalorder %s191, %s193
      %p197 = scmp.eq.s32.totalorder %s26, 0
      %p198 = por %p196, %p197
      %p199 = scmp.ne.s32.totalorder %s191, %s193
      %p200 = scmp.eq.s32.totalorder %s31, 1
      %p201 = por %p199, %p200
      %p202 = scmp.ne.s32.totalorder %s193, %s194
      %p203 = scmp.eq.s32.totalorder %s31, 0
      %p204 = por %p202, %p203
      %p205 = scmp.ne.s32.totalorder %s193, %s194
      %p206 = scmp.eq.s32.totalorder %s32, 1
      %p207 = por %p205, %p206
      %p209 = scmp.ne.s32.totalorder %s194, %s208
      %p210 = scmp.eq.s32.totalorder %s32, 0
      %p211 = por %p209, %p210
      %s213 = sadd.s32 %s212, 1
      %p216 = scmp.eq.s32.totalorder %s26, 1
      %p217 = scmp.ne.s32.totalorder %s212, %s214
      %p218 = scmp.eq.s32.totalorder %s26, 0
      %p219 = por %p217, %p218
      %p220 = scmp.ne.s32.totalorder %s212, %s214
      %p221 = scmp.eq.s32.totalorder %s31, 1
      %p222 = por %p220, %p221
      %p223 = scmp.ne.s32.totalorder %s214, %s215
      %p224 = scmp.eq.s32.totalorder %s31, 0
      %p225 = por %p223, %p224
      %p226 = scmp.ne.s32.totalorder %s214, %s215
      %p227 = scmp.eq.s32.totalorder %s32, 1
      %p228 = por %p226, %p227
      %p230 = scmp.ne.s32.totalorder %s215, %s229
      %p231 = scmp.eq.s32.totalorder %s32, 0
      %p232 = por %p230, %p231
      %s234 = sadd.s32 %s233, 1
      %p237 = scmp.eq.s32.totalorder %s26, 1
      %p238 = scmp.ne.s32.totalorder %s233, %s235
      %p239 = scmp.eq.s32.totalorder %s26, 0
      %p240 = por %p238, %p239
      %p241 = scmp.ne.s32.totalorder %s233, %s235
      %p242 = scmp.eq.s32.totalorder %s31, 1
      %p243 = por %p241, %p242
      %p244 = scmp.ne.s32.totalorder %s235, %s236
      %p245 = scmp.eq.s32.totalorder %s31, 0
      %p246 = por %p244, %p245
      %p247 = scmp.ne.s32.totalorder %s235, %s236
      %p248 = scmp.eq.s32.totalorder %s32, 1
      %p249 = por %p247, %p248
      %p251 = scmp.ne.s32.totalorder %s236, %s250
      %p252 = scmp.eq.s32.totalorder %s32, 0
      %p253 = por %p251, %p252
      %s254 = ssub.s32 %s26, %s33
      %p255 = scmp.eq.s32.totalorder %s254, 0
      %s257 = sadd.s32 %s256, 1
      %s258 = scalar_select %p255, %s256, %s257
      %p261 = pneg %p255
      %p262 = scmp.eq.s32.totalorder %s26, 1
      %p263 = por %p261, %p262
      %p264 = scmp.ne.s32.totalorder %s256, %s259
      %p265 = scmp.eq.s32.totalorder %s26, 0
      %p266 = por %p264, %p265
      %p267 = scmp.ne.s32.totalorder %s256, %s259
      %p268 = scmp.eq.s32.totalorder %s31, 1
      %p269 = por %p267, %p268
      %p270 = scmp.ne.s32.totalorder %s259, %s260
      %p271 = scmp.eq.s32.totalorder %s31, 0
      %p272 = por %p270, %p271
      %p273 = scmp.ne.s32.totalorder %s259, %s260
      %p274 = scmp.eq.s32.totalorder %s32, 1
      %p275 = por %p273, %p274
      %p277 = scmp.ne.s32.totalorder %s260, %s276
      %p278 = scmp.eq.s32.totalorder %s32, 0
      %p279 = por %p277, %p278
      %p280 = scmp.le.s32.totalorder 1, %s26
      %p281 = scmp.lt.s32.totalorder %s26, 3
      %p282 = pnand %p280, %p281
      %p283 = pneg %p282
      // Predicated region
      $region9: #{tpu_custom_call.1} parent=5 // pred_check
        _
      $region10: #{tpu_custom_call.1} parent=5 // pred_check_branch
        %285 = sbr.rel (%p282) target = $region12
      $region11: #{tpu_custom_call.1} parent=5 // pred_region
        %s286 = ssub.s32 %s26, 1
        // Predicated region
        $region13: #{tpu_custom_call.1} parent=11 // pred_check
          %p287 = pneg %p99
        $region14: #{tpu_custom_call.1} parent=11 // pred_check_branch
          %289 = sbr.rel (%p287) target = $region16
        $region15: #{tpu_custom_call.1} parent=11 // pred_region
          %s291 = ssub.s32 1024, 1024
          %292 = vsyncadd [#allocation6], %s291
          %s293 = sshll.u32 [#allocation7], 4
          %s294 = int_to_ptr.vmem [resolvable:$true] %s293
          %299 = dma.hbm_to_vmem [thread:$0]  %s2, 1024, %s294, [#allocation6], 64, 64, 4
        $region16: #{tpu_custom_call.1} parent=11 // pred_fallthru
          _
        // Predicated region
        $region17: #{tpu_custom_call.1} parent=11 // pred_check
          %p300 = pneg %p120
        $region18: #{tpu_custom_call.1} parent=11 // pred_check_branch
          %302 = sbr.rel (%p300) target = $region20
        $region19: #{tpu_custom_call.1} parent=11 // pred_region
          _
        $region20: #{tpu_custom_call.1} parent=11 // pred_fallthru
          _
        // Predicated region
        $region21: #{tpu_custom_call.1} parent=11 // pred_check
          %p303 = pneg %p141
        $region22: #{tpu_custom_call.1} parent=11 // pred_check_branch
          %305 = sbr.rel (%p303) target = $region24
        $region23: #{tpu_custom_call.1} parent=11 // pred_region
          %s307 = ssub.s32 2048, 2048
          %308 = vsyncadd [#allocation9], %s307
          %s309 = sshll.u32 [#allocation8], 4
          %s310 = int_to_ptr.vmem [resolvable:$true] %s309
          %315 = dma.hbm_to_vmem [thread:$0]  %s4, 2048, %s310, [#allocation9], 128, 128, 8
        $region24: #{tpu_custom_call.1} parent=11 // pred_fallthru
          _
        // Predicated region
        $region25: #{tpu_custom_call.1} parent=11 // pred_check
          %p316 = pneg %p162
        $region26: #{tpu_custom_call.1} parent=11 // pred_check_branch
          %318 = sbr.rel (%p316) target = $region28
        $region27: #{tpu_custom_call.1} parent=11 // pred_region
          _
        $region28: #{tpu_custom_call.1} parent=11 // pred_fallthru
          _
        // Predicated region
        $region29: #{tpu_custom_call.1} parent=11 // pred_check
          %p319 = pneg %p183
        $region30: #{tpu_custom_call.1} parent=11 // pred_check_branch
          %321 = sbr.rel (%p319) target = $region32
        $region31: #{tpu_custom_call.1} parent=11 // pred_region
          %s323 = ssub.s32 1024, 1024
          %324 = vsyncadd [#allocation9], %s323
          %s325 = sshll.u32 [#allocation10], 4
          %s326 = int_to_ptr.vmem [resolvable:$true] %s325
          %331 = dma.hbm_to_vmem [thread:$0]  %s6, 1024, %s326, [#allocation9], 64, 64, 4
        $region32: #{tpu_custom_call.1} parent=11 // pred_fallthru
          _
        // Predicated region
        $region33: #{tpu_custom_call.1} parent=11 // pred_check
          %p332 = pneg %p204
        $region34: #{tpu_custom_call.1} parent=11 // pred_check_branch
          %334 = sbr.rel (%p332) target = $region36
        $region35: #{tpu_custom_call.1} parent=11 // pred_region
          _
        $region36: #{tpu_custom_call.1} parent=11 // pred_fallthru
          _
        // Predicated region
        $region37: #{tpu_custom_call.1} parent=11 // pred_check
          %p335 = pneg %p225
        $region38: #{tpu_custom_call.1} parent=11 // pred_check_branch
          %337 = sbr.rel (%p335) target = $region40
        $region39: #{tpu_custom_call.1} parent=11 // pred_region
          _
        $region40: #{tpu_custom_call.1} parent=11 // pred_fallthru
          _
        // Predicated region
        $region41: #{tpu_custom_call.1} parent=11 // pred_check
          %p338 = pneg %p246
        $region42: #{tpu_custom_call.1} parent=11 // pred_check_branch
          %340 = sbr.rel (%p338) target = $region44
        $region43: #{tpu_custom_call.1} parent=11 // pred_region
          _
        $region44: #{tpu_custom_call.1} parent=11 // pred_fallthru
          _
      $region12: #{tpu_custom_call.1} parent=5 // pred_fallthru
        _
      %p341 = scmp.lt.s32.totalorder %s26, 2
      // Predicated region
      $region45: #{tpu_custom_call.1} parent=5 // pred_check
        %p342 = pneg %p341
      $region46: #{tpu_custom_call.1} parent=5 // pred_check_branch
        %344 = sbr.rel (%p342) target = $region48
      $region47: #{tpu_custom_call.1} parent=5 // pred_region
        // Predicated region
        $region49: #{tpu_custom_call.1} parent=47 // pred_check
          %p345 = pneg %p46
        $region50: #{tpu_custom_call.1} parent=47 // pred_check_branch
          %347 = sbr.rel (%p345) target = $region52
        $region51: #{tpu_custom_call.1} parent=47 // pred_region
          %s348 = sand.u32 %s36, 1
          %s349 = scalar_lea.sflag [#allocation3], %s348
          %s350 = sand.u32 %s36, 1
          %s351 = smul.addr %s350, 128
          %s352 = scalar_lea.vmem [#allocation2], %s351
          %s354 = ssub.s32 2048, 2048
          %355 = vsyncadd %s349, %s354
          %s356 = smul.addr %s26, 16
          %s357 = smul.addr %s356, 128
          %s358 = scalar_lea.hbm %s0, %s357
          %s359 = sshll.u32 %s352, 4
          %s360 = int_to_ptr.vmem [resolvable:$true] %s359
          %365 = dma.hbm_to_vmem [thread:$0]  %s358, 2048, %s360, %s349, 128, 128, 8
        $region52: #{tpu_custom_call.1} parent=47 // pred_fallthru
          _
        // Predicated region
        $region53: #{tpu_custom_call.1} parent=47 // pred_check
          %p366 = pneg %p72
        $region54: #{tpu_custom_call.1} parent=47 // pred_check_branch
          %368 = sbr.rel (%p366) target = $region56
        $region55: #{tpu_custom_call.1} parent=47 // pred_region
          %s369 = sand.u32 %s26, 1
          %s370 = scalar_lea.sflag [#allocation6], %s369
          %s371 = sand.u32 %s62, 1
          %s372 = smul.addr %s371, 128
          %s373 = scalar_lea.vmem [#allocation5], %s372
          %s375 = ssub.s32 2048, 2048
          %376 = vsyncadd %s370, %s375
          %s377 = smul.addr %s26, 16
          %s378 = smul.addr %s377, 128
          %s379 = scalar_lea.hbm %s1, %s378
          %s380 = sshll.u32 %s373, 4
          %s381 = int_to_ptr.vmem [resolvable:$true] %s380
          %386 = dma.hbm_to_vmem [thread:$0]  %s379, 2048, %s381, %s370, 128, 128, 8
        $region56: #{tpu_custom_call.1} parent=47 // pred_fallthru
          _
      $region48: #{tpu_custom_call.1} parent=5 // pred_fallthru
        _
      %p387 = scmp.le.s32.totalorder 1, %s26
      %p388 = scmp.lt.s32.totalorder %s26, 3
      %p389 = pnand %p387, %p388
      %p390 = pneg %p389
      // Predicated region
      $region57: #{tpu_custom_call.1} parent=5 // pred_check
        _
      $region58: #{tpu_custom_call.1} parent=5 // pred_check_branch
        %392 = sbr.rel (%p389) target = $region60
      $region59: #{tpu_custom_call.1} parent=5 // pred_region
        %s393 = ssub.s32 %s26, 1
        %s394 = sand.u32 %s39, 1
        %s395 = scalar_lea.sflag [#allocation3], %s394
        %s396 = sand.u32 %s39, 1
        %s397 = smul.addr %s396, 128
        %s398 = scalar_lea.vmem [#allocation2], %s397
        // Predicated region
        $region61: #{tpu_custom_call.1} parent=59 // pred_check
          %p399 = pneg %p52
        $region62: #{tpu_custom_call.1} parent=59 // pred_check_branch
          %401 = sbr.rel (%p399) target = $region64
        $region63: #{tpu_custom_call.1} parent=59 // pred_region
          %402 = dma.done %s395, 2048
        $region64: #{tpu_custom_call.1} parent=59 // pred_fallthru
          _
        %s403 = sand.u32 %s31, 1
        %s404 = scalar_lea.sflag [#allocation6], %s403
        %s405 = sand.u32 %s65, 1
        %s406 = smul.addr %s405, 128
        %s407 = scalar_lea.vmem [#allocation5], %s406
        // Predicated region
        $region65: #{tpu_custom_call.1} parent=59 // pred_check
          %p408 = pneg %p78
        $region66: #{tpu_custom_call.1} parent=59 // pred_check_branch
          %410 = sbr.rel (%p408) target = $region68
        $region67: #{tpu_custom_call.1} parent=59 // pred_region
          %411 = dma.done %s404, 2048
        $region68: #{tpu_custom_call.1} parent=59 // pred_fallthru
          _
        // Predicated region
        $region69: #{tpu_custom_call.1} parent=59 // pred_check
          %p412 = pneg %p99
        $region70: #{tpu_custom_call.1} parent=59 // pred_check_branch
          %414 = sbr.rel (%p412) target = $region72
        $region71: #{tpu_custom_call.1} parent=59 // pred_region
          %415 = dma.done [#allocation6], 1024
        $region72: #{tpu_custom_call.1} parent=59 // pred_fallthru
          _
        // Predicated region
        $region73: #{tpu_custom_call.1} parent=59 // pred_check
          %p416 = pneg %p141
        $region74: #{tpu_custom_call.1} parent=59 // pred_check_branch
          %418 = sbr.rel (%p416) target = $region76
        $region75: #{tpu_custom_call.1} parent=59 // pred_region
          %419 = dma.done [#allocation9], 2048
        $region76: #{tpu_custom_call.1} parent=59 // pred_fallthru
          _
        // Predicated region
        $region77: #{tpu_custom_call.1} parent=59 // pred_check
          %p420 = pneg %p183
        $region78: #{tpu_custom_call.1} parent=59 // pred_check_branch
          %422 = sbr.rel (%p420) target = $region80
        $region79: #{tpu_custom_call.1} parent=59 // pred_region
          %423 = dma.done [#allocation9], 1024
        $region80: #{tpu_custom_call.1} parent=59 // pred_fallthru
          _
        %s424 = sand.u32 %s39, 1
        %s425 = scalar_lea.sflag [#allocation3], %s424
        %s426 = sand.u32 %s39, 1
        %s427 = smul.addr %s426, 128
        %s428 = scalar_lea.vmem [#allocation2], %s427
        %p429 = pneg %p52
        %p430 = pneg %p49
        %s431 = sand.u32 %s31, 1
        %s432 = scalar_lea.sflag [#allocation6], %s431
        %s433 = sand.u32 %s65, 1
        %s434 = smul.addr %s433, 128
        %s435 = scalar_lea.vmem [#allocation5], %s434
        %p436 = pneg %p78
        %p437 = pneg %p75
        %p438 = pneg %p99
        %p439 = pneg %p96
        %p440 = pneg %p120
        %p441 = pneg %p117
        %p442 = pneg %p141
        %p443 = pneg %p138
        %p444 = pneg %p162
        %p445 = pneg %p159
        %p446 = pneg %p183
        %p447 = pneg %p180
        %p448 = pneg %p204
        %p449 = pneg %p201
        %p450 = pneg %p225
        %p451 = pneg %p222
        %p452 = pneg %p246
        %p453 = pneg %p243
        %p454 = pneg %p272
        %p455 = pneg %p269
        %s456 = sand.u32 %s259, 1
        %s457 = scalar_lea.sflag [#allocation4], %s456
        %s458 = sand.u32 %s259, 1
        %s459 = smul.addr %s458, 128
        %s460 = scalar_lea.vmem [#allocation11], %s459
        %v462 = vld [vmem:[%s398] sm:$0xff]
        %v463 = vld [vmem:[%s398 + $0x8] sm:$0xff]
        %v464 = vld [vmem:[%s398 + $0x10] sm:$0xff]
        %v465 = vld [vmem:[%s398 + $0x18] sm:$0xff]
        %v466 = vld [vmem:[%s398 + $0x20] sm:$0xff]
        %v467 = vld [vmem:[%s398 + $0x28] sm:$0xff]
        %v468 = vld [vmem:[%s398 + $0x30] sm:$0xff]
        %v469 = vld [vmem:[%s398 + $0x38] sm:$0xff]
        %v470 = vld [vmem:[%s398 + $0x40] sm:$0xff]
        %v471 = vld [vmem:[%s398 + $0x48] sm:$0xff]
        %v472 = vld [vmem:[%s398 + $0x50] sm:$0xff]
        %v473 = vld [vmem:[%s398 + $0x58] sm:$0xff]
        %v474 = vld [vmem:[%s398 + $0x60] sm:$0xff]
        %v475 = vld [vmem:[%s398 + $0x68] sm:$0xff]
        %v476 = vld [vmem:[%s398 + $0x70] sm:$0xff]
        %v477 = vld [vmem:[%s398 + $0x78] sm:$0xff]
        %v478 = vpack.c.bf16 %v463, %v462
        %v479 = vpack.c.bf16 %v465, %v464
        %v480 = vpack.c.bf16 %v467, %v466
        %v481 = vpack.c.bf16 %v469, %v468
        %v482 = vpack.c.bf16 %v471, %v470
        %v483 = vpack.c.bf16 %v473, %v472
        %v484 = vpack.c.bf16 %v475, %v474
        %v485 = vpack.c.bf16 %v477, %v476
        %v486 = vld [vmem:[%s407] sm:$0xff]
        %v487 = vld [vmem:[%s407 + $0x8] sm:$0xff]
        %v488 = vld [vmem:[%s407 + $0x10] sm:$0xff]
        %v489 = vld [vmem:[%s407 + $0x18] sm:$0xff]
        %v490 = vld [vmem:[%s407 + $0x20] sm:$0xff]
        %v491 = vld [vmem:[%s407 + $0x28] sm:$0xff]
        %v492 = vld [vmem:[%s407 + $0x30] sm:$0xff]
        %v493 = vld [vmem:[%s407 + $0x38] sm:$0xff]
        %v494 = vld [vmem:[%s407 + $0x40] sm:$0xff]
        %v495 = vld [vmem:[%s407 + $0x48] sm:$0xff]
        %v496 = vld [vmem:[%s407 + $0x50] sm:$0xff]
        %v497 = vld [vmem:[%s407 + $0x58] sm:$0xff]
        %v498 = vld [vmem:[%s407 + $0x60] sm:$0xff]
        %v499 = vld [vmem:[%s407 + $0x68] sm:$0xff]
        %v500 = vld [vmem:[%s407 + $0x70] sm:$0xff]
        %v501 = vld [vmem:[%s407 + $0x78] sm:$0xff]
        %v502 = vpack.c.bf16 %v487, %v486
        %v503 = vpack.c.bf16 %v489, %v488
        %v504 = vpack.c.bf16 %v491, %v490
        %v505 = vpack.c.bf16 %v493, %v492
        %v506 = vpack.c.bf16 %v495, %v494
        %v507 = vpack.c.bf16 %v497, %v496
        %v508 = vpack.c.bf16 %v499, %v498
        %v509 = vpack.c.bf16 %v501, %v500
        %v510 = vld [vmem:[#allocation7] sm:$0xf]
        %v511 = vld [vmem:[#allocation7 + $0x4] sm:$0xf]
        %v512 = vld [vmem:[#allocation7 + $0x8] sm:$0xf]
        %v513 = vld [vmem:[#allocation7 + $0xc] sm:$0xf]
        %v514 = vld [vmem:[#allocation7 + $0x10] sm:$0xf]
        %v515 = vld [vmem:[#allocation7 + $0x14] sm:$0xf]
        %v516 = vld [vmem:[#allocation7 + $0x18] sm:$0xf]
        %v517 = vld [vmem:[#allocation7 + $0x1c] sm:$0xf]
        %v518 = vld [vmem:[#allocation7 + $0x20] sm:$0xf]
        %v519 = vld [vmem:[#allocation7 + $0x24] sm:$0xf]
        %v520 = vld [vmem:[#allocation7 + $0x28] sm:$0xf]
        %v521 = vld [vmem:[#allocation7 + $0x2c] sm:$0xf]
        %v522 = vld [vmem:[#allocation7 + $0x30] sm:$0xf]
        %v523 = vld [vmem:[#allocation7 + $0x34] sm:$0xf]
        %v524 = vld [vmem:[#allocation7 + $0x38] sm:$0xf]
        %v525 = vld [vmem:[#allocation7 + $0x3c] sm:$0xf]
        %v526 = vld [vmem:[%s3] sm:$0x1]
        %v528 = vlaneseq
        %v529 = vshrl.u32 %v528, 7
        %v530 = vsub.s32 0, %v529
        %v531 = vrot.slane %v526, %v530
        %v549 = vunpack.c.l.b16 %v510
        %v550 = vunpack.c.l.b16 %v511
        %v551 = vunpack.c.l.b16 %v512
        %v552 = vunpack.c.l.b16 %v513
        %v553 = vunpack.c.l.b16 %v514
        %v554 = vunpack.c.l.b16 %v515
        %v555 = vunpack.c.l.b16 %v516
        %v556 = vunpack.c.l.b16 %v517
        %v557 = vunpack.c.l.b16 %v518
        %v558 = vunpack.c.l.b16 %v519
        %v559 = vunpack.c.l.b16 %v520
        %v560 = vunpack.c.l.b16 %v521
        %v561 = vunpack.c.l.b16 %v522
        %v562 = vunpack.c.l.b16 %v523
        %v563 = vunpack.c.l.b16 %v524
        %v564 = vunpack.c.l.b16 %v525
        %v565 = vpack.c.b16 %v550, %v549
        %v566 = vpack.c.b16 %v552, %v551
        %v567 = vpack.c.b16 %v554, %v553
        %v568 = vpack.c.b16 %v556, %v555
        %v569 = vpack.c.b16 %v558, %v557
        %v570 = vpack.c.b16 %v560, %v559
        %v571 = vpack.c.b16 %v562, %v561
        %v572 = vpack.c.b16 %v564, %v563
        %581 = vmatprep.subr.bf16.mxu0 0
        %582 = vmatpush1.bf16.msra.mxu0 %v565
        %583 = vmatprep.subr.bf16.mxu0 0
        %584 = vmatpush1.bf16.msra.mxu0 %v566
        %585 = vmatprep.subr.bf16.mxu0 0
        %586 = vmatpush1.bf16.msra.mxu0 %v567
        %587 = vmatprep.subr.bf16.mxu0 0
        %588 = vmatpush1.bf16.msra.mxu0 %v568
        %589 = vmatprep.subr.bf16.mxu0 0
        %590 = vmatpush1.bf16.msra.mxu0 %v569
        %591 = vmatprep.subr.bf16.mxu0 0
        %592 = vmatpush1.bf16.msra.mxu0 %v570
        %593 = vmatprep.subr.bf16.mxu0 0
        %594 = vmatpush1.bf16.msra.mxu0 %v571
        %595 = vmatprep.subr.bf16.mxu0 0
        %596 = vmatpush1.bf16.msra.mxu0 %v572
        %597 = vmatprep.subr.bf16.mxu0 0
        %598 = vmatpush1.bf16.msra.mxu0 0
        %599 = vmatprep.subr.bf16.mxu0 0
        %600 = vmatpush1.bf16.msra.mxu0 0
        %601 = vmatprep.subr.bf16.mxu0 0
        %602 = vmatpush1.bf16.msra.mxu0 0
        %603 = vmatprep.subr.bf16.mxu0 0
        %604 = vmatpush1.bf16.msra.mxu0 0
        %605 = vmatprep.subr.bf16.mxu0 0
        %606 = vmatpush1.bf16.msra.mxu0 0
        %607 = vmatprep.subr.bf16.mxu0 0
        %608 = vmatpush1.bf16.msra.mxu0 0
        %609 = vmatprep.subr.bf16.mxu0 0
        %610 = vmatpush1.bf16.msra.mxu0 0
        %611 = vmatprep.subr.bf16.mxu0 0
        %612 = vmatpush1.bf16.msra.mxu0 0
        %613 = vmatprep.mubr.bf16.mxu0 0
        %614 = vmatmul.mubr.bf16.gmra.mrb[0].mxu0 %v478
        %v615 = vpop.f32.mrb[0].mxu0
        %v616 = vadd.f32 %v531, %v615
        %v617 = vpop.f32.mrb[0].mxu0
        %v618 = vpop.f32.mrb[0].mxu0
        %v619 = vadd.f32 %v531, %v618
        %v620 = vpop.f32.mrb[0].mxu0
        %621 = vmatprep.mubr.bf16.mxu0 0
        %622 = vmatmul.mubr.bf16.gmra.mrb[0].mxu0 %v479
        %v623 = vpop.f32.mrb[0].mxu0
        %v624 = vadd.f32 %v531, %v623
        %v625 = vpop.f32.mrb[0].mxu0
        %v626 = vpop.f32.mrb[0].mxu0
        %v627 = vadd.f32 %v531, %v626
        %v628 = vpop.f32.mrb[0].mxu0
        %629 = vmatprep.mubr.bf16.mxu0 0
        %630 = vmatmul.mubr.bf16.gmra.mrb[0].mxu0 %v480
        %v631 = vpop.f32.mrb[0].mxu0
        %v632 = vadd.f32 %v531, %v631
        %v633 = vpop.f32.mrb[0].mxu0
        %v634 = vpop.f32.mrb[0].mxu0
        %v635 = vadd.f32 %v531, %v634
        %v636 = vpop.f32.mrb[0].mxu0
        %637 = vmatprep.mubr.bf16.mxu0 0
        %638 = vmatmul.mubr.bf16.gmra.mrb[0].mxu0 %v481
        %v639 = vpop.f32.mrb[0].mxu0
        %v640 = vadd.f32 %v531, %v639
        %v641 = vpop.f32.mrb[0].mxu0
        %v642 = vpop.f32.mrb[0].mxu0
        %v643 = vadd.f32 %v531, %v642
        %v644 = vpop.f32.mrb[0].mxu0
        %645 = vmatprep.mubr.bf16.mxu0 0
        %646 = vmatmul.mubr.bf16.gmra.mrb[0].mxu0 %v482
        %v647 = vpop.f32.mrb[0].mxu0
        %v648 = vadd.f32 %v531, %v647
        %v649 = vpop.f32.mrb[0].mxu0
        %v650 = vpop.f32.mrb[0].mxu0
        %v651 = vadd.f32 %v531, %v650
        %v652 = vpop.f32.mrb[0].mxu0
        %653 = vmatprep.mubr.bf16.mxu0 0
        %654 = vmatmul.mubr.bf16.gmra.mrb[0].mxu0 %v483
        %v655 = vpop.f32.mrb[0].mxu0
        %v656 = vadd.f32 %v531, %v655
        %v657 = vpop.f32.mrb[0].mxu0
        %v658 = vpop.f32.mrb[0].mxu0
        %v659 = vadd.f32 %v531, %v658
        %v660 = vpop.f32.mrb[0].mxu0
        %661 = vmatprep.mubr.bf16.mxu0 0
        %662 = vmatmul.mubr.bf16.gmra.mrb[0].mxu0 %v484
        %v663 = vpop.f32.mrb[0].mxu0
        %v664 = vadd.f32 %v531, %v663
        %v665 = vpop.f32.mrb[0].mxu0
        %v666 = vpop.f32.mrb[0].mxu0
        %v667 = vadd.f32 %v531, %v666
        %v668 = vpop.f32.mrb[0].mxu0
        %669 = vmatprep.mubr.bf16.mxu0 0
        %670 = vmatmul.mubr.bf16.gmra.mrb[0].mxu0 %v485
        %v671 = vpop.f32.mrb[0].mxu0
        %v672 = vadd.f32 %v531, %v671
        %v673 = vpop.f32.mrb[0].mxu0
        %v674 = vpop.f32.mrb[0].mxu0
        %v675 = vadd.f32 %v531, %v674
        %v676 = vpop.f32.mrb[0].mxu0
        %677 = vdwg.mxu0
        %v678 = vld [vmem:[#allocation8] sm:$0xff]
        %v679 = vld [vmem:[#allocation8 + $0x8] sm:$0xff]
        %v680 = vld [vmem:[#allocation8 + $0x10] sm:$0xff]
        %v681 = vld [vmem:[#allocation8 + $0x18] sm:$0xff]
        %v682 = vld [vmem:[#allocation8 + $0x20] sm:$0xff]
        %v683 = vld [vmem:[#allocation8 + $0x28] sm:$0xff]
        %v684 = vld [vmem:[#allocation8 + $0x30] sm:$0xff]
        %v685 = vld [vmem:[#allocation8 + $0x38] sm:$0xff]
        %v686 = vld [vmem:[#allocation8 + $0x40] sm:$0xff]
        %v687 = vld [vmem:[#allocation8 + $0x48] sm:$0xff]
        %v688 = vld [vmem:[#allocation8 + $0x50] sm:$0xff]
        %v689 = vld [vmem:[#allocation8 + $0x58] sm:$0xff]
        %v690 = vld [vmem:[#allocation8 + $0x60] sm:$0xff]
        %v691 = vld [vmem:[#allocation8 + $0x68] sm:$0xff]
        %v692 = vld [vmem:[#allocation8 + $0x70] sm:$0xff]
        %v693 = vld [vmem:[#allocation8 + $0x78] sm:$0xff]
        %v694 = vld [vmem:[%s5] sm:$0x3]
        %v696 = vlaneseq
        %v697 = vshrl.u32 %v696, 7
        %v698 = vsub.s32 0, %v697
        %v699 = vrot.slane %v694, %v698
        %v700 = vlaneseq
        %v701 = vshrl.u32 %v700, 7
        %v702 = vsub.s32 1, %v701
        %v703 = vrot.slane %v694, %v702
        %v722 = vunpack.c.l.b16 %v678
        %v723 = vunpack.c.h.b16 %v678
        %v724 = vunpack.c.l.b16 %v679
        %v725 = vunpack.c.h.b16 %v679
        %v726 = vunpack.c.l.b16 %v680
        %v727 = vunpack.c.h.b16 %v680
        %v728 = vunpack.c.l.b16 %v681
        %v729 = vunpack.c.h.b16 %v681
        %v730 = vunpack.c.l.b16 %v682
        %v731 = vunpack.c.h.b16 %v682
        %v732 = vunpack.c.l.b16 %v683
        %v733 = vunpack.c.h.b16 %v683
        %v734 = vunpack.c.l.b16 %v684
        %v735 = vunpack.c.h.b16 %v684
        %v736 = vunpack.c.l.b16 %v685
        %v737 = vunpack.c.h.b16 %v685
        %v738 = vunpack.c.l.b16 %v686
        %v739 = vunpack.c.h.b16 %v686
        %v740 = vunpack.c.l.b16 %v687
        %v741 = vunpack.c.h.b16 %v687
        %v742 = vunpack.c.l.b16 %v688
        %v743 = vunpack.c.h.b16 %v688
        %v744 = vunpack.c.l.b16 %v689
        %v745 = vunpack.c.h.b16 %v689
        %v746 = vunpack.c.l.b16 %v690
        %v747 = vunpack.c.h.b16 %v690
        %v748 = vunpack.c.l.b16 %v691
        %v749 = vunpack.c.h.b16 %v691
        %v750 = vunpack.c.l.b16 %v692
        %v751 = vunpack.c.h.b16 %v692
        %v752 = vunpack.c.l.b16 %v693
        %v753 = vunpack.c.h.b16 %v693
        %v754 = vpack.c.b16 %v724, %v722
        %v755 = vpack.c.b16 %v725, %v723
        %v756 = vpack.c.b16 %v728, %v726
        %v757 = vpack.c.b16 %v729, %v727
        %v758 = vpack.c.b16 %v732, %v730
        %v759 = vpack.c.b16 %v733, %v731
        %v760 = vpack.c.b16 %v736, %v734
        %v761 = vpack.c.b16 %v737, %v735
        %v762 = vpack.c.b16 %v740, %v738
        %v763 = vpack.c.b16 %v741, %v739
        %v764 = vpack.c.b16 %v744, %v742
        %v765 = vpack.c.b16 %v745, %v743
        %v766 = vpack.c.b16 %v748, %v746
        %v767 = vpack.c.b16 %v749, %v747
        %v768 = vpack.c.b16 %v752, %v750
        %v769 = vpack.c.b16 %v753, %v751
        %786 = vmatprep.subr.bf16.mxu0 %v755
        %787 = vmatpush1.bf16.msra.mxu0 %v754
        %788 = vmatprep.subr.bf16.mxu0 %v757
        %789 = vmatpush1.bf16.msra.mxu0 %v756
        %790 = vmatprep.subr.bf16.mxu0 %v759
        %791 = vmatpush1.bf16.msra.mxu0 %v758
        %792 = vmatprep.subr.bf16.mxu0 %v761
        %793 = vmatpush1.bf16.msra.mxu0 %v760
        %794 = vmatprep.subr.bf16.mxu0 %v763
        %795 = vmatpush1.bf16.msra.mxu0 %v762
        %796 = vmatprep.subr.bf16.mxu0 %v765
        %797 = vmatpush1.bf16.msra.mxu0 %v764
        %798 = vmatprep.subr.bf16.mxu0 %v767
        %799 = vmatpush1.bf16.msra.mxu0 %v766
        %800 = vmatprep.subr.bf16.mxu0 %v769
        %801 = vmatpush1.bf16.msra.mxu0 %v768
        %802 = vmatprep.subr.bf16.mxu0 0
        %803 = vmatpush1.bf16.msra.mxu0 0
        %804 = vmatprep.subr.bf16.mxu0 0
        %805 = vmatpush1.bf16.msra.mxu0 0
        %806 = vmatprep.subr.bf16.mxu0 0
        %807 = vmatpush1.bf16.msra.mxu0 0
        %808 = vmatprep.subr.bf16.mxu0 0
        %809 = vmatpush1.bf16.msra.mxu0 0
        %810 = vmatprep.subr.bf16.mxu0 0
        %811 = vmatpush1.bf16.msra.mxu0 0
        %812 = vmatprep.subr.bf16.mxu0 0
        %813 = vmatpush1.bf16.msra.mxu0 0
        %814 = vmatprep.subr.bf16.mxu0 0
        %815 = vmatpush1.bf16.msra.mxu0 0
        %816 = vmatprep.subr.bf16.mxu0 0
        %817 = vmatpush1.bf16.msra.mxu0 0
        %818 = vmatprep.mubr.bf16.mxu0 0
        %819 = vmatmul.mubr.bf16.gmra.mrb[0].mxu0 %v502
        %v820 = vpop.f32.mrb[0].mxu0
        %v821 = vadd.f32 %v699, %v820
        %v822 = vpop.f32.mrb[0].mxu0
        %v823 = vadd.f32 %v703, %v822
        %v824 = vpop.f32.mrb[0].mxu0
        %v825 = vadd.f32 %v699, %v824
        %v826 = vpop.f32.mrb[0].mxu0
        %v827 = vadd.f32 %v703, %v826
        %828 = vmatprep.mubr.bf16.mxu0 0
        %829 = vmatmul.mubr.bf16.gmra.mrb[0].mxu0 %v503
        %v830 = vpop.f32.mrb[0].mxu0
        %v831 = vadd.f32 %v699, %v830
        %v832 = vpop.f32.mrb[0].mxu0
        %v833 = vadd.f32 %v703, %v832
        %v834 = vpop.f32.mrb[0].mxu0
        %v835 = vadd.f32 %v699, %v834
        %v836 = vpop.f32.mrb[0].mxu0
        %v837 = vadd.f32 %v703, %v836
        %838 = vmatprep.mubr.bf16.mxu0 0
        %839 = vmatmul.mubr.bf16.gmra.mrb[0].mxu0 %v504
        %v840 = vpop.f32.mrb[0].mxu0
        %v841 = vadd.f32 %v699, %v840
        %v842 = vpop.f32.mrb[0].mxu0
        %v843 = vadd.f32 %v703, %v842
        %v844 = vpop.f32.mrb[0].mxu0
        %v845 = vadd.f32 %v699, %v844
        %v846 = vpop.f32.mrb[0].mxu0
        %v847 = vadd.f32 %v703, %v846
        %848 = vmatprep.mubr.bf16.mxu0 0
        %849 = vmatmul.mubr.bf16.gmra.mrb[0].mxu0 %v505
        %v850 = vpop.f32.mrb[0].mxu0
        %v851 = vadd.f32 %v699, %v850
        %v852 = vpop.f32.mrb[0].mxu0
        %v853 = vadd.f32 %v703, %v852
        %v854 = vpop.f32.mrb[0].mxu0
        %v855 = vadd.f32 %v699, %v854
        %v856 = vpop.f32.mrb[0].mxu0
        %v857 = vadd.f32 %v703, %v856
        %858 = vmatprep.mubr.bf16.mxu0 0
        %859 = vmatmul.mubr.bf16.gmra.mrb[0].mxu0 %v506
        %v860 = vpop.f32.mrb[0].mxu0
        %v861 = vadd.f32 %v699, %v860
        %v862 = vpop.f32.mrb[0].mxu0
        %v863 = vadd.f32 %v703, %v862
        %v864 = vpop.f32.mrb[0].mxu0
        %v865 = vadd.f32 %v699, %v864
        %v866 = vpop.f32.mrb[0].mxu0
        %v867 = vadd.f32 %v703, %v866
        %868 = vmatprep.mubr.bf16.mxu0 0
        %869 = vmatmul.mubr.bf16.gmra.mrb[0].mxu0 %v507
        %v870 = vpop.f32.mrb[0].mxu0
        %v871 = vadd.f32 %v699, %v870
        %v872 = vpop.f32.mrb[0].mxu0
        %v873 = vadd.f32 %v703, %v872
        %v874 = vpop.f32.mrb[0].mxu0
        %v875 = vadd.f32 %v699, %v874
        %v876 = vpop.f32.mrb[0].mxu0
        %v877 = vadd.f32 %v703, %v876
        %878 = vmatprep.mubr.bf16.mxu0 0
        %879 = vmatmul.mubr.bf16.gmra.mrb[0].mxu0 %v508
        %v880 = vpop.f32.mrb[0].mxu0
        %v881 = vadd.f32 %v699, %v880
        %v882 = vpop.f32.mrb[0].mxu0
        %v883 = vadd.f32 %v703, %v882
        %v884 = vpop.f32.mrb[0].mxu0
        %v885 = vadd.f32 %v699, %v884
        %v886 = vpop.f32.mrb[0].mxu0
        %v887 = vadd.f32 %v703, %v886
        %888 = vmatprep.mubr.bf16.mxu0 0
        %889 = vmatmul.mubr.bf16.gmra.mrb[0].mxu0 %v509
        %v890 = vpop.f32.mrb[0].mxu0
        %v891 = vadd.f32 %v699, %v890
        %v892 = vpop.f32.mrb[0].mxu0
        %v893 = vadd.f32 %v703, %v892
        %v894 = vpop.f32.mrb[0].mxu0
        %v895 = vadd.f32 %v699, %v894
        %v896 = vpop.f32.mrb[0].mxu0
        %v897 = vadd.f32 %v703, %v896
        %898 = vdwg.mxu0
        %v899 = vpack.c.bf16 %v619, %v616
        %v900 = vpack.c.bf16 %v627, %v624
        %v901 = vpack.c.bf16 %v635, %v632
        %v902 = vpack.c.bf16 %v643, %v640
        %v903 = vpack.c.bf16 %v651, %v648
        %v904 = vpack.c.bf16 %v659, %v656
        %v905 = vpack.c.bf16 %v667, %v664
        %v906 = vpack.c.bf16 %v675, %v672
        %v907 = vpack.c.bf16 %v825, %v821
        %v908 = vpack.c.bf16 %v827, %v823
        %v909 = vpack.c.bf16 %v835, %v831
        %v910 = vpack.c.bf16 %v837, %v833
        %v911 = vpack.c.bf16 %v845, %v841
        %v912 = vpack.c.bf16 %v847, %v843
        %v913 = vpack.c.bf16 %v855, %v851
        %v914 = vpack.c.bf16 %v857, %v853
        %v915 = vpack.c.bf16 %v865, %v861
        %v916 = vpack.c.bf16 %v867, %v863
        %v917 = vpack.c.bf16 %v875, %v871
        %v918 = vpack.c.bf16 %v877, %v873
        %v919 = vpack.c.bf16 %v885, %v881
        %v920 = vpack.c.bf16 %v887, %v883
        %v921 = vpack.c.bf16 %v895, %v891
        %v922 = vpack.c.bf16 %v897, %v893
        %vm923 = vcmask 261120
        %v925 = vsel %vm923, %v899, 0
        %v928 = vsel %vm923, %v900, 0
        %v931 = vsel %vm923, %v901, 0
        %v934 = vsel %vm923, %v902, 0
        %v937 = vsel %vm923, %v903, 0
        %v940 = vsel %vm923, %v904, 0
        %v943 = vsel %vm923, %v905, 0
        %v946 = vsel %vm923, %v906, 0
        %v949 = vsel %vm923, %v907, 0
        %v952 = vsel %vm923, %v909, 0
        %v955 = vsel %vm923, %v911, 0
        %v958 = vsel %vm923, %v913, 0
        %v961 = vsel %vm923, %v915, 0
        %v964 = vsel %vm923, %v917, 0
        %v967 = vsel %vm923, %v919, 0
        %v970 = vsel %vm923, %v921, 0
        %972 = vmatprep.subr.bf16.mxu0 0
        %973 = vmatpush1.bf16.xpose.msra.mxu0 %v949
        %974 = vmatprep.subr.bf16.mxu0 0
        %975 = vmatpush1.bf16.xpose.msra.mxu0 %v952
        %976 = vmatprep.subr.bf16.mxu0 0
        %977 = vmatpush1.bf16.xpose.msra.mxu0 %v955
        %978 = vmatprep.subr.bf16.mxu0 0
        %979 = vmatpush1.bf16.xpose.msra.mxu0 %v958
        %980 = vmatprep.subr.bf16.mxu0 0
        %981 = vmatpush1.bf16.xpose.msra.mxu0 %v961
        %982 = vmatprep.subr.bf16.mxu0 0
        %983 = vmatpush1.bf16.xpose.msra.mxu0 %v964
        %984 = vmatprep.subr.bf16.mxu0 0
        %985 = vmatpush1.bf16.xpose.msra.mxu0 %v967
        %986 = vmatprep.subr.bf16.mxu0 0
        %987 = vmatpush1.bf16.xpose.msra.mxu0 %v970
        %988 = vmatprep.subr.bf16.mxu0 0
        %989 = vmatpush1.bf16.xpose.msra.mxu0 0
        %990 = vmatprep.subr.bf16.mxu0 0
        %991 = vmatpush1.bf16.xpose.msra.mxu0 0
        %992 = vmatprep.subr.bf16.mxu0 0
        %993 = vmatpush1.bf16.xpose.msra.mxu0 0
        %994 = vmatprep.subr.bf16.mxu0 0
        %995 = vmatpush1.bf16.xpose.msra.mxu0 0
        %996 = vmatprep.subr.bf16.mxu0 0
        %997 = vmatpush1.bf16.xpose.msra.mxu0 0
        %998 = vmatprep.subr.bf16.mxu0 0
        %999 = vmatpush1.bf16.xpose.msra.mxu0 0
        %1000 = vmatprep.subr.bf16.mxu0 0
        %1001 = vmatpush1.bf16.xpose.msra.mxu0 0
        %1002 = vmatprep.subr.bf16.mxu0 0
        %1003 = vmatpush1.bf16.xpose.msra.mxu0 0
        %1004 = vmatprep.mubr.bf16.mxu0 0
        %1005 = vmatmul.mubr.bf16.gmra.mrb[0].mxu0 %v925
        %v1006 = vpop.f32.mrb[0].mxu0
        %v1007 = vadd.f32 0.0, %v1006
        %v1008 = vpop.f32.mrb[0].mxu0
        %v1009 = vpop.f32.mrb[0].mxu0
        %v1010 = vadd.f32 0.0, %v1009
        %v1011 = vpop.f32.mrb[0].mxu0
        %1012 = vmatprep.mubr.bf16.mxu0 0
        %1013 = vmatmul.mubr.bf16.gmra.mrb[0].mxu0 %v928
        %v1014 = vpop.f32.mrb[0].mxu0
        %v1015 = vadd.f32 0.0, %v1014
        %v1016 = vpop.f32.mrb[0].mxu0
        %v1017 = vpop.f32.mrb[0].mxu0
        %v1018 = vadd.f32 0.0, %v1017
        %v1019 = vpop.f32.mrb[0].mxu0
        %1020 = vmatprep.mubr.bf16.mxu0 0
        %1021 = vmatmul.mubr.bf16.gmra.mrb[0].mxu0 %v931
        %v1022 = vpop.f32.mrb[0].mxu0
        %v1023 = vadd.f32 0.0, %v1022
        %v1024 = vpop.f32.mrb[0].mxu0
        %v1025 = vpop.f32.mrb[0].mxu0
        %v1026 = vadd.f32 0.0, %v1025
        %v1027 = vpop.f32.mrb[0].mxu0
        %1028 = vmatprep.mubr.bf16.mxu0 0
        %1029 = vmatmul.mubr.bf16.gmra.mrb[0].mxu0 %v934
        %v1030 = vpop.f32.mrb[0].mxu0
        %v1031 = vadd.f32 0.0, %v1030
        %v1032 = vpop.f32.mrb[0].mxu0
        %v1033 = vpop.f32.mrb[0].mxu0
        %v1034 = vadd.f32 0.0, %v1033
        %v1035 = vpop.f32.mrb[0].mxu0
        %1036 = vmatprep.mubr.bf16.mxu0 0
        %1037 = vmatmul.mubr.bf16.gmra.mrb[0].mxu0 %v937
        %v1038 = vpop.f32.mrb[0].mxu0
        %v1039 = vadd.f32 0.0, %v1038
        %v1040 = vpop.f32.mrb[0].mxu0
        %v1041 = vpop.f32.mrb[0].mxu0
        %v1042 = vadd.f32 0.0, %v1041
        %v1043 = vpop.f32.mrb[0].mxu0
        %1044 = vmatprep.mubr.bf16.mxu0 0
        %1045 = vmatmul.mubr.bf16.gmra.mrb[0].mxu0 %v940
        %v1046 = vpop.f32.mrb[0].mxu0
        %v1047 = vadd.f32 0.0, %v1046
        %v1048 = vpop.f32.mrb[0].mxu0
        %v1049 = vpop.f32.mrb[0].mxu0
        %v1050 = vadd.f32 0.0, %v1049
        %v1051 = vpop.f32.mrb[0].mxu0
        %1052 = vmatprep.mubr.bf16.mxu0 0
        %1053 = vmatmul.mubr.bf16.gmra.mrb[0].mxu0 %v943
        %v1054 = vpop.f32.mrb[0].mxu0
        %v1055 = vadd.f32 0.0, %v1054
        %v1056 = vpop.f32.mrb[0].mxu0
        %v1057 = vpop.f32.mrb[0].mxu0
        %v1058 = vadd.f32 0.0, %v1057
        %v1059 = vpop.f32.mrb[0].mxu0
        %1060 = vmatprep.mubr.bf16.mxu0 0
        %1061 = vmatmul.mubr.bf16.gmra.mrb[0].mxu0 %v946
        %v1062 = vpop.f32.mrb[0].mxu0
        %v1063 = vadd.f32 0.0, %v1062
        %v1064 = vpop.f32.mrb[0].mxu0
        %v1065 = vpop.f32.mrb[0].mxu0
        %v1066 = vadd.f32 0.0, %v1065
        %v1067 = vpop.f32.mrb[0].mxu0
        %1068 = vdwg.mxu0
        %1069 = vmax.xlane.f32.xlu0 %v1007
        %v1070 = vpop.xlane.xlu0 %1069
        %1071 = vmax.xlane.f32.xlu0 %v1010
        %v1072 = vpop.xlane.xlu0 %1071
        %1073 = vmax.xlane.f32.xlu0 %v1015
        %v1074 = vpop.xlane.xlu0 %1073
        %1075 = vmax.xlane.f32.xlu0 %v1018
        %v1076 = vpop.xlane.xlu0 %1075
        %1077 = vmax.xlane.f32.xlu0 %v1023
        %v1078 = vpop.xlane.xlu0 %1077
        %1079 = vmax.xlane.f32.xlu0 %v1026
        %v1080 = vpop.xlane.xlu0 %1079
        %1081 = vmax.xlane.f32.xlu0 %v1031
        %v1082 = vpop.xlane.xlu0 %1081
        %1083 = vmax.xlane.f32.xlu0 %v1034
        %v1084 = vpop.xlane.xlu0 %1083
        %1085 = vmax.xlane.f32.xlu0 %v1039
        %v1086 = vpop.xlane.xlu0 %1085
        %1087 = vmax.xlane.f32.xlu0 %v1042
        %v1088 = vpop.xlane.xlu0 %1087
        %1089 = vmax.xlane.f32.xlu0 %v1047
        %v1090 = vpop.xlane.xlu0 %1089
        %1091 = vmax.xlane.f32.xlu0 %v1050
        %v1092 = vpop.xlane.xlu0 %1091
        %1093 = vmax.xlane.f32.xlu0 %v1055
        %v1094 = vpop.xlane.xlu0 %1093
        %1095 = vmax.xlane.f32.xlu0 %v1058
        %v1096 = vpop.xlane.xlu0 %1095
        %1097 = vmax.xlane.f32.xlu0 %v1063
        %v1098 = vpop.xlane.xlu0 %1097
        %1099 = vmax.xlane.f32.xlu0 %v1066
        %v1100 = vpop.xlane.xlu0 %1099
        %v1101 = vsub.f32 %v1007, %v1070
        %v1102 = vsub.f32 %v1010, %v1072
        %v1103 = vsub.f32 %v1015, %v1074
        %v1104 = vsub.f32 %v1018, %v1076
        %v1105 = vsub.f32 %v1023, %v1078
        %v1106 = vsub.f32 %v1026, %v1080
        %v1107 = vsub.f32 %v1031, %v1082
        %v1108 = vsub.f32 %v1034, %v1084
        %v1109 = vsub.f32 %v1039, %v1086
        %v1110 = vsub.f32 %v1042, %v1088
        %v1111 = vsub.f32 %v1047, %v1090
        %v1112 = vsub.f32 %v1050, %v1092
        %v1113 = vsub.f32 %v1055, %v1094
        %v1114 = vsub.f32 %v1058, %v1096
        %v1115 = vsub.f32 %v1063, %v1098
        %v1116 = vsub.f32 %v1066, %v1100
        %v1117 = vmul.f32 %v1101, 1.442695
        %v1118 = vpow.pop %v1117
        %v1119 = vmul.f32 %v1102, 1.442695
        %v1120 = vpow.pop %v1119
        %v1121 = vmul.f32 %v1103, 1.442695
        %v1122 = vpow.pop %v1121
        %v1123 = vmul.f32 %v1104, 1.442695
        %v1124 = vpow.pop %v1123
        %v1125 = vmul.f32 %v1105, 1.442695
        %v1126 = vpow.pop %v1125
        %v1127 = vmul.f32 %v1106, 1.442695
        %v1128 = vpow.pop %v1127
        %v1129 = vmul.f32 %v1107, 1.442695
        %v1130 = vpow.pop %v1129
        %v1131 = vmul.f32 %v1108, 1.442695
        %v1132 = vpow.pop %v1131
        %v1133 = vmul.f32 %v1109, 1.442695
        %v1134 = vpow.pop %v1133
        %v1135 = vmul.f32 %v1110, 1.442695
        %v1136 = vpow.pop %v1135
        %v1137 = vmul.f32 %v1111, 1.442695
        %v1138 = vpow.pop %v1137
        %v1139 = vmul.f32 %v1112, 1.442695
        %v1140 = vpow.pop %v1139
        %v1141 = vmul.f32 %v1113, 1.442695
        %v1142 = vpow.pop %v1141
        %v1143 = vmul.f32 %v1114, 1.442695
        %v1144 = vpow.pop %v1143
        %v1145 = vmul.f32 %v1115, 1.442695
        %v1146 = vpow.pop %v1145
        %v1147 = vmul.f32 %v1116, 1.442695
        %v1148 = vpow.pop %v1147
        %1149 = vadd.xlane.f32.xlu0 %v1118
        %v1150 = vpop.xlane.xlu0 %1149
        %1151 = vadd.xlane.f32.xlu0 %v1120
        %v1152 = vpop.xlane.xlu0 %1151
        %1153 = vadd.xlane.f32.xlu0 %v1122
        %v1154 = vpop.xlane.xlu0 %1153
        %1155 = vadd.xlane.f32.xlu0 %v1124
        %v1156 = vpop.xlane.xlu0 %1155
        %1157 = vadd.xlane.f32.xlu0 %v1126
        %v1158 = vpop.xlane.xlu0 %1157
        %1159 = vadd.xlane.f32.xlu0 %v1128
        %v1160 = vpop.xlane.xlu0 %1159
        %1161 = vadd.xlane.f32.xlu0 %v1130
        %v1162 = vpop.xlane.xlu0 %1161
        %1163 = vadd.xlane.f32.xlu0 %v1132
        %v1164 = vpop.xlane.xlu0 %1163
        %1165 = vadd.xlane.f32.xlu0 %v1134
        %v1166 = vpop.xlane.xlu0 %1165
        %1167 = vadd.xlane.f32.xlu0 %v1136
        %v1168 = vpop.xlane.xlu0 %1167
        %1169 = vadd.xlane.f32.xlu0 %v1138
        %v1170 = vpop.xlane.xlu0 %1169
        %1171 = vadd.xlane.f32.xlu0 %v1140
        %v1172 = vpop.xlane.xlu0 %1171
        %1173 = vadd.xlane.f32.xlu0 %v1142
        %v1174 = vpop.xlane.xlu0 %1173
        %1175 = vadd.xlane.f32.xlu0 %v1144
        %v1176 = vpop.xlane.xlu0 %1175
        %1177 = vadd.xlane.f32.xlu0 %v1146
        %v1178 = vpop.xlane.xlu0 %1177
        %1179 = vadd.xlane.f32.xlu0 %v1148
        %v1180 = vpop.xlane.xlu0 %1179
        %v1181 = vpack.c.bf16 %v1120, %v1118
        %v1182 = vpack.c.bf16 %v1124, %v1122
        %v1183 = vpack.c.bf16 %v1128, %v1126
        %v1184 = vpack.c.bf16 %v1132, %v1130
        %v1185 = vpack.c.bf16 %v1136, %v1134
        %v1186 = vpack.c.bf16 %v1140, %v1138
        %v1187 = vpack.c.bf16 %v1144, %v1142
        %v1188 = vpack.c.bf16 %v1148, %v1146
        %1189 = vmatprep.subr.bf16.mxu0 0
        %1190 = vmatpush1.bf16.msra.mxu0 %v908
        %1191 = vmatprep.subr.bf16.mxu0 0
        %1192 = vmatpush1.bf16.msra.mxu0 %v910
        %1193 = vmatprep.subr.bf16.mxu0 0
        %1194 = vmatpush1.bf16.msra.mxu0 %v912
        %1195 = vmatprep.subr.bf16.mxu0 0
        %1196 = vmatpush1.bf16.msra.mxu0 %v914
        %1197 = vmatprep.subr.bf16.mxu0 0
        %1198 = vmatpush1.bf16.msra.mxu0 %v916
        %1199 = vmatprep.subr.bf16.mxu0 0
        %1200 = vmatpush1.bf16.msra.mxu0 %v918
        %1201 = vmatprep.subr.bf16.mxu0 0
        %1202 = vmatpush1.bf16.msra.mxu0 %v920
        %1203 = vmatprep.subr.bf16.mxu0 0
        %1204 = vmatpush1.bf16.msra.mxu0 %v922
        %1205 = vmatprep.subr.bf16.mxu0 0
        %1206 = vmatpush1.bf16.msra.mxu0 0
        %1207 = vmatprep.subr.bf16.mxu0 0
        %1208 = vmatpush1.bf16.msra.mxu0 0
        %1209 = vmatprep.subr.bf16.mxu0 0
        %1210 = vmatpush1.bf16.msra.mxu0 0
        %1211 = vmatprep.subr.bf16.mxu0 0
        %1212 = vmatpush1.bf16.msra.mxu0 0
        %1213 = vmatprep.subr.bf16.mxu0 0
        %1214 = vmatpush1.bf16.msra.mxu0 0
        %1215 = vmatprep.subr.bf16.mxu0 0
        %1216 = vmatpush1.bf16.msra.mxu0 0
        %1217 = vmatprep.subr.bf16.mxu0 0
        %1218 = vmatpush1.bf16.msra.mxu0 0
        %1219 = vmatprep.subr.bf16.mxu0 0
        %1220 = vmatpush1.bf16.msra.mxu0 0
        %1221 = vmatprep.mubr.bf16.mxu0 0
        %1222 = vmatmul.mubr.bf16.gmra.mrb[0].mxu0 %v1181
        %v1223 = vpop.f32.mrb[0].mxu0
        %v1224 = vadd.f32 0.0, %v1223
        %v1225 = vpop.f32.mrb[0].mxu0
        %v1226 = vpop.f32.mrb[0].mxu0
        %v1227 = vadd.f32 0.0, %v1226
        %v1228 = vpop.f32.mrb[0].mxu0
        %1229 = vmatprep.mubr.bf16.mxu0 0
        %1230 = vmatmul.mubr.bf16.gmra.mrb[0].mxu0 %v1182
        %v1231 = vpop.f32.mrb[0].mxu0
        %v1232 = vadd.f32 0.0, %v1231
        %v1233 = vpop.f32.mrb[0].mxu0
        %v1234 = vpop.f32.mrb[0].mxu0
        %v1235 = vadd.f32 0.0, %v1234
        %v1236 = vpop.f32.mrb[0].mxu0
        %1237 = vmatprep.mubr.bf16.mxu0 0
        %1238 = vmatmul.mubr.bf16.gmra.mrb[0].mxu0 %v1183
        %v1239 = vpop.f32.mrb[0].mxu0
        %v1240 = vadd.f32 0.0, %v1239
        %v1241 = vpop.f32.mrb[0].mxu0
        %v1242 = vpop.f32.mrb[0].mxu0
        %v1243 = vadd.f32 0.0, %v1242
        %v1244 = vpop.f32.mrb[0].mxu0
        %1245 = vmatprep.mubr.bf16.mxu0 0
        %1246 = vmatmul.mubr.bf16.gmra.mrb[0].mxu0 %v1184
        %v1247 = vpop.f32.mrb[0].mxu0
        %v1248 = vadd.f32 0.0, %v1247
        %v1249 = vpop.f32.mrb[0].mxu0
        %v1250 = vpop.f32.mrb[0].mxu0
        %v1251 = vadd.f32 0.0, %v1250
        %v1252 = vpop.f32.mrb[0].mxu0
        %1253 = vmatprep.mubr.bf16.mxu0 0
        %1254 = vmatmul.mubr.bf16.gmra.mrb[0].mxu0 %v1185
        %v1255 = vpop.f32.mrb[0].mxu0
        %v1256 = vadd.f32 0.0, %v1255
        %v1257 = vpop.f32.mrb[0].mxu0
        %v1258 = vpop.f32.mrb[0].mxu0
        %v1259 = vadd.f32 0.0, %v1258
        %v1260 = vpop.f32.mrb[0].mxu0
        %1261 = vmatprep.mubr.bf16.mxu0 0
        %1262 = vmatmul.mubr.bf16.gmra.mrb[0].mxu0 %v1186
        %v1263 = vpop.f32.mrb[0].mxu0
        %v1264 = vadd.f32 0.0, %v1263
        %v1265 = vpop.f32.mrb[0].mxu0
        %v1266 = vpop.f32.mrb[0].mxu0
        %v1267 = vadd.f32 0.0, %v1266
        %v1268 = vpop.f32.mrb[0].mxu0
        %1269 = vmatprep.mubr.bf16.mxu0 0
        %1270 = vmatmul.mubr.bf16.gmra.mrb[0].mxu0 %v1187
        %v1271 = vpop.f32.mrb[0].mxu0
        %v1272 = vadd.f32 0.0, %v1271
        %v1273 = vpop.f32.mrb[0].mxu0
        %v1274 = vpop.f32.mrb[0].mxu0
        %v1275 = vadd.f32 0.0, %v1274
        %v1276 = vpop.f32.mrb[0].mxu0
        %1277 = vmatprep.mubr.bf16.mxu0 0
        %1278 = vmatmul.mubr.bf16.gmra.mrb[0].mxu0 %v1188
        %v1279 = vpop.f32.mrb[0].mxu0
        %v1280 = vadd.f32 0.0, %v1279
        %v1281 = vpop.f32.mrb[0].mxu0
        %v1282 = vpop.f32.mrb[0].mxu0
        %v1283 = vadd.f32 0.0, %v1282
        %v1284 = vpop.f32.mrb[0].mxu0
        %1285 = vdwg.mxu0
        %v1286 = vrcp.pop %v1150
        %v1287 = vrcp.pop %v1152
        %v1288 = vrcp.pop %v1154
        %v1289 = vrcp.pop %v1156
        %v1290 = vrcp.pop %v1158
        %v1291 = vrcp.pop %v1160
        %v1292 = vrcp.pop %v1162
        %v1293 = vrcp.pop %v1164
        %v1294 = vrcp.pop %v1166
        %v1295 = vrcp.pop %v1168
        %v1296 = vrcp.pop %v1170
        %v1297 = vrcp.pop %v1172
        %v1298 = vrcp.pop %v1174
        %v1299 = vrcp.pop %v1176
        %v1300 = vrcp.pop %v1178
        %v1301 = vrcp.pop %v1180
        %v1302 = vmul.f32 %v1224, %v1286
        %v1303 = vmul.f32 %v1227, %v1287
        %v1304 = vmul.f32 %v1232, %v1288
        %v1305 = vmul.f32 %v1235, %v1289
        %v1306 = vmul.f32 %v1240, %v1290
        %v1307 = vmul.f32 %v1243, %v1291
        %v1308 = vmul.f32 %v1248, %v1292
        %v1309 = vmul.f32 %v1251, %v1293
        %v1310 = vmul.f32 %v1256, %v1294
        %v1311 = vmul.f32 %v1259, %v1295
        %v1312 = vmul.f32 %v1264, %v1296
        %v1313 = vmul.f32 %v1267, %v1297
        %v1314 = vmul.f32 %v1272, %v1298
        %v1315 = vmul.f32 %v1275, %v1299
        %v1316 = vmul.f32 %v1280, %v1300
        %v1317 = vmul.f32 %v1283, %v1301
        %1326 = vrot.lane.b32.xlu0 %v899, 96
        %v1327 = vpop.permute.xlu0 %1326
        %1328 = vrot.lane.b32.xlu0 %v900, 96
        %v1329 = vpop.permute.xlu0 %1328
        %1330 = vrot.lane.b32.xlu0 %v901, 96
        %v1331 = vpop.permute.xlu0 %1330
        %1332 = vrot.lane.b32.xlu0 %v902, 96
        %v1333 = vpop.permute.xlu0 %1332
        %1334 = vrot.lane.b32.xlu0 %v903, 96
        %v1335 = vpop.permute.xlu0 %1334
        %1336 = vrot.lane.b32.xlu0 %v904, 96
        %v1337 = vpop.permute.xlu0 %1336
        %1338 = vrot.lane.b32.xlu0 %v905, 96
        %v1339 = vpop.permute.xlu0 %1338
        %1340 = vrot.lane.b32.xlu0 %v906, 96
        %v1341 = vpop.permute.xlu0 %1340
        %1350 = vrot.lane.b32.xlu0 %v907, 96
        %v1351 = vpop.permute.xlu0 %1350
        %1352 = vrot.lane.b32.xlu0 %v909, 96
        %v1353 = vpop.permute.xlu0 %1352
        %1354 = vrot.lane.b32.xlu0 %v911, 96
        %v1355 = vpop.permute.xlu0 %1354
        %1356 = vrot.lane.b32.xlu0 %v913, 96
        %v1357 = vpop.permute.xlu0 %1356
        %1358 = vrot.lane.b32.xlu0 %v915, 96
        %v1359 = vpop.permute.xlu0 %1358
        %1360 = vrot.lane.b32.xlu0 %v917, 96
        %v1361 = vpop.permute.xlu0 %1360
        %1362 = vrot.lane.b32.xlu0 %v919, 96
        %v1363 = vpop.permute.xlu0 %1362
        %1364 = vrot.lane.b32.xlu0 %v921, 96
        %v1365 = vpop.permute.xlu0 %1364
        %v1367 = vsel %vm923, %v1327, 0
        %v1370 = vsel %vm923, %v1329, 0
        %v1373 = vsel %vm923, %v1331, 0
        %v1376 = vsel %vm923, %v1333, 0
        %v1379 = vsel %vm923, %v1335, 0
        %v1382 = vsel %vm923, %v1337, 0
        %v1385 = vsel %vm923, %v1339, 0
        %v1388 = vsel %vm923, %v1341, 0
        %v1391 = vsel %vm923, %v1351, 0
        %v1394 = vsel %vm923, %v1353, 0
        %v1397 = vsel %vm923, %v1355, 0
        %v1400 = vsel %vm923, %v1357, 0
        %v1403 = vsel %vm923, %v1359, 0
        %v1406 = vsel %vm923, %v1361, 0
        %v1409 = vsel %vm923, %v1363, 0
        %v1412 = vsel %vm923, %v1365, 0
        %1414 = vmatprep.subr.bf16.mxu0 0
        %1415 = vmatpush1.bf16.xpose.msra.mxu0 %v1391
        %1416 = vmatprep.subr.bf16.mxu0 0
        %1417 = vmatpush1.bf16.xpose.msra.mxu0 %v1394
        %1418 = vmatprep.subr.bf16.mxu0 0
        %1419 = vmatpush1.bf16.xpose.msra.mxu0 %v1397
        %1420 = vmatprep.subr.bf16.mxu0 0
        %1421 = vmatpush1.bf16.xpose.msra.mxu0 %v1400
        %1422 = vmatprep.subr.bf16.mxu0 0
        %1423 = vmatpush1.bf16.xpose.msra.mxu0 %v1403
        %1424 = vmatprep.subr.bf16.mxu0 0
        %1425 = vmatpush1.bf16.xpose.msra.mxu0 %v1406
        %1426 = vmatprep.subr.bf16.mxu0 0
        %1427 = vmatpush1.bf16.xpose.msra.mxu0 %v1409
        %1428 = vmatprep.subr.bf16.mxu0 0
        %1429 = vmatpush1.bf16.xpose.msra.mxu0 %v1412
        %1430 = vmatprep.subr.bf16.mxu0 0
        %1431 = vmatpush1.bf16.xpose.msra.mxu0 0
        %1432 = vmatprep.subr.bf16.mxu0 0
        %1433 = vmatpush1.bf16.xpose.msra.mxu0 0
        %1434 = vmatprep.subr.bf16.mxu0 0
        %1435 = vmatpush1.bf16.xpose.msra.mxu0 0
        %1436 = vmatprep.subr.bf16.mxu0 0
        %1437 = vmatpush1.bf16.xpose.msra.mxu0 0
        %1438 = vmatprep.subr.bf16.mxu0 0
        %1439 = vmatpush1.bf16.xpose.msra.mxu0 0
        %1440 = vmatprep.subr.bf16.mxu0 0
        %1441 = vmatpush1.bf16.xpose.msra.mxu0 0
        %1442 = vmatprep.subr.bf16.mxu0 0
        %1443 = vmatpush1.bf16.xpose.msra.mxu0 0
        %1444 = vmatprep.subr.bf16.mxu0 0
        %1445 = vmatpush1.bf16.xpose.msra.mxu0 0
        %1446 = vmatprep.mubr.bf16.mxu0 0
        %1447 = vmatmul.mubr.bf16.gmra.mrb[0].mxu0 %v1367
        %v1448 = vpop.f32.mrb[0].mxu0
        %v1449 = vadd.f32 0.0, %v1448
        %v1450 = vpop.f32.mrb[0].mxu0
        %v1451 = vpop.f32.mrb[0].mxu0
        %v1452 = vadd.f32 0.0, %v1451
        %v1453 = vpop.f32.mrb[0].mxu0
        %1454 = vmatprep.mubr.bf16.mxu0 0
        %1455 = vmatmul.mubr.bf16.gmra.mrb[0].mxu0 %v1370
        %v1456 = vpop.f32.mrb[0].mxu0
        %v1457 = vadd.f32 0.0, %v1456
        %v1458 = vpop.f32.mrb[0].mxu0
        %v1459 = vpop.f32.mrb[0].mxu0
        %v1460 = vadd.f32 0.0, %v1459
        %v1461 = vpop.f32.mrb[0].mxu0
        %1462 = vmatprep.mubr.bf16.mxu0 0
        %1463 = vmatmul.mubr.bf16.gmra.mrb[0].mxu0 %v1373
        %v1464 = vpop.f32.mrb[0].mxu0
        %v1465 = vadd.f32 0.0, %v1464
        %v1466 = vpop.f32.mrb[0].mxu0
        %v1467 = vpop.f32.mrb[0].mxu0
        %v1468 = vadd.f32 0.0, %v1467
        %v1469 = vpop.f32.mrb[0].mxu0
        %1470 = vmatprep.mubr.bf16.mxu0 0
        %1471 = vmatmul.mubr.bf16.gmra.mrb[0].mxu0 %v1376
        %v1472 = vpop.f32.mrb[0].mxu0
        %v1473 = vadd.f32 0.0, %v1472
        %v1474 = vpop.f32.mrb[0].mxu0
        %v1475 = vpop.f32.mrb[0].mxu0
        %v1476 = vadd.f32 0.0, %v1475
        %v1477 = vpop.f32.mrb[0].mxu0
        %1478 = vmatprep.mubr.bf16.mxu0 0
        %1479 = vmatmul.mubr.bf16.gmra.mrb[0].mxu0 %v1379
        %v1480 = vpop.f32.mrb[0].mxu0
        %v1481 = vadd.f32 0.0, %v1480
        %v1482 = vpop.f32.mrb[0].mxu0
        %v1483 = vpop.f32.mrb[0].mxu0
        %v1484 = vadd.f32 0.0, %v1483
        %v1485 = vpop.f32.mrb[0].mxu0
        %1486 = vmatprep.mubr.bf16.mxu0 0
        %1487 = vmatmul.mubr.bf16.gmra.mrb[0].mxu0 %v1382
        %v1488 = vpop.f32.mrb[0].mxu0
        %v1489 = vadd.f32 0.0, %v1488
        %v1490 = vpop.f32.mrb[0].mxu0
        %v1491 = vpop.f32.mrb[0].mxu0
        %v1492 = vadd.f32 0.0, %v1491
        %v1493 = vpop.f32.mrb[0].mxu0
        %1494 = vmatprep.mubr.bf16.mxu0 0
        %1495 = vmatmul.mubr.bf16.gmra.mrb[0].mxu0 %v1385
        %v1496 = vpop.f32.mrb[0].mxu0
        %v1497 = vadd.f32 0.0, %v1496
        %v1498 = vpop.f32.mrb[0].mxu0
        %v1499 = vpop.f32.mrb[0].mxu0
        %v1500 = vadd.f32 0.0, %v1499
        %v1501 = vpop.f32.mrb[0].mxu0
        %1502 = vmatprep.mubr.bf16.mxu0 0
        %1503 = vmatmul.mubr.bf16.gmra.mrb[0].mxu0 %v1388
        %v1504 = vpop.f32.mrb[0].mxu0
        %v1505 = vadd.f32 0.0, %v1504
        %v1506 = vpop.f32.mrb[0].mxu0
        %v1507 = vpop.f32.mrb[0].mxu0
        %v1508 = vadd.f32 0.0, %v1507
        %v1509 = vpop.f32.mrb[0].mxu0
        %1510 = vdwg.mxu0
        %1511 = vmax.xlane.f32.xlu0 %v1449
        %v1512 = vpop.xlane.xlu0 %1511
        %1513 = vmax.xlane.f32.xlu0 %v1452
        %v1514 = vpop.xlane.xlu0 %1513
        %1515 = vmax.xlane.f32.xlu0 %v1457
        %v1516 = vpop.xlane.xlu0 %1515
        %1517 = vmax.xlane.f32.xlu0 %v1460
        %v1518 = vpop.xlane.xlu0 %1517
        %1519 = vmax.xlane.f32.xlu0 %v1465
        %v1520 = vpop.xlane.xlu0 %1519
        %1521 = vmax.xlane.f32.xlu0 %v1468
        %v1522 = vpop.xlane.xlu0 %1521
        %1523 = vmax.xlane.f32.xlu0 %v1473
        %v1524 = vpop.xlane.xlu0 %1523
        %1525 = vmax.xlane.f32.xlu0 %v1476
        %v1526 = vpop.xlane.xlu0 %1525
        %1527 = vmax.xlane.f32.xlu0 %v1481
        %v1528 = vpop.xlane.xlu0 %1527
        %1529 = vmax.xlane.f32.xlu0 %v1484
        %v1530 = vpop.xlane.xlu0 %1529
        %1531 = vmax.xlane.f32.xlu0 %v1489
        %v1532 = vpop.xlane.xlu0 %1531
        %1533 = vmax.xlane.f32.xlu0 %v1492
        %v1534 = vpop.xlane.xlu0 %1533
        %1535 = vmax.xlane.f32.xlu0 %v1497
        %v1536 = vpop.xlane.xlu0 %1535
        %1537 = vmax.xlane.f32.xlu0 %v1500
        %v1538 = vpop.xlane.xlu0 %1537
        %1539 = vmax.xlane.f32.xlu0 %v1505
        %v1540 = vpop.xlane.xlu0 %1539
        %1541 = vmax.xlane.f32.xlu0 %v1508
        %v1542 = vpop.xlane.xlu0 %1541
        %v1543 = vsub.f32 %v1449, %v1512
        %v1544 = vsub.f32 %v1452, %v1514
        %v1545 = vsub.f32 %v1457, %v1516
        %v1546 = vsub.f32 %v1460, %v1518
        %v1547 = vsub.f32 %v1465, %v1520
        %v1548 = vsub.f32 %v1468, %v1522
        %v1549 = vsub.f32 %v1473, %v1524
        %v1550 = vsub.f32 %v1476, %v1526
        %v1551 = vsub.f32 %v1481, %v1528
        %v1552 = vsub.f32 %v1484, %v1530
        %v1553 = vsub.f32 %v1489, %v1532
        %v1554 = vsub.f32 %v1492, %v1534
        %v1555 = vsub.f32 %v1497, %v1536
        %v1556 = vsub.f32 %v1500, %v1538
        %v1557 = vsub.f32 %v1505, %v1540
        %v1558 = vsub.f32 %v1508, %v1542
        %v1559 = vmul.f32 %v1543, 1.442695
        %v1560 = vpow.pop %v1559
        %v1561 = vmul.f32 %v1544, 1.442695
        %v1562 = vpow.pop %v1561
        %v1563 = vmul.f32 %v1545, 1.442695
        %v1564 = vpow.pop %v1563
        %v1565 = vmul.f32 %v1546, 1.442695
        %v1566 = vpow.pop %v1565
        %v1567 = vmul.f32 %v1547, 1.442695
        %v1568 = vpow.pop %v1567
        %v1569 = vmul.f32 %v1548, 1.442695
        %v1570 = vpow.pop %v1569
        %v1571 = vmul.f32 %v1549, 1.442695
        %v1572 = vpow.pop %v1571
        %v1573 = vmul.f32 %v1550, 1.442695
        %v1574 = vpow.pop %v1573
        %v1575 = vmul.f32 %v1551, 1.442695
        %v1576 = vpow.pop %v1575
        %v1577 = vmul.f32 %v1552, 1.442695
        %v1578 = vpow.pop %v1577
        %v1579 = vmul.f32 %v1553, 1.442695
        %v1580 = vpow.pop %v1579
        %v1581 = vmul.f32 %v1554, 1.442695
        %v1582 = vpow.pop %v1581
        %v1583 = vmul.f32 %v1555, 1.442695
        %v1584 = vpow.pop %v1583
        %v1585 = vmul.f32 %v1556, 1.442695
        %v1586 = vpow.pop %v1585
        %v1587 = vmul.f32 %v1557, 1.442695
        %v1588 = vpow.pop %v1587
        %v1589 = vmul.f32 %v1558, 1.442695
        %v1590 = vpow.pop %v1589
        %1591 = vadd.xlane.f32.xlu0 %v1560
        %v1592 = vpop.xlane.xlu0 %1591
        %1593 = vadd.xlane.f32.xlu0 %v1562
        %v1594 = vpop.xlane.xlu0 %1593
        %1595 = vadd.xlane.f32.xlu0 %v1564
        %v1596 = vpop.xlane.xlu0 %1595
        %1597 = vadd.xlane.f32.xlu0 %v1566
        %v1598 = vpop.xlane.xlu0 %1597
        %1599 = vadd.xlane.f32.xlu0 %v1568
        %v1600 = vpop.xlane.xlu0 %1599
        %1601 = vadd.xlane.f32.xlu0 %v1570
        %v1602 = vpop.xlane.xlu0 %1601
        %1603 = vadd.xlane.f32.xlu0 %v1572
        %v1604 = vpop.xlane.xlu0 %1603
        %1605 = vadd.xlane.f32.xlu0 %v1574
        %v1606 = vpop.xlane.xlu0 %1605
        %1607 = vadd.xlane.f32.xlu0 %v1576
        %v1608 = vpop.xlane.xlu0 %1607
        %1609 = vadd.xlane.f32.xlu0 %v1578
        %v1610 = vpop.xlane.xlu0 %1609
        %1611 = vadd.xlane.f32.xlu0 %v1580
        %v1612 = vpop.xlane.xlu0 %1611
        %1613 = vadd.xlane.f32.xlu0 %v1582
        %v1614 = vpop.xlane.xlu0 %1613
        %1615 = vadd.xlane.f32.xlu0 %v1584
        %v1616 = vpop.xlane.xlu0 %1615
        %1617 = vadd.xlane.f32.xlu0 %v1586
        %v1618 = vpop.xlane.xlu0 %1617
        %1619 = vadd.xlane.f32.xlu0 %v1588
        %v1620 = vpop.xlane.xlu0 %1619
        %1621 = vadd.xlane.f32.xlu0 %v1590
        %v1622 = vpop.xlane.xlu0 %1621
        %v1623 = vpack.c.bf16 %v1562, %v1560
        %v1624 = vpack.c.bf16 %v1566, %v1564
        %v1625 = vpack.c.bf16 %v1570, %v1568
        %v1626 = vpack.c.bf16 %v1574, %v1572
        %v1627 = vpack.c.bf16 %v1578, %v1576
        %v1628 = vpack.c.bf16 %v1582, %v1580
        %v1629 = vpack.c.bf16 %v1586, %v1584
        %v1630 = vpack.c.bf16 %v1590, %v1588
        %1639 = vrot.lane.b32.xlu0 %v908, 96
        %v1640 = vpop.permute.xlu0 %1639
        %1641 = vrot.lane.b32.xlu0 %v910, 96
        %v1642 = vpop.permute.xlu0 %1641
        %1643 = vrot.lane.b32.xlu0 %v912, 96
        %v1644 = vpop.permute.xlu0 %1643
        %1645 = vrot.lane.b32.xlu0 %v914, 96
        %v1646 = vpop.permute.xlu0 %1645
        %1647 = vrot.lane.b32.xlu0 %v916, 96
        %v1648 = vpop.permute.xlu0 %1647
        %1649 = vrot.lane.b32.xlu0 %v918, 96
        %v1650 = vpop.permute.xlu0 %1649
        %1651 = vrot.lane.b32.xlu0 %v920, 96
        %v1652 = vpop.permute.xlu0 %1651
        %1653 = vrot.lane.b32.xlu0 %v922, 96
        %v1654 = vpop.permute.xlu0 %1653
        %1663 = vmatprep.subr.bf16.mxu0 0
        %1664 = vmatpush1.bf16.msra.mxu0 %v1640
        %1665 = vmatprep.subr.bf16.mxu0 0
        %1666 = vmatpush1.bf16.msra.mxu0 %v1642
        %1667 = vmatprep.subr.bf16.mxu0 0
        %1668 = vmatpush1.bf16.msra.mxu0 %v1644
        %1669 = vmatprep.subr.bf16.mxu0 0
        %1670 = vmatpush1.bf16.msra.mxu0 %v1646
        %1671 = vmatprep.subr.bf16.mxu0 0
        %1672 = vmatpush1.bf16.msra.mxu0 %v1648
        %1673 = vmatprep.subr.bf16.mxu0 0
        %1674 = vmatpush1.bf16.msra.mxu0 %v1650
        %1675 = vmatprep.subr.bf16.mxu0 0
        %1676 = vmatpush1.bf16.msra.mxu0 %v1652
        %1677 = vmatprep.subr.bf16.mxu0 0
        %1678 = vmatpush1.bf16.msra.mxu0 %v1654
        %1679 = vmatprep.subr.bf16.mxu0 0
        %1680 = vmatpush1.bf16.msra.mxu0 0
        %1681 = vmatprep.subr.bf16.mxu0 0
        %1682 = vmatpush1.bf16.msra.mxu0 0
        %1683 = vmatprep.subr.bf16.mxu0 0
        %1684 = vmatpush1.bf16.msra.mxu0 0
        %1685 = vmatprep.subr.bf16.mxu0 0
        %1686 = vmatpush1.bf16.msra.mxu0 0
        %1687 = vmatprep.subr.bf16.mxu0 0
        %1688 = vmatpush1.bf16.msra.mxu0 0
        %1689 = vmatprep.subr.bf16.mxu0 0
        %1690 = vmatpush1.bf16.msra.mxu0 0
        %1691 = vmatprep.subr.bf16.mxu0 0
        %1692 = vmatpush1.bf16.msra.mxu0 0
        %1693 = vmatprep.subr.bf16.mxu0 0
        %1694 = vmatpush1.bf16.msra.mxu0 0
        %1695 = vmatprep.mubr.bf16.mxu0 0
        %1696 = vmatmul.mubr.bf16.gmra.mrb[0].mxu0 %v1623
        %v1697 = vpop.f32.mrb[0].mxu0
        %v1698 = vadd.f32 0.0, %v1697
        %v1699 = vpop.f32.mrb[0].mxu0
        %v1700 = vpop.f32.mrb[0].mxu0
        %v1701 = vadd.f32 0.0, %v1700
        %v1702 = vpop.f32.mrb[0].mxu0
        %1703 = vmatprep.mubr.bf16.mxu0 0
        %1704 = vmatmul.mubr.bf16.gmra.mrb[0].mxu0 %v1624
        %v1705 = vpop.f32.mrb[0].mxu0
        %v1706 = vadd.f32 0.0, %v1705
        %v1707 = vpop.f32.mrb[0].mxu0
        %v1708 = vpop.f32.mrb[0].mxu0
        %v1709 = vadd.f32 0.0, %v1708
        %v1710 = vpop.f32.mrb[0].mxu0
        %1711 = vmatprep.mubr.bf16.mxu0 0
        %1712 = vmatmul.mubr.bf16.gmra.mrb[0].mxu0 %v1625
        %v1713 = vpop.f32.mrb[0].mxu0
        %v1714 = vadd.f32 0.0, %v1713
        %v1715 = vpop.f32.mrb[0].mxu0
        %v1716 = vpop.f32.mrb[0].mxu0
        %v1717 = vadd.f32 0.0, %v1716
        %v1718 = vpop.f32.mrb[0].mxu0
        %1719 = vmatprep.mubr.bf16.mxu0 0
        %1720 = vmatmul.mubr.bf16.gmra.mrb[0].mxu0 %v1626
        %v1721 = vpop.f32.mrb[0].mxu0
        %v1722 = vadd.f32 0.0, %v1721
        %v1723 = vpop.f32.mrb[0].mxu0
        %v1724 = vpop.f32.mrb[0].mxu0
        %v1725 = vadd.f32 0.0, %v1724
        %v1726 = vpop.f32.mrb[0].mxu0
        %1727 = vmatprep.mubr.bf16.mxu0 0
        %1728 = vmatmul.mubr.bf16.gmra.mrb[0].mxu0 %v1627
        %v1729 = vpop.f32.mrb[0].mxu0
        %v1730 = vadd.f32 0.0, %v1729
        %v1731 = vpop.f32.mrb[0].mxu0
        %v1732 = vpop.f32.mrb[0].mxu0
        %v1733 = vadd.f32 0.0, %v1732
        %v1734 = vpop.f32.mrb[0].mxu0
        %1735 = vmatprep.mubr.bf16.mxu0 0
        %1736 = vmatmul.mubr.bf16.gmra.mrb[0].mxu0 %v1628
        %v1737 = vpop.f32.mrb[0].mxu0
        %v1738 = vadd.f32 0.0, %v1737
        %v1739 = vpop.f32.mrb[0].mxu0
        %v1740 = vpop.f32.mrb[0].mxu0
        %v1741 = vadd.f32 0.0, %v1740
        %v1742 = vpop.f32.mrb[0].mxu0
        %1743 = vmatprep.mubr.bf16.mxu0 0
        %1744 = vmatmul.mubr.bf16.gmra.mrb[0].mxu0 %v1629
        %v1745 = vpop.f32.mrb[0].mxu0
        %v1746 = vadd.f32 0.0, %v1745
        %v1747 = vpop.f32.mrb[0].mxu0
        %v1748 = vpop.f32.mrb[0].mxu0
        %v1749 = vadd.f32 0.0, %v1748
        %v1750 = vpop.f32.mrb[0].mxu0
        %1751 = vmatprep.mubr.bf16.mxu0 0
        %1752 = vmatmul.mubr.bf16.gmra.mrb[0].mxu0 %v1630
        %v1753 = vpop.f32.mrb[0].mxu0
        %v1754 = vadd.f32 0.0, %v1753
        %v1755 = vpop.f32.mrb[0].mxu0
        %v1756 = vpop.f32.mrb[0].mxu0
        %v1757 = vadd.f32 0.0, %v1756
        %v1758 = vpop.f32.mrb[0].mxu0
        %1759 = vdwg.mxu0
        %v1760 = vrcp.pop %v1592
        %v1761 = vrcp.pop %v1594
        %v1762 = vrcp.pop %v1596
        %v1763 = vrcp.pop %v1598
        %v1764 = vrcp.pop %v1600
        %v1765 = vrcp.pop %v1602
        %v1766 = vrcp.pop %v1604
        %v1767 = vrcp.pop %v1606
        %v1768 = vrcp.pop %v1608
        %v1769 = vrcp.pop %v1610
        %v1770 = vrcp.pop %v1612
        %v1771 = vrcp.pop %v1614
        %v1772 = vrcp.pop %v1616
        %v1773 = vrcp.pop %v1618
        %v1774 = vrcp.pop %v1620
        %v1775 = vrcp.pop %v1622
        %v1776 = vmul.f32 %v1698, %v1760
        %v1777 = vmul.f32 %v1701, %v1761
        %v1778 = vmul.f32 %v1706, %v1762
        %v1779 = vmul.f32 %v1709, %v1763
        %v1780 = vmul.f32 %v1714, %v1764
        %v1781 = vmul.f32 %v1717, %v1765
        %v1782 = vmul.f32 %v1722, %v1766
        %v1783 = vmul.f32 %v1725, %v1767
        %v1784 = vmul.f32 %v1730, %v1768
        %v1785 = vmul.f32 %v1733, %v1769
        %v1786 = vmul.f32 %v1738, %v1770
        %v1787 = vmul.f32 %v1741, %v1771
        %v1788 = vmul.f32 %v1746, %v1772
        %v1789 = vmul.f32 %v1749, %v1773
        %v1790 = vmul.f32 %v1754, %v1774
        %v1791 = vmul.f32 %v1757, %v1775
        %1792 = vrot.lane.b32.xlu0 %v899, 64
        %v1793 = vpop.permute.xlu0 %1792
        %1794 = vrot.lane.b32.xlu0 %v900, 64
        %v1795 = vpop.permute.xlu0 %1794
        %1796 = vrot.lane.b32.xlu0 %v901, 64
        %v1797 = vpop.permute.xlu0 %1796
        %1798 = vrot.lane.b32.xlu0 %v902, 64
        %v1799 = vpop.permute.xlu0 %1798
        %1800 = vrot.lane.b32.xlu0 %v903, 64
        %v1801 = vpop.permute.xlu0 %1800
        %1802 = vrot.lane.b32.xlu0 %v904, 64
        %v1803 = vpop.permute.xlu0 %1802
        %1804 = vrot.lane.b32.xlu0 %v905, 64
        %v1805 = vpop.permute.xlu0 %1804
        %1806 = vrot.lane.b32.xlu0 %v906, 64
        %v1807 = vpop.permute.xlu0 %1806
        %1808 = vrot.lane.b32.xlu0 %v907, 64
        %v1809 = vpop.permute.xlu0 %1808
        %1810 = vrot.lane.b32.xlu0 %v909, 64
        %v1811 = vpop.permute.xlu0 %1810
        %1812 = vrot.lane.b32.xlu0 %v911, 64
        %v1813 = vpop.permute.xlu0 %1812
        %1814 = vrot.lane.b32.xlu0 %v913, 64
        %v1815 = vpop.permute.xlu0 %1814
        %1816 = vrot.lane.b32.xlu0 %v915, 64
        %v1817 = vpop.permute.xlu0 %1816
        %1818 = vrot.lane.b32.xlu0 %v917, 64
        %v1819 = vpop.permute.xlu0 %1818
        %1820 = vrot.lane.b32.xlu0 %v919, 64
        %v1821 = vpop.permute.xlu0 %1820
        %1822 = vrot.lane.b32.xlu0 %v921, 64
        %v1823 = vpop.permute.xlu0 %1822
        %v1825 = vsel %vm923, %v1793, 0
        %v1828 = vsel %vm923, %v1795, 0
        %v1831 = vsel %vm923, %v1797, 0
        %v1834 = vsel %vm923, %v1799, 0
        %v1837 = vsel %vm923, %v1801, 0
        %v1840 = vsel %vm923, %v1803, 0
        %v1843 = vsel %vm923, %v1805, 0
        %v1846 = vsel %vm923, %v1807, 0
        %v1849 = vsel %vm923, %v1809, 0
        %v1852 = vsel %vm923, %v1811, 0
        %v1855 = vsel %vm923, %v1813, 0
        %v1858 = vsel %vm923, %v1815, 0
        %v1861 = vsel %vm923, %v1817, 0
        %v1864 = vsel %vm923, %v1819, 0
        %v1867 = vsel %vm923, %v1821, 0
        %v1870 = vsel %vm923, %v1823, 0
        %1872 = vmatprep.subr.bf16.mxu0 0
        %1873 = vmatpush1.bf16.xpose.msra.mxu0 %v1849
        %1874 = vmatprep.subr.bf16.mxu0 0
        %1875 = vmatpush1.bf16.xpose.msra.mxu0 %v1852
        %1876 = vmatprep.subr.bf16.mxu0 0
        %1877 = vmatpush1.bf16.xpose.msra.mxu0 %v1855
        %1878 = vmatprep.subr.bf16.mxu0 0
        %1879 = vmatpush1.bf16.xpose.msra.mxu0 %v1858
        %1880 = vmatprep.subr.bf16.mxu0 0
        %1881 = vmatpush1.bf16.xpose.msra.mxu0 %v1861
        %1882 = vmatprep.subr.bf16.mxu0 0
        %1883 = vmatpush1.bf16.xpose.msra.mxu0 %v1864
        %1884 = vmatprep.subr.bf16.mxu0 0
        %1885 = vmatpush1.bf16.xpose.msra.mxu0 %v1867
        %1886 = vmatprep.subr.bf16.mxu0 0
        %1887 = vmatpush1.bf16.xpose.msra.mxu0 %v1870
        %1888 = vmatprep.subr.bf16.mxu0 0
        %1889 = vmatpush1.bf16.xpose.msra.mxu0 0
        %1890 = vmatprep.subr.bf16.mxu0 0
        %1891 = vmatpush1.bf16.xpose.msra.mxu0 0
        %1892 = vmatprep.subr.bf16.mxu0 0
        %1893 = vmatpush1.bf16.xpose.msra.mxu0 0
        %1894 = vmatprep.subr.bf16.mxu0 0
        %1895 = vmatpush1.bf16.xpose.msra.mxu0 0
        %1896 = vmatprep.subr.bf16.mxu0 0
        %1897 = vmatpush1.bf16.xpose.msra.mxu0 0
        %1898 = vmatprep.subr.bf16.mxu0 0
        %1899 = vmatpush1.bf16.xpose.msra.mxu0 0
        %1900 = vmatprep.subr.bf16.mxu0 0
        %1901 = vmatpush1.bf16.xpose.msra.mxu0 0
        %1902 = vmatprep.subr.bf16.mxu0 0
        %1903 = vmatpush1.bf16.xpose.msra.mxu0 0
        %1904 = vmatprep.mubr.bf16.mxu0 0
        %1905 = vmatmul.mubr.bf16.gmra.mrb[0].mxu0 %v1825
        %v1906 = vpop.f32.mrb[0].mxu0
        %v1907 = vadd.f32 0.0, %v1906
        %v1908 = vpop.f32.mrb[0].mxu0
        %v1909 = vpop.f32.mrb[0].mxu0
        %v1910 = vadd.f32 0.0, %v1909
        %v1911 = vpop.f32.mrb[0].mxu0
        %1912 = vmatprep.mubr.bf16.mxu0 0
        %1913 = vmatmul.mubr.bf16.gmra.mrb[0].mxu0 %v1828
        %v1914 = vpop.f32.mrb[0].mxu0
        %v1915 = vadd.f32 0.0, %v1914
        %v1916 = vpop.f32.mrb[0].mxu0
        %v1917 = vpop.f32.mrb[0].mxu0
        %v1918 = vadd.f32 0.0, %v1917
        %v1919 = vpop.f32.mrb[0].mxu0
        %1920 = vmatprep.mubr.bf16.mxu0 0
        %1921 = vmatmul.mubr.bf16.gmra.mrb[0].mxu0 %v1831
        %v1922 = vpop.f32.mrb[0].mxu0
        %v1923 = vadd.f32 0.0, %v1922
        %v1924 = vpop.f32.mrb[0].mxu0
        %v1925 = vpop.f32.mrb[0].mxu0
        %v1926 = vadd.f32 0.0, %v1925
        %v1927 = vpop.f32.mrb[0].mxu0
        %1928 = vmatprep.mubr.bf16.mxu0 0
        %1929 = vmatmul.mubr.bf16.gmra.mrb[0].mxu0 %v1834
        %v1930 = vpop.f32.mrb[0].mxu0
        %v1931 = vadd.f32 0.0, %v1930
        %v1932 = vpop.f32.mrb[0].mxu0
        %v1933 = vpop.f32.mrb[0].mxu0
        %v1934 = vadd.f32 0.0, %v1933
        %v1935 = vpop.f32.mrb[0].mxu0
        %1936 = vmatprep.mubr.bf16.mxu0 0
        %1937 = vmatmul.mubr.bf16.gmra.mrb[0].mxu0 %v1837
        %v1938 = vpop.f32.mrb[0].mxu0
        %v1939 = vadd.f32 0.0, %v1938
        %v1940 = vpop.f32.mrb[0].mxu0
        %v1941 = vpop.f32.mrb[0].mxu0
        %v1942 = vadd.f32 0.0, %v1941
        %v1943 = vpop.f32.mrb[0].mxu0
        %1944 = vmatprep.mubr.bf16.mxu0 0
        %1945 = vmatmul.mubr.bf16.gmra.mrb[0].mxu0 %v1840
        %v1946 = vpop.f32.mrb[0].mxu0
        %v1947 = vadd.f32 0.0, %v1946
        %v1948 = vpop.f32.mrb[0].mxu0
        %v1949 = vpop.f32.mrb[0].mxu0
        %v1950 = vadd.f32 0.0, %v1949
        %v1951 = vpop.f32.mrb[0].mxu0
        %1952 = vmatprep.mubr.bf16.mxu0 0
        %1953 = vmatmul.mubr.bf16.gmra.mrb[0].mxu0 %v1843
        %v1954 = vpop.f32.mrb[0].mxu0
        %v1955 = vadd.f32 0.0, %v1954
        %v1956 = vpop.f32.mrb[0].mxu0
        %v1957 = vpop.f32.mrb[0].mxu0
        %v1958 = vadd.f32 0.0, %v1957
        %v1959 = vpop.f32.mrb[0].mxu0
        %1960 = vmatprep.mubr.bf16.mxu0 0
        %1961 = vmatmul.mubr.bf16.gmra.mrb[0].mxu0 %v1846
        %v1962 = vpop.f32.mrb[0].mxu0
        %v1963 = vadd.f32 0.0, %v1962
        %v1964 = vpop.f32.mrb[0].mxu0
        %v1965 = vpop.f32.mrb[0].mxu0
        %v1966 = vadd.f32 0.0, %v1965
        %v1967 = vpop.f32.mrb[0].mxu0
        %1968 = vdwg.mxu0
        %1969 = vmax.xlane.f32.xlu0 %v1907
        %v1970 = vpop.xlane.xlu0 %1969
        %1971 = vmax.xlane.f32.xlu0 %v1910
        %v1972 = vpop.xlane.xlu0 %1971
        %1973 = vmax.xlane.f32.xlu0 %v1915
        %v1974 = vpop.xlane.xlu0 %1973
        %1975 = vmax.xlane.f32.xlu0 %v1918
        %v1976 = vpop.xlane.xlu0 %1975
        %1977 = vmax.xlane.f32.xlu0 %v1923
        %v1978 = vpop.xlane.xlu0 %1977
        %1979 = vmax.xlane.f32.xlu0 %v1926
        %v1980 = vpop.xlane.xlu0 %1979
        %1981 = vmax.xlane.f32.xlu0 %v1931
        %v1982 = vpop.xlane.xlu0 %1981
        %1983 = vmax.xlane.f32.xlu0 %v1934
        %v1984 = vpop.xlane.xlu0 %1983
        %1985 = vmax.xlane.f32.xlu0 %v1939
        %v1986 = vpop.xlane.xlu0 %1985
        %1987 = vmax.xlane.f32.xlu0 %v1942
        %v1988 = vpop.xlane.xlu0 %1987
        %1989 = vmax.xlane.f32.xlu0 %v1947
        %v1990 = vpop.xlane.xlu0 %1989
        %1991 = vmax.xlane.f32.xlu0 %v1950
        %v1992 = vpop.xlane.xlu0 %1991
        %1993 = vmax.xlane.f32.xlu0 %v1955
        %v1994 = vpop.xlane.xlu0 %1993
        %1995 = vmax.xlane.f32.xlu0 %v1958
        %v1996 = vpop.xlane.xlu0 %1995
        %1997 = vmax.xlane.f32.xlu0 %v1963
        %v1998 = vpop.xlane.xlu0 %1997
        %1999 = vmax.xlane.f32.xlu0 %v1966
        %v2000 = vpop.xlane.xlu0 %1999
        %v2001 = vsub.f32 %v1907, %v1970
        %v2002 = vsub.f32 %v1910, %v1972
        %v2003 = vsub.f32 %v1915, %v1974
        %v2004 = vsub.f32 %v1918, %v1976
        %v2005 = vsub.f32 %v1923, %v1978
        %v2006 = vsub.f32 %v1926, %v1980
        %v2007 = vsub.f32 %v1931, %v1982
        %v2008 = vsub.f32 %v1934, %v1984
        %v2009 = vsub.f32 %v1939, %v1986
        %v2010 = vsub.f32 %v1942, %v1988
        %v2011 = vsub.f32 %v1947, %v1990
        %v2012 = vsub.f32 %v1950, %v1992
        %v2013 = vsub.f32 %v1955, %v1994
        %v2014 = vsub.f32 %v1958, %v1996
        %v2015 = vsub.f32 %v1963, %v1998
        %v2016 = vsub.f32 %v1966, %v2000
        %v2017 = vmul.f32 %v2001, 1.442695
        %v2018 = vpow.pop %v2017
        %v2019 = vmul.f32 %v2002, 1.442695
        %v2020 = vpow.pop %v2019
        %v2021 = vmul.f32 %v2003, 1.442695
        %v2022 = vpow.pop %v2021
        %v2023 = vmul.f32 %v2004, 1.442695
        %v2024 = vpow.pop %v2023
        %v2025 = vmul.f32 %v2005, 1.442695
        %v2026 = vpow.pop %v2025
        %v2027 = vmul.f32 %v2006, 1.442695
        %v2028 = vpow.pop %v2027
        %v2029 = vmul.f32 %v2007, 1.442695
        %v2030 = vpow.pop %v2029
        %v2031 = vmul.f32 %v2008, 1.442695
        %v2032 = vpow.pop %v2031
        %v2033 = vmul.f32 %v2009, 1.442695
        %v2034 = vpow.pop %v2033
        %v2035 = vmul.f32 %v2010, 1.442695
        %v2036 = vpow.pop %v2035
        %v2037 = vmul.f32 %v2011, 1.442695
        %v2038 = vpow.pop %v2037
        %v2039 = vmul.f32 %v2012, 1.442695
        %v2040 = vpow.pop %v2039
        %v2041 = vmul.f32 %v2013, 1.442695
        %v2042 = vpow.pop %v2041
        %v2043 = vmul.f32 %v2014, 1.442695
        %v2044 = vpow.pop %v2043
        %v2045 = vmul.f32 %v2015, 1.442695
        %v2046 = vpow.pop %v2045
        %v2047 = vmul.f32 %v2016, 1.442695
        %v2048 = vpow.pop %v2047
        %2049 = vadd.xlane.f32.xlu0 %v2018
        %v2050 = vpop.xlane.xlu0 %2049
        %2051 = vadd.xlane.f32.xlu0 %v2020
        %v2052 = vpop.xlane.xlu0 %2051
        %2053 = vadd.xlane.f32.xlu0 %v2022
        %v2054 = vpop.xlane.xlu0 %2053
        %2055 = vadd.xlane.f32.xlu0 %v2024
        %v2056 = vpop.xlane.xlu0 %2055
        %2057 = vadd.xlane.f32.xlu0 %v2026
        %v2058 = vpop.xlane.xlu0 %2057
        %2059 = vadd.xlane.f32.xlu0 %v2028
        %v2060 = vpop.xlane.xlu0 %2059
        %2061 = vadd.xlane.f32.xlu0 %v2030
        %v2062 = vpop.xlane.xlu0 %2061
        %2063 = vadd.xlane.f32.xlu0 %v2032
        %v2064 = vpop.xlane.xlu0 %2063
        %2065 = vadd.xlane.f32.xlu0 %v2034
        %v2066 = vpop.xlane.xlu0 %2065
        %2067 = vadd.xlane.f32.xlu0 %v2036
        %v2068 = vpop.xlane.xlu0 %2067
        %2069 = vadd.xlane.f32.xlu0 %v2038
        %v2070 = vpop.xlane.xlu0 %2069
        %2071 = vadd.xlane.f32.xlu0 %v2040
        %v2072 = vpop.xlane.xlu0 %2071
        %2073 = vadd.xlane.f32.xlu0 %v2042
        %v2074 = vpop.xlane.xlu0 %2073
        %2075 = vadd.xlane.f32.xlu0 %v2044
        %v2076 = vpop.xlane.xlu0 %2075
        %2077 = vadd.xlane.f32.xlu0 %v2046
        %v2078 = vpop.xlane.xlu0 %2077
        %2079 = vadd.xlane.f32.xlu0 %v2048
        %v2080 = vpop.xlane.xlu0 %2079
        %v2081 = vpack.c.bf16 %v2020, %v2018
        %v2082 = vpack.c.bf16 %v2024, %v2022
        %v2083 = vpack.c.bf16 %v2028, %v2026
        %v2084 = vpack.c.bf16 %v2032, %v2030
        %v2085 = vpack.c.bf16 %v2036, %v2034
        %v2086 = vpack.c.bf16 %v2040, %v2038
        %v2087 = vpack.c.bf16 %v2044, %v2042
        %v2088 = vpack.c.bf16 %v2048, %v2046
        %2089 = vrot.lane.b32.xlu0 %v908, 64
        %v2090 = vpop.permute.xlu0 %2089
        %2091 = vrot.lane.b32.xlu0 %v910, 64
        %v2092 = vpop.permute.xlu0 %2091
        %2093 = vrot.lane.b32.xlu0 %v912, 64
        %v2094 = vpop.permute.xlu0 %2093
        %2095 = vrot.lane.b32.xlu0 %v914, 64
        %v2096 = vpop.permute.xlu0 %2095
        %2097 = vrot.lane.b32.xlu0 %v916, 64
        %v2098 = vpop.permute.xlu0 %2097
        %2099 = vrot.lane.b32.xlu0 %v918, 64
        %v2100 = vpop.permute.xlu0 %2099
        %2101 = vrot.lane.b32.xlu0 %v920, 64
        %v2102 = vpop.permute.xlu0 %2101
        %2103 = vrot.lane.b32.xlu0 %v922, 64
        %v2104 = vpop.permute.xlu0 %2103
        %2113 = vmatprep.subr.bf16.mxu0 0
        %2114 = vmatpush1.bf16.msra.mxu0 %v2090
        %2115 = vmatprep.subr.bf16.mxu0 0
        %2116 = vmatpush1.bf16.msra.mxu0 %v2092
        %2117 = vmatprep.subr.bf16.mxu0 0
        %2118 = vmatpush1.bf16.msra.mxu0 %v2094
        %2119 = vmatprep.subr.bf16.mxu0 0
        %2120 = vmatpush1.bf16.msra.mxu0 %v2096
        %2121 = vmatprep.subr.bf16.mxu0 0
        %2122 = vmatpush1.bf16.msra.mxu0 %v2098
        %2123 = vmatprep.subr.bf16.mxu0 0
        %2124 = vmatpush1.bf16.msra.mxu0 %v2100
        %2125 = vmatprep.subr.bf16.mxu0 0
        %2126 = vmatpush1.bf16.msra.mxu0 %v2102
        %2127 = vmatprep.subr.bf16.mxu0 0
        %2128 = vmatpush1.bf16.msra.mxu0 %v2104
        %2129 = vmatprep.subr.bf16.mxu0 0
        %2130 = vmatpush1.bf16.msra.mxu0 0
        %2131 = vmatprep.subr.bf16.mxu0 0
        %2132 = vmatpush1.bf16.msra.mxu0 0
        %2133 = vmatprep.subr.bf16.mxu0 0
        %2134 = vmatpush1.bf16.msra.mxu0 0
        %2135 = vmatprep.subr.bf16.mxu0 0
        %2136 = vmatpush1.bf16.msra.mxu0 0
        %2137 = vmatprep.subr.bf16.mxu0 0
        %2138 = vmatpush1.bf16.msra.mxu0 0
        %2139 = vmatprep.subr.bf16.mxu0 0
        %2140 = vmatpush1.bf16.msra.mxu0 0
        %2141 = vmatprep.subr.bf16.mxu0 0
        %2142 = vmatpush1.bf16.msra.mxu0 0
        %2143 = vmatprep.subr.bf16.mxu0 0
        %2144 = vmatpush1.bf16.msra.mxu0 0
        %2145 = vmatprep.mubr.bf16.mxu0 0
        %2146 = vmatmul.mubr.bf16.gmra.mrb[0].mxu0 %v2081
        %v2147 = vpop.f32.mrb[0].mxu0
        %v2148 = vadd.f32 0.0, %v2147
        %v2149 = vpop.f32.mrb[0].mxu0
        %v2150 = vpop.f32.mrb[0].mxu0
        %v2151 = vadd.f32 0.0, %v2150
        %v2152 = vpop.f32.mrb[0].mxu0
        %2153 = vmatprep.mubr.bf16.mxu0 0
        %2154 = vmatmul.mubr.bf16.gmra.mrb[0].mxu0 %v2082
        %v2155 = vpop.f32.mrb[0].mxu0
        %v2156 = vadd.f32 0.0, %v2155
        %v2157 = vpop.f32.mrb[0].mxu0
        %v2158 = vpop.f32.mrb[0].mxu0
        %v2159 = vadd.f32 0.0, %v2158
        %v2160 = vpop.f32.mrb[0].mxu0
        %2161 = vmatprep.mubr.bf16.mxu0 0
        %2162 = vmatmul.mubr.bf16.gmra.mrb[0].mxu0 %v2083
        %v2163 = vpop.f32.mrb[0].mxu0
        %v2164 = vadd.f32 0.0, %v2163
        %v2165 = vpop.f32.mrb[0].mxu0
        %v2166 = vpop.f32.mrb[0].mxu0
        %v2167 = vadd.f32 0.0, %v2166
        %v2168 = vpop.f32.mrb[0].mxu0
        %2169 = vmatprep.mubr.bf16.mxu0 0
        %2170 = vmatmul.mubr.bf16.gmra.mrb[0].mxu0 %v2084
        %v2171 = vpop.f32.mrb[0].mxu0
        %v2172 = vadd.f32 0.0, %v2171
        %v2173 = vpop.f32.mrb[0].mxu0
        %v2174 = vpop.f32.mrb[0].mxu0
        %v2175 = vadd.f32 0.0, %v2174
        %v2176 = vpop.f32.mrb[0].mxu0
        %2177 = vmatprep.mubr.bf16.mxu0 0
        %2178 = vmatmul.mubr.bf16.gmra.mrb[0].mxu0 %v2085
        %v2179 = vpop.f32.mrb[0].mxu0
        %v2180 = vadd.f32 0.0, %v2179
        %v2181 = vpop.f32.mrb[0].mxu0
        %v2182 = vpop.f32.mrb[0].mxu0
        %v2183 = vadd.f32 0.0, %v2182
        %v2184 = vpop.f32.mrb[0].mxu0
        %2185 = vmatprep.mubr.bf16.mxu0 0
        %2186 = vmatmul.mubr.bf16.gmra.mrb[0].mxu0 %v2086
        %v2187 = vpop.f32.mrb[0].mxu0
        %v2188 = vadd.f32 0.0, %v2187
        %v2189 = vpop.f32.mrb[0].mxu0
        %v2190 = vpop.f32.mrb[0].mxu0
        %v2191 = vadd.f32 0.0, %v2190
        %v2192 = vpop.f32.mrb[0].mxu0
        %2193 = vmatprep.mubr.bf16.mxu0 0
        %2194 = vmatmul.mubr.bf16.gmra.mrb[0].mxu0 %v2087
        %v2195 = vpop.f32.mrb[0].mxu0
        %v2196 = vadd.f32 0.0, %v2195
        %v2197 = vpop.f32.mrb[0].mxu0
        %v2198 = vpop.f32.mrb[0].mxu0
        %v2199 = vadd.f32 0.0, %v2198
        %v2200 = vpop.f32.mrb[0].mxu0
        %2201 = vmatprep.mubr.bf16.mxu0 0
        %2202 = vmatmul.mubr.bf16.gmra.mrb[0].mxu0 %v2088
        %v2203 = vpop.f32.mrb[0].mxu0
        %v2204 = vadd.f32 0.0, %v2203
        %v2205 = vpop.f32.mrb[0].mxu0
        %v2206 = vpop.f32.mrb[0].mxu0
        %v2207 = vadd.f32 0.0, %v2206
        %v2208 = vpop.f32.mrb[0].mxu0
        %2209 = vdwg.mxu0
        %v2210 = vrcp.pop %v2050
        %v2211 = vrcp.pop %v2052
        %v2212 = vrcp.pop %v2054
        %v2213 = vrcp.pop %v2056
        %v2214 = vrcp.pop %v2058
        %v2215 = vrcp.pop %v2060
        %v2216 = vrcp.pop %v2062
        %v2217 = vrcp.pop %v2064
        %v2218 = vrcp.pop %v2066
        %v2219 = vrcp.pop %v2068
        %v2220 = vrcp.pop %v2070
        %v2221 = vrcp.pop %v2072
        %v2222 = vrcp.pop %v2074
        %v2223 = vrcp.pop %v2076
        %v2224 = vrcp.pop %v2078
        %v2225 = vrcp.pop %v2080
        %v2226 = vmul.f32 %v2148, %v2210
        %v2227 = vmul.f32 %v2151, %v2211
        %v2228 = vmul.f32 %v2156, %v2212
        %v2229 = vmul.f32 %v2159, %v2213
        %v2230 = vmul.f32 %v2164, %v2214
        %v2231 = vmul.f32 %v2167, %v2215
        %v2232 = vmul.f32 %v2172, %v2216
        %v2233 = vmul.f32 %v2175, %v2217
        %v2234 = vmul.f32 %v2180, %v2218
        %v2235 = vmul.f32 %v2183, %v2219
        %v2236 = vmul.f32 %v2188, %v2220
        %v2237 = vmul.f32 %v2191, %v2221
        %v2238 = vmul.f32 %v2196, %v2222
        %v2239 = vmul.f32 %v2199, %v2223
        %v2240 = vmul.f32 %v2204, %v2224
        %v2241 = vmul.f32 %v2207, %v2225
        %2242 = vrot.lane.b32.xlu0 %v899, 32
        %v2243 = vpop.permute.xlu0 %2242
        %2244 = vrot.lane.b32.xlu0 %v900, 32
        %v2245 = vpop.permute.xlu0 %2244
        %2246 = vrot.lane.b32.xlu0 %v901, 32
        %v2247 = vpop.permute.xlu0 %2246
        %2248 = vrot.lane.b32.xlu0 %v902, 32
        %v2249 = vpop.permute.xlu0 %2248
        %2250 = vrot.lane.b32.xlu0 %v903, 32
        %v2251 = vpop.permute.xlu0 %2250
        %2252 = vrot.lane.b32.xlu0 %v904, 32
        %v2253 = vpop.permute.xlu0 %2252
        %2254 = vrot.lane.b32.xlu0 %v905, 32
        %v2255 = vpop.permute.xlu0 %2254
        %2256 = vrot.lane.b32.xlu0 %v906, 32
        %v2257 = vpop.permute.xlu0 %2256
        %2258 = vrot.lane.b32.xlu0 %v907, 32
        %v2259 = vpop.permute.xlu0 %2258
        %2260 = vrot.lane.b32.xlu0 %v909, 32
        %v2261 = vpop.permute.xlu0 %2260
        %2262 = vrot.lane.b32.xlu0 %v911, 32
        %v2263 = vpop.permute.xlu0 %2262
        %2264 = vrot.lane.b32.xlu0 %v913, 32
        %v2265 = vpop.permute.xlu0 %2264
        %2266 = vrot.lane.b32.xlu0 %v915, 32
        %v2267 = vpop.permute.xlu0 %2266
        %2268 = vrot.lane.b32.xlu0 %v917, 32
        %v2269 = vpop.permute.xlu0 %2268
        %2270 = vrot.lane.b32.xlu0 %v919, 32
        %v2271 = vpop.permute.xlu0 %2270
        %2272 = vrot.lane.b32.xlu0 %v921, 32
        %v2273 = vpop.permute.xlu0 %2272
        %v2275 = vsel %vm923, %v2243, 0
        %v2278 = vsel %vm923, %v2245, 0
        %v2281 = vsel %vm923, %v2247, 0
        %v2284 = vsel %vm923, %v2249, 0
        %v2287 = vsel %vm923, %v2251, 0
        %v2290 = vsel %vm923, %v2253, 0
        %v2293 = vsel %vm923, %v2255, 0
        %v2296 = vsel %vm923, %v2257, 0
        %v2299 = vsel %vm923, %v2259, 0
        %v2302 = vsel %vm923, %v2261, 0
        %v2305 = vsel %vm923, %v2263, 0
        %v2308 = vsel %vm923, %v2265, 0
        %v2311 = vsel %vm923, %v2267, 0
        %v2314 = vsel %vm923, %v2269, 0
        %v2317 = vsel %vm923, %v2271, 0
        %v2320 = vsel %vm923, %v2273, 0
        %2322 = vmatprep.subr.bf16.mxu0 0
        %2323 = vmatpush1.bf16.xpose.msra.mxu0 %v2299
        %2324 = vmatprep.subr.bf16.mxu0 0
        %2325 = vmatpush1.bf16.xpose.msra.mxu0 %v2302
        %2326 = vmatprep.subr.bf16.mxu0 0
        %2327 = vmatpush1.bf16.xpose.msra.mxu0 %v2305
        %2328 = vmatprep.subr.bf16.mxu0 0
        %2329 = vmatpush1.bf16.xpose.msra.mxu0 %v2308
        %2330 = vmatprep.subr.bf16.mxu0 0
        %2331 = vmatpush1.bf16.xpose.msra.mxu0 %v2311
        %2332 = vmatprep.subr.bf16.mxu0 0
        %2333 = vmatpush1.bf16.xpose.msra.mxu0 %v2314
        %2334 = vmatprep.subr.bf16.mxu0 0
        %2335 = vmatpush1.bf16.xpose.msra.mxu0 %v2317
        %2336 = vmatprep.subr.bf16.mxu0 0
        %2337 = vmatpush1.bf16.xpose.msra.mxu0 %v2320
        %2338 = vmatprep.subr.bf16.mxu0 0
        %2339 = vmatpush1.bf16.xpose.msra.mxu0 0
        %2340 = vmatprep.subr.bf16.mxu0 0
        %2341 = vmatpush1.bf16.xpose.msra.mxu0 0
        %2342 = vmatprep.subr.bf16.mxu0 0
        %2343 = vmatpush1.bf16.xpose.msra.mxu0 0
        %2344 = vmatprep.subr.bf16.mxu0 0
        %2345 = vmatpush1.bf16.xpose.msra.mxu0 0
        %2346 = vmatprep.subr.bf16.mxu0 0
        %2347 = vmatpush1.bf16.xpose.msra.mxu0 0
        %2348 = vmatprep.subr.bf16.mxu0 0
        %2349 = vmatpush1.bf16.xpose.msra.mxu0 0
        %2350 = vmatprep.subr.bf16.mxu0 0
        %2351 = vmatpush1.bf16.xpose.msra.mxu0 0
        %2352 = vmatprep.subr.bf16.mxu0 0
        %2353 = vmatpush1.bf16.xpose.msra.mxu0 0
        %2354 = vmatprep.mubr.bf16.mxu0 0
        %2355 = vmatmul.mubr.bf16.gmra.mrb[0].mxu0 %v2275
        %v2356 = vpop.f32.mrb[0].mxu0
        %v2357 = vadd.f32 0.0, %v2356
        %v2358 = vpop.f32.mrb[0].mxu0
        %v2359 = vpop.f32.mrb[0].mxu0
        %v2360 = vadd.f32 0.0, %v2359
        %v2361 = vpop.f32.mrb[0].mxu0
        %2362 = vmatprep.mubr.bf16.mxu0 0
        %2363 = vmatmul.mubr.bf16.gmra.mrb[0].mxu0 %v2278
        %v2364 = vpop.f32.mrb[0].mxu0
        %v2365 = vadd.f32 0.0, %v2364
        %v2366 = vpop.f32.mrb[0].mxu0
        %v2367 = vpop.f32.mrb[0].mxu0
        %v2368 = vadd.f32 0.0, %v2367
        %v2369 = vpop.f32.mrb[0].mxu0
        %2370 = vmatprep.mubr.bf16.mxu0 0
        %2371 = vmatmul.mubr.bf16.gmra.mrb[0].mxu0 %v2281
        %v2372 = vpop.f32.mrb[0].mxu0
        %v2373 = vadd.f32 0.0, %v2372
        %v2374 = vpop.f32.mrb[0].mxu0
        %v2375 = vpop.f32.mrb[0].mxu0
        %v2376 = vadd.f32 0.0, %v2375
        %v2377 = vpop.f32.mrb[0].mxu0
        %2378 = vmatprep.mubr.bf16.mxu0 0
        %2379 = vmatmul.mubr.bf16.gmra.mrb[0].mxu0 %v2284
        %v2380 = vpop.f32.mrb[0].mxu0
        %v2381 = vadd.f32 0.0, %v2380
        %v2382 = vpop.f32.mrb[0].mxu0
        %v2383 = vpop.f32.mrb[0].mxu0
        %v2384 = vadd.f32 0.0, %v2383
        %v2385 = vpop.f32.mrb[0].mxu0
        %2386 = vmatprep.mubr.bf16.mxu0 0
        %2387 = vmatmul.mubr.bf16.gmra.mrb[0].mxu0 %v2287
        %v2388 = vpop.f32.mrb[0].mxu0
        %v2389 = vadd.f32 0.0, %v2388
        %v2390 = vpop.f32.mrb[0].mxu0
        %v2391 = vpop.f32.mrb[0].mxu0
        %v2392 = vadd.f32 0.0, %v2391
        %v2393 = vpop.f32.mrb[0].mxu0
        %2394 = vmatprep.mubr.bf16.mxu0 0
        %2395 = vmatmul.mubr.bf16.gmra.mrb[0].mxu0 %v2290
        %v2396 = vpop.f32.mrb[0].mxu0
        %v2397 = vadd.f32 0.0, %v2396
        %v2398 = vpop.f32.mrb[0].mxu0
        %v2399 = vpop.f32.mrb[0].mxu0
        %v2400 = vadd.f32 0.0, %v2399
        %v2401 = vpop.f32.mrb[0].mxu0
        %2402 = vmatprep.mubr.bf16.mxu0 0
        %2403 = vmatmul.mubr.bf16.gmra.mrb[0].mxu0 %v2293
        %v2404 = vpop.f32.mrb[0].mxu0
        %v2405 = vadd.f32 0.0, %v2404
        %v2406 = vpop.f32.mrb[0].mxu0
        %v2407 = vpop.f32.mrb[0].mxu0
        %v2408 = vadd.f32 0.0, %v2407
        %v2409 = vpop.f32.mrb[0].mxu0
        %2410 = vmatprep.mubr.bf16.mxu0 0
        %2411 = vmatmul.mubr.bf16.gmra.mrb[0].mxu0 %v2296
        %v2412 = vpop.f32.mrb[0].mxu0
        %v2413 = vadd.f32 0.0, %v2412
        %v2414 = vpop.f32.mrb[0].mxu0
        %v2415 = vpop.f32.mrb[0].mxu0
        %v2416 = vadd.f32 0.0, %v2415
        %v2417 = vpop.f32.mrb[0].mxu0
        %2418 = vdwg.mxu0
        %2419 = vmax.xlane.f32.xlu0 %v2357
        %v2420 = vpop.xlane.xlu0 %2419
        %2421 = vmax.xlane.f32.xlu0 %v2360
        %v2422 = vpop.xlane.xlu0 %2421
        %2423 = vmax.xlane.f32.xlu0 %v2365
        %v2424 = vpop.xlane.xlu0 %2423
        %2425 = vmax.xlane.f32.xlu0 %v2368
        %v2426 = vpop.xlane.xlu0 %2425
        %2427 = vmax.xlane.f32.xlu0 %v2373
        %v2428 = vpop.xlane.xlu0 %2427
        %2429 = vmax.xlane.f32.xlu0 %v2376
        %v2430 = vpop.xlane.xlu0 %2429
        %2431 = vmax.xlane.f32.xlu0 %v2381
        %v2432 = vpop.xlane.xlu0 %2431
        %2433 = vmax.xlane.f32.xlu0 %v2384
        %v2434 = vpop.xlane.xlu0 %2433
        %2435 = vmax.xlane.f32.xlu0 %v2389
        %v2436 = vpop.xlane.xlu0 %2435
        %2437 = vmax.xlane.f32.xlu0 %v2392
        %v2438 = vpop.xlane.xlu0 %2437
        %2439 = vmax.xlane.f32.xlu0 %v2397
        %v2440 = vpop.xlane.xlu0 %2439
        %2441 = vmax.xlane.f32.xlu0 %v2400
        %v2442 = vpop.xlane.xlu0 %2441
        %2443 = vmax.xlane.f32.xlu0 %v2405
        %v2444 = vpop.xlane.xlu0 %2443
        %2445 = vmax.xlane.f32.xlu0 %v2408
        %v2446 = vpop.xlane.xlu0 %2445
        %2447 = vmax.xlane.f32.xlu0 %v2413
        %v2448 = vpop.xlane.xlu0 %2447
        %2449 = vmax.xlane.f32.xlu0 %v2416
        %v2450 = vpop.xlane.xlu0 %2449
        %v2451 = vsub.f32 %v2357, %v2420
        %v2452 = vsub.f32 %v2360, %v2422
        %v2453 = vsub.f32 %v2365, %v2424
        %v2454 = vsub.f32 %v2368, %v2426
        %v2455 = vsub.f32 %v2373, %v2428
        %v2456 = vsub.f32 %v2376, %v2430
        %v2457 = vsub.f32 %v2381, %v2432
        %v2458 = vsub.f32 %v2384, %v2434
        %v2459 = vsub.f32 %v2389, %v2436
        %v2460 = vsub.f32 %v2392, %v2438
        %v2461 = vsub.f32 %v2397, %v2440
        %v2462 = vsub.f32 %v2400, %v2442
        %v2463 = vsub.f32 %v2405, %v2444
        %v2464 = vsub.f32 %v2408, %v2446
        %v2465 = vsub.f32 %v2413, %v2448
        %v2466 = vsub.f32 %v2416, %v2450
        %v2467 = vmul.f32 %v2451, 1.442695
        %v2468 = vpow.pop %v2467
        %v2469 = vmul.f32 %v2452, 1.442695
        %v2470 = vpow.pop %v2469
        %v2471 = vmul.f32 %v2453, 1.442695
        %v2472 = vpow.pop %v2471
        %v2473 = vmul.f32 %v2454, 1.442695
        %v2474 = vpow.pop %v2473
        %v2475 = vmul.f32 %v2455, 1.442695
        %v2476 = vpow.pop %v2475
        %v2477 = vmul.f32 %v2456, 1.442695
        %v2478 = vpow.pop %v2477
        %v2479 = vmul.f32 %v2457, 1.442695
        %v2480 = vpow.pop %v2479
        %v2481 = vmul.f32 %v2458, 1.442695
        %v2482 = vpow.pop %v2481
        %v2483 = vmul.f32 %v2459, 1.442695
        %v2484 = vpow.pop %v2483
        %v2485 = vmul.f32 %v2460, 1.442695
        %v2486 = vpow.pop %v2485
        %v2487 = vmul.f32 %v2461, 1.442695
        %v2488 = vpow.pop %v2487
        %v2489 = vmul.f32 %v2462, 1.442695
        %v2490 = vpow.pop %v2489
        %v2491 = vmul.f32 %v2463, 1.442695
        %v2492 = vpow.pop %v2491
        %v2493 = vmul.f32 %v2464, 1.442695
        %v2494 = vpow.pop %v2493
        %v2495 = vmul.f32 %v2465, 1.442695
        %v2496 = vpow.pop %v2495
        %v2497 = vmul.f32 %v2466, 1.442695
        %v2498 = vpow.pop %v2497
        %2499 = vadd.xlane.f32.xlu0 %v2468
        %v2500 = vpop.xlane.xlu0 %2499
        %2501 = vadd.xlane.f32.xlu0 %v2470
        %v2502 = vpop.xlane.xlu0 %2501
        %2503 = vadd.xlane.f32.xlu0 %v2472
        %v2504 = vpop.xlane.xlu0 %2503
        %2505 = vadd.xlane.f32.xlu0 %v2474
        %v2506 = vpop.xlane.xlu0 %2505
        %2507 = vadd.xlane.f32.xlu0 %v2476
        %v2508 = vpop.xlane.xlu0 %2507
        %2509 = vadd.xlane.f32.xlu0 %v2478
        %v2510 = vpop.xlane.xlu0 %2509
        %2511 = vadd.xlane.f32.xlu0 %v2480
        %v2512 = vpop.xlane.xlu0 %2511
        %2513 = vadd.xlane.f32.xlu0 %v2482
        %v2514 = vpop.xlane.xlu0 %2513
        %2515 = vadd.xlane.f32.xlu0 %v2484
        %v2516 = vpop.xlane.xlu0 %2515
        %2517 = vadd.xlane.f32.xlu0 %v2486
        %v2518 = vpop.xlane.xlu0 %2517
        %2519 = vadd.xlane.f32.xlu0 %v2488
        %v2520 = vpop.xlane.xlu0 %2519
        %2521 = vadd.xlane.f32.xlu0 %v2490
        %v2522 = vpop.xlane.xlu0 %2521
        %2523 = vadd.xlane.f32.xlu0 %v2492
        %v2524 = vpop.xlane.xlu0 %2523
        %2525 = vadd.xlane.f32.xlu0 %v2494
        %v2526 = vpop.xlane.xlu0 %2525
        %2527 = vadd.xlane.f32.xlu0 %v2496
        %v2528 = vpop.xlane.xlu0 %2527
        %2529 = vadd.xlane.f32.xlu0 %v2498
        %v2530 = vpop.xlane.xlu0 %2529
        %v2531 = vpack.c.bf16 %v2470, %v2468
        %v2532 = vpack.c.bf16 %v2474, %v2472
        %v2533 = vpack.c.bf16 %v2478, %v2476
        %v2534 = vpack.c.bf16 %v2482, %v2480
        %v2535 = vpack.c.bf16 %v2486, %v2484
        %v2536 = vpack.c.bf16 %v2490, %v2488
        %v2537 = vpack.c.bf16 %v2494, %v2492
        %v2538 = vpack.c.bf16 %v2498, %v2496
        %2539 = vrot.lane.b32.xlu0 %v908, 32
        %v2540 = vpop.permute.xlu0 %2539
        %2541 = vrot.lane.b32.xlu0 %v910, 32
        %v2542 = vpop.permute.xlu0 %2541
        %2543 = vrot.lane.b32.xlu0 %v912, 32
        %v2544 = vpop.permute.xlu0 %2543
        %2545 = vrot.lane.b32.xlu0 %v914, 32
        %v2546 = vpop.permute.xlu0 %2545
        %2547 = vrot.lane.b32.xlu0 %v916, 32
        %v2548 = vpop.permute.xlu0 %2547
        %2549 = vrot.lane.b32.xlu0 %v918, 32
        %v2550 = vpop.permute.xlu0 %2549
        %2551 = vrot.lane.b32.xlu0 %v920, 32
        %v2552 = vpop.permute.xlu0 %2551
        %2553 = vrot.lane.b32.xlu0 %v922, 32
        %v2554 = vpop.permute.xlu0 %2553
        %2563 = vmatprep.subr.bf16.mxu0 0
        %2564 = vmatpush1.bf16.msra.mxu0 %v2540
        %2565 = vmatprep.subr.bf16.mxu0 0
        %2566 = vmatpush1.bf16.msra.mxu0 %v2542
        %2567 = vmatprep.subr.bf16.mxu0 0
        %2568 = vmatpush1.bf16.msra.mxu0 %v2544
        %2569 = vmatprep.subr.bf16.mxu0 0
        %2570 = vmatpush1.bf16.msra.mxu0 %v2546
        %2571 = vmatprep.subr.bf16.mxu0 0
        %2572 = vmatpush1.bf16.msra.mxu0 %v2548
        %2573 = vmatprep.subr.bf16.mxu0 0
        %2574 = vmatpush1.bf16.msra.mxu0 %v2550
        %2575 = vmatprep.subr.bf16.mxu0 0
        %2576 = vmatpush1.bf16.msra.mxu0 %v2552
        %2577 = vmatprep.subr.bf16.mxu0 0
        %2578 = vmatpush1.bf16.msra.mxu0 %v2554
        %2579 = vmatprep.subr.bf16.mxu0 0
        %2580 = vmatpush1.bf16.msra.mxu0 0
        %2581 = vmatprep.subr.bf16.mxu0 0
        %2582 = vmatpush1.bf16.msra.mxu0 0
        %2583 = vmatprep.subr.bf16.mxu0 0
        %2584 = vmatpush1.bf16.msra.mxu0 0
        %2585 = vmatprep.subr.bf16.mxu0 0
        %2586 = vmatpush1.bf16.msra.mxu0 0
        %2587 = vmatprep.subr.bf16.mxu0 0
        %2588 = vmatpush1.bf16.msra.mxu0 0
        %2589 = vmatprep.subr.bf16.mxu0 0
        %2590 = vmatpush1.bf16.msra.mxu0 0
        %2591 = vmatprep.subr.bf16.mxu0 0
        %2592 = vmatpush1.bf16.msra.mxu0 0
        %2593 = vmatprep.subr.bf16.mxu0 0
        %2594 = vmatpush1.bf16.msra.mxu0 0
        %2595 = vmatprep.mubr.bf16.mxu0 0
        %2596 = vmatmul.mubr.bf16.gmra.mrb[0].mxu0 %v2531
        %v2597 = vpop.f32.mrb[0].mxu0
        %v2598 = vadd.f32 0.0, %v2597
        %v2599 = vpop.f32.mrb[0].mxu0
        %v2600 = vpop.f32.mrb[0].mxu0
        %v2601 = vadd.f32 0.0, %v2600
        %v2602 = vpop.f32.mrb[0].mxu0
        %2603 = vmatprep.mubr.bf16.mxu0 0
        %2604 = vmatmul.mubr.bf16.gmra.mrb[0].mxu0 %v2532
        %v2605 = vpop.f32.mrb[0].mxu0
        %v2606 = vadd.f32 0.0, %v2605
        %v2607 = vpop.f32.mrb[0].mxu0
        %v2608 = vpop.f32.mrb[0].mxu0
        %v2609 = vadd.f32 0.0, %v2608
        %v2610 = vpop.f32.mrb[0].mxu0
        %2611 = vmatprep.mubr.bf16.mxu0 0
        %2612 = vmatmul.mubr.bf16.gmra.mrb[0].mxu0 %v2533
        %v2613 = vpop.f32.mrb[0].mxu0
        %v2614 = vadd.f32 0.0, %v2613
        %v2615 = vpop.f32.mrb[0].mxu0
        %v2616 = vpop.f32.mrb[0].mxu0
        %v2617 = vadd.f32 0.0, %v2616
        %v2618 = vpop.f32.mrb[0].mxu0
        %2619 = vmatprep.mubr.bf16.mxu0 0
        %2620 = vmatmul.mubr.bf16.gmra.mrb[0].mxu0 %v2534
        %v2621 = vpop.f32.mrb[0].mxu0
        %v2622 = vadd.f32 0.0, %v2621
        %v2623 = vpop.f32.mrb[0].mxu0
        %v2624 = vpop.f32.mrb[0].mxu0
        %v2625 = vadd.f32 0.0, %v2624
        %v2626 = vpop.f32.mrb[0].mxu0
        %2627 = vmatprep.mubr.bf16.mxu0 0
        %2628 = vmatmul.mubr.bf16.gmra.mrb[0].mxu0 %v2535
        %v2629 = vpop.f32.mrb[0].mxu0
        %v2630 = vadd.f32 0.0, %v2629
        %v2631 = vpop.f32.mrb[0].mxu0
        %v2632 = vpop.f32.mrb[0].mxu0
        %v2633 = vadd.f32 0.0, %v2632
        %v2634 = vpop.f32.mrb[0].mxu0
        %2635 = vmatprep.mubr.bf16.mxu0 0
        %2636 = vmatmul.mubr.bf16.gmra.mrb[0].mxu0 %v2536
        %v2637 = vpop.f32.mrb[0].mxu0
        %v2638 = vadd.f32 0.0, %v2637
        %v2639 = vpop.f32.mrb[0].mxu0
        %v2640 = vpop.f32.mrb[0].mxu0
        %v2641 = vadd.f32 0.0, %v2640
        %v2642 = vpop.f32.mrb[0].mxu0
        %2643 = vmatprep.mubr.bf16.mxu0 0
        %2644 = vmatmul.mubr.bf16.gmra.mrb[0].mxu0 %v2537
        %v2645 = vpop.f32.mrb[0].mxu0
        %v2646 = vadd.f32 0.0, %v2645
        %v2647 = vpop.f32.mrb[0].mxu0
        %v2648 = vpop.f32.mrb[0].mxu0
        %v2649 = vadd.f32 0.0, %v2648
        %v2650 = vpop.f32.mrb[0].mxu0
        %2651 = vmatprep.mubr.bf16.mxu0 0
        %2652 = vmatmul.mubr.bf16.gmra.mrb[0].mxu0 %v2538
        %v2653 = vpop.f32.mrb[0].mxu0
        %v2654 = vadd.f32 0.0, %v2653
        %v2655 = vpop.f32.mrb[0].mxu0
        %v2656 = vpop.f32.mrb[0].mxu0
        %v2657 = vadd.f32 0.0, %v2656
        %v2658 = vpop.f32.mrb[0].mxu0
        %2659 = vdwg.mxu0
        %v2660 = vrcp.pop %v2500
        %v2661 = vrcp.pop %v2502
        %v2662 = vrcp.pop %v2504
        %v2663 = vrcp.pop %v2506
        %v2664 = vrcp.pop %v2508
        %v2665 = vrcp.pop %v2510
        %v2666 = vrcp.pop %v2512
        %v2667 = vrcp.pop %v2514
        %v2668 = vrcp.pop %v2516
        %v2669 = vrcp.pop %v2518
        %v2670 = vrcp.pop %v2520
        %v2671 = vrcp.pop %v2522
        %v2672 = vrcp.pop %v2524
        %v2673 = vrcp.pop %v2526
        %v2674 = vrcp.pop %v2528
        %v2675 = vrcp.pop %v2530
        %v2676 = vmul.f32 %v2598, %v2660
        %v2677 = vmul.f32 %v2601, %v2661
        %v2678 = vmul.f32 %v2606, %v2662
        %v2679 = vmul.f32 %v2609, %v2663
        %v2680 = vmul.f32 %v2614, %v2664
        %v2681 = vmul.f32 %v2617, %v2665
        %v2682 = vmul.f32 %v2622, %v2666
        %v2683 = vmul.f32 %v2625, %v2667
        %v2684 = vmul.f32 %v2630, %v2668
        %v2685 = vmul.f32 %v2633, %v2669
        %v2686 = vmul.f32 %v2638, %v2670
        %v2687 = vmul.f32 %v2641, %v2671
        %v2688 = vmul.f32 %v2646, %v2672
        %v2689 = vmul.f32 %v2649, %v2673
        %v2690 = vmul.f32 %v2654, %v2674
        %v2691 = vmul.f32 %v2657, %v2675
        %2708 = vrot.lane.b32.xlu0 %v1776, 32
        %v2709 = vpop.permute.xlu0 %2708
        %2710 = vrot.lane.b32.xlu0 %v1777, 32
        %v2711 = vpop.permute.xlu0 %2710
        %2712 = vrot.lane.b32.xlu0 %v1778, 32
        %v2713 = vpop.permute.xlu0 %2712
        %2714 = vrot.lane.b32.xlu0 %v1779, 32
        %v2715 = vpop.permute.xlu0 %2714
        %2716 = vrot.lane.b32.xlu0 %v1780, 32
        %v2717 = vpop.permute.xlu0 %2716
        %2718 = vrot.lane.b32.xlu0 %v1781, 32
        %v2719 = vpop.permute.xlu0 %2718
        %2720 = vrot.lane.b32.xlu0 %v1782, 32
        %v2721 = vpop.permute.xlu0 %2720
        %2722 = vrot.lane.b32.xlu0 %v1783, 32
        %v2723 = vpop.permute.xlu0 %2722
        %2724 = vrot.lane.b32.xlu0 %v1784, 32
        %v2725 = vpop.permute.xlu0 %2724
        %2726 = vrot.lane.b32.xlu0 %v1785, 32
        %v2727 = vpop.permute.xlu0 %2726
        %2728 = vrot.lane.b32.xlu0 %v1786, 32
        %v2729 = vpop.permute.xlu0 %2728
        %2730 = vrot.lane.b32.xlu0 %v1787, 32
        %v2731 = vpop.permute.xlu0 %2730
        %2732 = vrot.lane.b32.xlu0 %v1788, 32
        %v2733 = vpop.permute.xlu0 %2732
        %2734 = vrot.lane.b32.xlu0 %v1789, 32
        %v2735 = vpop.permute.xlu0 %2734
        %2736 = vrot.lane.b32.xlu0 %v1790, 32
        %v2737 = vpop.permute.xlu0 %2736
        %2738 = vrot.lane.b32.xlu0 %v1791, 32
        %v2739 = vpop.permute.xlu0 %2738
        %2772 = vrot.lane.b32.xlu0 %v2226, 64
        %v2773 = vpop.permute.xlu0 %2772
        %2774 = vrot.lane.b32.xlu0 %v2227, 64
        %v2775 = vpop.permute.xlu0 %2774
        %2776 = vrot.lane.b32.xlu0 %v2228, 64
        %v2777 = vpop.permute.xlu0 %2776
        %2778 = vrot.lane.b32.xlu0 %v2229, 64
        %v2779 = vpop.permute.xlu0 %2778
        %2780 = vrot.lane.b32.xlu0 %v2230, 64
        %v2781 = vpop.permute.xlu0 %2780
        %2782 = vrot.lane.b32.xlu0 %v2231, 64
        %v2783 = vpop.permute.xlu0 %2782
        %2784 = vrot.lane.b32.xlu0 %v2232, 64
        %v2785 = vpop.permute.xlu0 %2784
        %2786 = vrot.lane.b32.xlu0 %v2233, 64
        %v2787 = vpop.permute.xlu0 %2786
        %2788 = vrot.lane.b32.xlu0 %v2234, 64
        %v2789 = vpop.permute.xlu0 %2788
        %2790 = vrot.lane.b32.xlu0 %v2235, 64
        %v2791 = vpop.permute.xlu0 %2790
        %2792 = vrot.lane.b32.xlu0 %v2236, 64
        %v2793 = vpop.permute.xlu0 %2792
        %2794 = vrot.lane.b32.xlu0 %v2237, 64
        %v2795 = vpop.permute.xlu0 %2794
        %2796 = vrot.lane.b32.xlu0 %v2238, 64
        %v2797 = vpop.permute.xlu0 %2796
        %2798 = vrot.lane.b32.xlu0 %v2239, 64
        %v2799 = vpop.permute.xlu0 %2798
        %2800 = vrot.lane.b32.xlu0 %v2240, 64
        %v2801 = vpop.permute.xlu0 %2800
        %2802 = vrot.lane.b32.xlu0 %v2241, 64
        %v2803 = vpop.permute.xlu0 %2802
        %2836 = vrot.lane.b32.xlu0 %v2676, 96
        %v2837 = vpop.permute.xlu0 %2836
        %2838 = vrot.lane.b32.xlu0 %v2677, 96
        %v2839 = vpop.permute.xlu0 %2838
        %2840 = vrot.lane.b32.xlu0 %v2678, 96
        %v2841 = vpop.permute.xlu0 %2840
        %2842 = vrot.lane.b32.xlu0 %v2679, 96
        %v2843 = vpop.permute.xlu0 %2842
        %2844 = vrot.lane.b32.xlu0 %v2680, 96
        %v2845 = vpop.permute.xlu0 %2844
        %2846 = vrot.lane.b32.xlu0 %v2681, 96
        %v2847 = vpop.permute.xlu0 %2846
        %2848 = vrot.lane.b32.xlu0 %v2682, 96
        %v2849 = vpop.permute.xlu0 %2848
        %2850 = vrot.lane.b32.xlu0 %v2683, 96
        %v2851 = vpop.permute.xlu0 %2850
        %2852 = vrot.lane.b32.xlu0 %v2684, 96
        %v2853 = vpop.permute.xlu0 %2852
        %2854 = vrot.lane.b32.xlu0 %v2685, 96
        %v2855 = vpop.permute.xlu0 %2854
        %2856 = vrot.lane.b32.xlu0 %v2686, 96
        %v2857 = vpop.permute.xlu0 %2856
        %2858 = vrot.lane.b32.xlu0 %v2687, 96
        %v2859 = vpop.permute.xlu0 %2858
        %2860 = vrot.lane.b32.xlu0 %v2688, 96
        %v2861 = vpop.permute.xlu0 %2860
        %2862 = vrot.lane.b32.xlu0 %v2689, 96
        %v2863 = vpop.permute.xlu0 %2862
        %2864 = vrot.lane.b32.xlu0 %v2690, 96
        %v2865 = vpop.permute.xlu0 %2864
        %2866 = vrot.lane.b32.xlu0 %v2691, 96
        %v2867 = vpop.permute.xlu0 %2866
        %v2884 = vsel %vm923, %v1302, %v2709
        %v2885 = vsel %vm923, %v1303, %v2711
        %v2886 = vsel %vm923, %v1304, %v2713
        %v2887 = vsel %vm923, %v1305, %v2715
        %v2888 = vsel %vm923, %v1306, %v2717
        %v2889 = vsel %vm923, %v1307, %v2719
        %v2890 = vsel %vm923, %v1308, %v2721
        %v2891 = vsel %vm923, %v1309, %v2723
        %v2892 = vsel %vm923, %v1310, %v2725
        %v2893 = vsel %vm923, %v1311, %v2727
        %v2894 = vsel %vm923, %v1312, %v2729
        %v2895 = vsel %vm923, %v1313, %v2731
        %v2896 = vsel %vm923, %v1314, %v2733
        %v2897 = vsel %vm923, %v1315, %v2735
        %v2898 = vsel %vm923, %v1316, %v2737
        %v2899 = vsel %vm923, %v1317, %v2739
        %vm2900 = vcmask 523264
        %v2901 = vsel %vm2900, %v2884, %v2773
        %v2902 = vsel %vm2900, %v2885, %v2775
        %v2903 = vsel %vm2900, %v2886, %v2777
        %v2904 = vsel %vm2900, %v2887, %v2779
        %v2905 = vsel %vm2900, %v2888, %v2781
        %v2906 = vsel %vm2900, %v2889, %v2783
        %v2907 = vsel %vm2900, %v2890, %v2785
        %v2908 = vsel %vm2900, %v2891, %v2787
        %v2909 = vsel %vm2900, %v2892, %v2789
        %v2910 = vsel %vm2900, %v2893, %v2791
        %v2911 = vsel %vm2900, %v2894, %v2793
        %v2912 = vsel %vm2900, %v2895, %v2795
        %v2913 = vsel %vm2900, %v2896, %v2797
        %v2914 = vsel %vm2900, %v2897, %v2799
        %v2915 = vsel %vm2900, %v2898, %v2801
        %v2916 = vsel %vm2900, %v2899, %v2803
        %vm2917 = vcmask 785408
        %v2918 = vsel %vm2917, %v2901, %v2837
        %v2919 = vsel %vm2917, %v2902, %v2839
        %v2920 = vsel %vm2917, %v2903, %v2841
        %v2921 = vsel %vm2917, %v2904, %v2843
        %v2922 = vsel %vm2917, %v2905, %v2845
        %v2923 = vsel %vm2917, %v2906, %v2847
        %v2924 = vsel %vm2917, %v2907, %v2849
        %v2925 = vsel %vm2917, %v2908, %v2851
        %v2926 = vsel %vm2917, %v2909, %v2853
        %v2927 = vsel %vm2917, %v2910, %v2855
        %v2928 = vsel %vm2917, %v2911, %v2857
        %v2929 = vsel %vm2917, %v2912, %v2859
        %v2930 = vsel %vm2917, %v2913, %v2861
        %v2931 = vsel %vm2917, %v2914, %v2863
        %v2932 = vsel %vm2917, %v2915, %v2865
        %v2933 = vsel %vm2917, %v2916, %v2867
        %v2934 = vpack.c.bf16 %v2919, %v2918
        %v2935 = vpack.c.bf16 %v2921, %v2920
        %v2936 = vpack.c.bf16 %v2923, %v2922
        %v2937 = vpack.c.bf16 %v2925, %v2924
        %v2938 = vpack.c.bf16 %v2927, %v2926
        %v2939 = vpack.c.bf16 %v2929, %v2928
        %v2940 = vpack.c.bf16 %v2931, %v2930
        %v2941 = vpack.c.bf16 %v2933, %v2932
        %v2942 = vld [vmem:[#allocation10] sm:$0xf]
        %v2943 = vld [vmem:[#allocation10 + $0x4] sm:$0xf]
        %v2944 = vld [vmem:[#allocation10 + $0x8] sm:$0xf]
        %v2945 = vld [vmem:[#allocation10 + $0xc] sm:$0xf]
        %v2946 = vld [vmem:[#allocation10 + $0x10] sm:$0xf]
        %v2947 = vld [vmem:[#allocation10 + $0x14] sm:$0xf]
        %v2948 = vld [vmem:[#allocation10 + $0x18] sm:$0xf]
        %v2949 = vld [vmem:[#allocation10 + $0x1c] sm:$0xf]
        %v2950 = vld [vmem:[#allocation10 + $0x20] sm:$0xf]
        %v2951 = vld [vmem:[#allocation10 + $0x24] sm:$0xf]
        %v2952 = vld [vmem:[#allocation10 + $0x28] sm:$0xf]
        %v2953 = vld [vmem:[#allocation10 + $0x2c] sm:$0xf]
        %v2954 = vld [vmem:[#allocation10 + $0x30] sm:$0xf]
        %v2955 = vld [vmem:[#allocation10 + $0x34] sm:$0xf]
        %v2956 = vld [vmem:[#allocation10 + $0x38] sm:$0xf]
        %v2957 = vld [vmem:[#allocation10 + $0x3c] sm:$0xf]
        %v2958 = vld [vmem:[%s7] sm:$0x1]
        %v2960 = vlaneseq
        %v2961 = vshrl.u32 %v2960, 7
        %v2962 = vsub.s32 0, %v2961
        %v2963 = vrot.slane %v2958, %v2962
        %v2981 = vunpack.c.l.b16 %v2942
        %v2982 = vunpack.c.l.b16 %v2943
        %v2983 = vunpack.c.l.b16 %v2944
        %v2984 = vunpack.c.l.b16 %v2945
        %v2985 = vunpack.c.l.b16 %v2946
        %v2986 = vunpack.c.l.b16 %v2947
        %v2987 = vunpack.c.l.b16 %v2948
        %v2988 = vunpack.c.l.b16 %v2949
        %v2989 = vunpack.c.l.b16 %v2950
        %v2990 = vunpack.c.l.b16 %v2951
        %v2991 = vunpack.c.l.b16 %v2952
        %v2992 = vunpack.c.l.b16 %v2953
        %v2993 = vunpack.c.l.b16 %v2954
        %v2994 = vunpack.c.l.b16 %v2955
        %v2995 = vunpack.c.l.b16 %v2956
        %v2996 = vunpack.c.l.b16 %v2957
        %v2997 = vpack.c.b16 %v2982, %v2981
        %v2998 = vpack.c.b16 %v2984, %v2983
        %v2999 = vpack.c.b16 %v2986, %v2985
        %v3000 = vpack.c.b16 %v2988, %v2987
        %v3001 = vpack.c.b16 %v2990, %v2989
        %v3002 = vpack.c.b16 %v2992, %v2991
        %v3003 = vpack.c.b16 %v2994, %v2993
        %v3004 = vpack.c.b16 %v2996, %v2995
        %3013 = vmatprep.subr.bf16.mxu0 0
        %3014 = vmatpush1.bf16.msra.mxu0 %v2997
        %3015 = vmatprep.subr.bf16.mxu0 0
        %3016 = vmatpush1.bf16.msra.mxu0 %v2998
        %3017 = vmatprep.subr.bf16.mxu0 0
        %3018 = vmatpush1.bf16.msra.mxu0 %v2999
        %3019 = vmatprep.subr.bf16.mxu0 0
        %3020 = vmatpush1.bf16.msra.mxu0 %v3000
        %3021 = vmatprep.subr.bf16.mxu0 0
        %3022 = vmatpush1.bf16.msra.mxu0 %v3001
        %3023 = vmatprep.subr.bf16.mxu0 0
        %3024 = vmatpush1.bf16.msra.mxu0 %v3002
        %3025 = vmatprep.subr.bf16.mxu0 0
        %3026 = vmatpush1.bf16.msra.mxu0 %v3003
        %3027 = vmatprep.subr.bf16.mxu0 0
        %3028 = vmatpush1.bf16.msra.mxu0 %v3004
        %3029 = vmatprep.subr.bf16.mxu0 0
        %3030 = vmatpush1.bf16.msra.mxu0 0
        %3031 = vmatprep.subr.bf16.mxu0 0
        %3032 = vmatpush1.bf16.msra.mxu0 0
        %3033 = vmatprep.subr.bf16.mxu0 0
        %3034 = vmatpush1.bf16.msra.mxu0 0
        %3035 = vmatprep.subr.bf16.mxu0 0
        %3036 = vmatpush1.bf16.msra.mxu0 0
        %3037 = vmatprep.subr.bf16.mxu0 0
        %3038 = vmatpush1.bf16.msra.mxu0 0
        %3039 = vmatprep.subr.bf16.mxu0 0
        %3040 = vmatpush1.bf16.msra.mxu0 0
        %3041 = vmatprep.subr.bf16.mxu0 0
        %3042 = vmatpush1.bf16.msra.mxu0 0
        %3043 = vmatprep.subr.bf16.mxu0 0
        %3044 = vmatpush1.bf16.msra.mxu0 0
        %3045 = vmatprep.mubr.bf16.mxu0 0
        %3046 = vmatmul.mubr.bf16.gmra.mrb[0].mxu0 %v2934
        %v3047 = vpop.f32.mrb[0].mxu0
        %v3048 = vadd.f32 %v2963, %v3047
        %v3049 = vpop.f32.mrb[0].mxu0
        %v3050 = vpop.f32.mrb[0].mxu0
        %v3051 = vadd.f32 %v2963, %v3050
        %v3052 = vpop.f32.mrb[0].mxu0
        %3053 = vmatprep.mubr.bf16.mxu0 0
        %3054 = vmatmul.mubr.bf16.gmra.mrb[0].mxu0 %v2935
        %v3055 = vpop.f32.mrb[0].mxu0
        %v3056 = vadd.f32 %v2963, %v3055
        %v3057 = vpop.f32.mrb[0].mxu0
        %v3058 = vpop.f32.mrb[0].mxu0
        %v3059 = vadd.f32 %v2963, %v3058
        %v3060 = vpop.f32.mrb[0].mxu0
        %3061 = vmatprep.mubr.bf16.mxu0 0
        %3062 = vmatmul.mubr.bf16.gmra.mrb[0].mxu0 %v2936
        %v3063 = vpop.f32.mrb[0].mxu0
        %v3064 = vadd.f32 %v2963, %v3063
        %v3065 = vpop.f32.mrb[0].mxu0
        %v3066 = vpop.f32.mrb[0].mxu0
        %v3067 = vadd.f32 %v2963, %v3066
        %v3068 = vpop.f32.mrb[0].mxu0
        %3069 = vmatprep.mubr.bf16.mxu0 0
        %3070 = vmatmul.mubr.bf16.gmra.mrb[0].mxu0 %v2937
        %v3071 = vpop.f32.mrb[0].mxu0
        %v3072 = vadd.f32 %v2963, %v3071
        %v3073 = vpop.f32.mrb[0].mxu0
        %v3074 = vpop.f32.mrb[0].mxu0
        %v3075 = vadd.f32 %v2963, %v3074
        %v3076 = vpop.f32.mrb[0].mxu0
        %3077 = vmatprep.mubr.bf16.mxu0 0
        %3078 = vmatmul.mubr.bf16.gmra.mrb[0].mxu0 %v2938
        %v3079 = vpop.f32.mrb[0].mxu0
        %v3080 = vadd.f32 %v2963, %v3079
        %v3081 = vpop.f32.mrb[0].mxu0
        %v3082 = vpop.f32.mrb[0].mxu0
        %v3083 = vadd.f32 %v2963, %v3082
        %v3084 = vpop.f32.mrb[0].mxu0
        %3085 = vmatprep.mubr.bf16.mxu0 0
        %3086 = vmatmul.mubr.bf16.gmra.mrb[0].mxu0 %v2939
        %v3087 = vpop.f32.mrb[0].mxu0
        %v3088 = vadd.f32 %v2963, %v3087
        %v3089 = vpop.f32.mrb[0].mxu0
        %v3090 = vpop.f32.mrb[0].mxu0
        %v3091 = vadd.f32 %v2963, %v3090
        %v3092 = vpop.f32.mrb[0].mxu0
        %3093 = vmatprep.mubr.bf16.mxu0 0
        %3094 = vmatmul.mubr.bf16.gmra.mrb[0].mxu0 %v2940
        %v3095 = vpop.f32.mrb[0].mxu0
        %v3096 = vadd.f32 %v2963, %v3095
        %v3097 = vpop.f32.mrb[0].mxu0
        %v3098 = vpop.f32.mrb[0].mxu0
        %v3099 = vadd.f32 %v2963, %v3098
        %v3100 = vpop.f32.mrb[0].mxu0
        %3101 = vmatprep.mubr.bf16.mxu0 0
        %3102 = vmatmul.mubr.bf16.gmra.mrb[0].mxu0 %v2941
        %v3103 = vpop.f32.mrb[0].mxu0
        %v3104 = vadd.f32 %v2963, %v3103
        %v3105 = vpop.f32.mrb[0].mxu0
        %v3106 = vpop.f32.mrb[0].mxu0
        %v3107 = vadd.f32 %v2963, %v3106
        %v3108 = vpop.f32.mrb[0].mxu0
        %3109 = vdwg.mxu0
        %v3110 = vadd.f32 %v462, %v3048
        %v3111 = vadd.f32 %v463, %v3051
        %v3112 = vadd.f32 %v464, %v3056
        %v3113 = vadd.f32 %v465, %v3059
        %v3114 = vadd.f32 %v466, %v3064
        %v3115 = vadd.f32 %v467, %v3067
        %v3116 = vadd.f32 %v468, %v3072
        %v3117 = vadd.f32 %v469, %v3075
        %v3118 = vadd.f32 %v470, %v3080
        %v3119 = vadd.f32 %v471, %v3083
        %v3120 = vadd.f32 %v472, %v3088
        %v3121 = vadd.f32 %v473, %v3091
        %v3122 = vadd.f32 %v474, %v3096
        %v3123 = vadd.f32 %v475, %v3099
        %v3124 = vadd.f32 %v476, %v3104
        %v3125 = vadd.f32 %v477, %v3107
        %3126 = vadd.xlane.f32.xlu0 %v3110
        %v3127 = vpop.xlane.xlu0 %3126
        %3128 = vadd.xlane.f32.xlu0 %v3111
        %v3129 = vpop.xlane.xlu0 %3128
        %3130 = vadd.xlane.f32.xlu0 %v3112
        %v3131 = vpop.xlane.xlu0 %3130
        %3132 = vadd.xlane.f32.xlu0 %v3113
        %v3133 = vpop.xlane.xlu0 %3132
        %3134 = vadd.xlane.f32.xlu0 %v3114
        %v3135 = vpop.xlane.xlu0 %3134
        %3136 = vadd.xlane.f32.xlu0 %v3115
        %v3137 = vpop.xlane.xlu0 %3136
        %3138 = vadd.xlane.f32.xlu0 %v3116
        %v3139 = vpop.xlane.xlu0 %3138
        %3140 = vadd.xlane.f32.xlu0 %v3117
        %v3141 = vpop.xlane.xlu0 %3140
        %3142 = vadd.xlane.f32.xlu0 %v3118
        %v3143 = vpop.xlane.xlu0 %3142
        %3144 = vadd.xlane.f32.xlu0 %v3119
        %v3145 = vpop.xlane.xlu0 %3144
        %3146 = vadd.xlane.f32.xlu0 %v3120
        %v3147 = vpop.xlane.xlu0 %3146
        %3148 = vadd.xlane.f32.xlu0 %v3121
        %v3149 = vpop.xlane.xlu0 %3148
        %3150 = vadd.xlane.f32.xlu0 %v3122
        %v3151 = vpop.xlane.xlu0 %3150
        %3152 = vadd.xlane.f32.xlu0 %v3123
        %v3153 = vpop.xlane.xlu0 %3152
        %3154 = vadd.xlane.f32.xlu0 %v3124
        %v3155 = vpop.xlane.xlu0 %3154
        %3156 = vadd.xlane.f32.xlu0 %v3125
        %v3157 = vpop.xlane.xlu0 %3156
        %v3158 = vrcp.pop 128.0
        %v3159 = vmul.f32 %v3127, %v3158
        %v3160 = vmul.f32 %v3129, %v3158
        %v3161 = vmul.f32 %v3131, %v3158
        %v3162 = vmul.f32 %v3133, %v3158
        %v3163 = vmul.f32 %v3135, %v3158
        %v3164 = vmul.f32 %v3137, %v3158
        %v3165 = vmul.f32 %v3139, %v3158
        %v3166 = vmul.f32 %v3141, %v3158
        %v3167 = vmul.f32 %v3143, %v3158
        %v3168 = vmul.f32 %v3145, %v3158
        %v3169 = vmul.f32 %v3147, %v3158
        %v3170 = vmul.f32 %v3149, %v3158
        %v3171 = vmul.f32 %v3151, %v3158
        %v3172 = vmul.f32 %v3153, %v3158
        %v3173 = vmul.f32 %v3155, %v3158
        %v3174 = vmul.f32 %v3157, %v3158
        %v3175 = vsub.f32 %v3110, %v3159
        %v3176 = vsub.f32 %v3111, %v3160
        %v3177 = vsub.f32 %v3112, %v3161
        %v3178 = vsub.f32 %v3113, %v3162
        %v3179 = vsub.f32 %v3114, %v3163
        %v3180 = vsub.f32 %v3115, %v3164
        %v3181 = vsub.f32 %v3116, %v3165
        %v3182 = vsub.f32 %v3117, %v3166
        %v3183 = vsub.f32 %v3118, %v3167
        %v3184 = vsub.f32 %v3119, %v3168
        %v3185 = vsub.f32 %v3120, %v3169
        %v3186 = vsub.f32 %v3121, %v3170
        %v3187 = vsub.f32 %v3122, %v3171
        %v3188 = vsub.f32 %v3123, %v3172
        %v3189 = vsub.f32 %v3124, %v3173
        %v3190 = vsub.f32 %v3125, %v3174
        %v3191 = vmul.f32 %v3175, %v3175
        %v3192 = vmul.f32 %v3176, %v3176
        %v3193 = vmul.f32 %v3177, %v3177
        %v3194 = vmul.f32 %v3178, %v3178
        %v3195 = vmul.f32 %v3179, %v3179
        %v3196 = vmul.f32 %v3180, %v3180
        %v3197 = vmul.f32 %v3181, %v3181
        %v3198 = vmul.f32 %v3182, %v3182
        %v3199 = vmul.f32 %v3183, %v3183
        %v3200 = vmul.f32 %v3184, %v3184
        %v3201 = vmul.f32 %v3185, %v3185
        %v3202 = vmul.f32 %v3186, %v3186
        %v3203 = vmul.f32 %v3187, %v3187
        %v3204 = vmul.f32 %v3188, %v3188
        %v3205 = vmul.f32 %v3189, %v3189
        %v3206 = vmul.f32 %v3190, %v3190
        %3207 = vadd.xlane.f32.xlu0 %v3191
        %v3208 = vpop.xlane.xlu0 %3207
        %3209 = vadd.xlane.f32.xlu0 %v3192
        %v3210 = vpop.xlane.xlu0 %3209
        %3211 = vadd.xlane.f32.xlu0 %v3193
        %v3212 = vpop.xlane.xlu0 %3211
        %3213 = vadd.xlane.f32.xlu0 %v3194
        %v3214 = vpop.xlane.xlu0 %3213
        %3215 = vadd.xlane.f32.xlu0 %v3195
        %v3216 = vpop.xlane.xlu0 %3215
        %3217 = vadd.xlane.f32.xlu0 %v3196
        %v3218 = vpop.xlane.xlu0 %3217
        %3219 = vadd.xlane.f32.xlu0 %v3197
        %v3220 = vpop.xlane.xlu0 %3219
        %3221 = vadd.xlane.f32.xlu0 %v3198
        %v3222 = vpop.xlane.xlu0 %3221
        %3223 = vadd.xlane.f32.xlu0 %v3199
        %v3224 = vpop.xlane.xlu0 %3223
        %3225 = vadd.xlane.f32.xlu0 %v3200
        %v3226 = vpop.xlane.xlu0 %3225
        %3227 = vadd.xlane.f32.xlu0 %v3201
        %v3228 = vpop.xlane.xlu0 %3227
        %3229 = vadd.xlane.f32.xlu0 %v3202
        %v3230 = vpop.xlane.xlu0 %3229
        %3231 = vadd.xlane.f32.xlu0 %v3203
        %v3232 = vpop.xlane.xlu0 %3231
        %3233 = vadd.xlane.f32.xlu0 %v3204
        %v3234 = vpop.xlane.xlu0 %3233
        %3235 = vadd.xlane.f32.xlu0 %v3205
        %v3236 = vpop.xlane.xlu0 %3235
        %3237 = vadd.xlane.f32.xlu0 %v3206
        %v3238 = vpop.xlane.xlu0 %3237
        %v3239 = vmul.f32 %v3208, %v3158
        %v3240 = vmul.f32 %v3210, %v3158
        %v3241 = vmul.f32 %v3212, %v3158
        %v3242 = vmul.f32 %v3214, %v3158
        %v3243 = vmul.f32 %v3216, %v3158
        %v3244 = vmul.f32 %v3218, %v3158
        %v3245 = vmul.f32 %v3220, %v3158
        %v3246 = vmul.f32 %v3222, %v3158
        %v3247 = vmul.f32 %v3224, %v3158
        %v3248 = vmul.f32 %v3226, %v3158
        %v3249 = vmul.f32 %v3228, %v3158
        %v3250 = vmul.f32 %v3230, %v3158
        %v3251 = vmul.f32 %v3232, %v3158
        %v3252 = vmul.f32 %v3234, %v3158
        %v3253 = vmul.f32 %v3236, %v3158
        %v3254 = vmul.f32 %v3238, %v3158
        %v3255 = vadd.f32 %v3239, 1e-12
        %v3256 = vadd.f32 %v3240, 1e-12
        %v3257 = vadd.f32 %v3241, 1e-12
        %v3258 = vadd.f32 %v3242, 1e-12
        %v3259 = vadd.f32 %v3243, 1e-12
        %v3260 = vadd.f32 %v3244, 1e-12
        %v3261 = vadd.f32 %v3245, 1e-12
        %v3262 = vadd.f32 %v3246, 1e-12
        %v3263 = vadd.f32 %v3247, 1e-12
        %v3264 = vadd.f32 %v3248, 1e-12
        %v3265 = vadd.f32 %v3249, 1e-12
        %v3266 = vadd.f32 %v3250, 1e-12
        %v3267 = vadd.f32 %v3251, 1e-12
        %v3268 = vadd.f32 %v3252, 1e-12
        %v3269 = vadd.f32 %v3253, 1e-12
        %v3270 = vadd.f32 %v3254, 1e-12
        %v3271 = vrsqrt.pop %v3255
        %v3272 = vrsqrt.pop %v3256
        %v3273 = vrsqrt.pop %v3257
        %v3274 = vrsqrt.pop %v3258
        %v3275 = vrsqrt.pop %v3259
        %v3276 = vrsqrt.pop %v3260
        %v3277 = vrsqrt.pop %v3261
        %v3278 = vrsqrt.pop %v3262
        %v3279 = vrsqrt.pop %v3263
        %v3280 = vrsqrt.pop %v3264
        %v3281 = vrsqrt.pop %v3265
        %v3282 = vrsqrt.pop %v3266
        %v3283 = vrsqrt.pop %v3267
        %v3284 = vrsqrt.pop %v3268
        %v3285 = vrsqrt.pop %v3269
        %v3286 = vrsqrt.pop %v3270
        %v3287 = vmul.f32 %v3175, %v3271
        %v3288 = vmul.f32 %v3176, %v3272
        %v3289 = vmul.f32 %v3177, %v3273
        %v3290 = vmul.f32 %v3178, %v3274
        %v3291 = vmul.f32 %v3179, %v3275
        %v3292 = vmul.f32 %v3180, %v3276
        %v3293 = vmul.f32 %v3181, %v3277
        %v3294 = vmul.f32 %v3182, %v3278
        %v3295 = vmul.f32 %v3183, %v3279
        %v3296 = vmul.f32 %v3184, %v3280
        %v3297 = vmul.f32 %v3185, %v3281
        %v3298 = vmul.f32 %v3186, %v3282
        %v3299 = vmul.f32 %v3187, %v3283
        %v3300 = vmul.f32 %v3188, %v3284
        %v3301 = vmul.f32 %v3189, %v3285
        %v3302 = vmul.f32 %v3190, %v3286
        %v3303 = vld [vmem:[%s8] sm:$0x1]
        %v3305 = vlaneseq
        %v3306 = vshrl.u32 %v3305, 7
        %v3307 = vsub.s32 0, %v3306
        %v3308 = vrot.slane %v3303, %v3307
        %v3310 = vmul.f32 %v3287, %v3308
        %v3311 = vmul.f32 %v3288, %v3308
        %v3312 = vmul.f32 %v3289, %v3308
        %v3313 = vmul.f32 %v3290, %v3308
        %v3314 = vmul.f32 %v3291, %v3308
        %v3315 = vmul.f32 %v3292, %v3308
        %v3316 = vmul.f32 %v3293, %v3308
        %v3317 = vmul.f32 %v3294, %v3308
        %v3318 = vmul.f32 %v3295, %v3308
        %v3319 = vmul.f32 %v3296, %v3308
        %v3320 = vmul.f32 %v3297, %v3308
        %v3321 = vmul.f32 %v3298, %v3308
        %v3322 = vmul.f32 %v3299, %v3308
        %v3323 = vmul.f32 %v3300, %v3308
        %v3324 = vmul.f32 %v3301, %v3308
        %v3325 = vmul.f32 %v3302, %v3308
        %v3326 = vld [vmem:[%s9] sm:$0x1]
        %v3328 = vlaneseq
        %v3329 = vshrl.u32 %v3328, 7
        %v3330 = vsub.s32 0, %v3329
        %v3331 = vrot.slane %v3326, %v3330
        %v3333 = vadd.f32 %v3310, %v3331
        %v3334 = vadd.f32 %v3311, %v3331
        %v3335 = vadd.f32 %v3312, %v3331
        %v3336 = vadd.f32 %v3313, %v3331
        %v3337 = vadd.f32 %v3314, %v3331
        %v3338 = vadd.f32 %v3315, %v3331
        %v3339 = vadd.f32 %v3316, %v3331
        %v3340 = vadd.f32 %v3317, %v3331
        %v3341 = vadd.f32 %v3318, %v3331
        %v3342 = vadd.f32 %v3319, %v3331
        %v3343 = vadd.f32 %v3320, %v3331
        %v3344 = vadd.f32 %v3321, %v3331
        %v3345 = vadd.f32 %v3322, %v3331
        %v3346 = vadd.f32 %v3323, %v3331
        %v3347 = vadd.f32 %v3324, %v3331
        %v3348 = vadd.f32 %v3325, %v3331
        %3349 = vst [vmem:[%s460] sm:$0xff] %v3333
        %3350 = vst [vmem:[%s460 + $0x8] sm:$0xff] %v3334
        %3351 = vst [vmem:[%s460 + $0x10] sm:$0xff] %v3335
        %3352 = vst [vmem:[%s460 + $0x18] sm:$0xff] %v3336
        %3353 = vst [vmem:[%s460 + $0x20] sm:$0xff] %v3337
        %3354 = vst [vmem:[%s460 + $0x28] sm:$0xff] %v3338
        %3355 = vst [vmem:[%s460 + $0x30] sm:$0xff] %v3339
        %3356 = vst [vmem:[%s460 + $0x38] sm:$0xff] %v3340
        %3357 = vst [vmem:[%s460 + $0x40] sm:$0xff] %v3341
        %3358 = vst [vmem:[%s460 + $0x48] sm:$0xff] %v3342
        %3359 = vst [vmem:[%s460 + $0x50] sm:$0xff] %v3343
        %3360 = vst [vmem:[%s460 + $0x58] sm:$0xff] %v3344
        %3361 = vst [vmem:[%s460 + $0x60] sm:$0xff] %v3345
        %3362 = vst [vmem:[%s460 + $0x68] sm:$0xff] %v3346
        %3363 = vst [vmem:[%s460 + $0x70] sm:$0xff] %v3347
        %3364 = vst [vmem:[%s460 + $0x78] sm:$0xff] %v3348
        %s3365 = sand.u32 %s259, 1
        %s3366 = scalar_lea.sflag [#allocation4], %s3365
        %s3367 = sand.u32 %s259, 1
        %s3368 = smul.addr %s3367, 128
        %s3369 = scalar_lea.vmem [#allocation11], %s3368
        // Predicated region
        $region81: #{tpu_custom_call.1} parent=59 // pred_check
          %p3370 = pneg %p269
        $region82: #{tpu_custom_call.1} parent=59 // pred_check_branch
          %3372 = sbr.rel (%p3370) target = $region84
        $region83: #{tpu_custom_call.1} parent=59 // pred_region
          %s3374 = ssub.s32 2048, 2048
          %3375 = vsyncadd %s3366, %s3374
          %s3376 = smul.addr %s31, 16
          %s3377 = smul.addr %s3376, 128
          %s3378 = scalar_lea.hbm %s10, %s3377
          %s3379 = sshll.u32 %s3369, 4
          %s3380 = int_to_ptr.vmem [resolvable:$true] %s3379
          %3385 = dma.vmem_to_hbm [thread:$0]  %s3380, 2048, %s3378, %s3366, 128, 128, 8
        $region84: #{tpu_custom_call.1} parent=59 // pred_fallthru
          _
      $region60: #{tpu_custom_call.1} parent=5 // pred_fallthru
        _
      %p3386 = scmp.le.s32.totalorder 2, %s26
      // Predicated region
      $region85: #{tpu_custom_call.1} parent=5 // pred_check
        %p3387 = pneg %p3386
      $region86: #{tpu_custom_call.1} parent=5 // pred_check_branch
        %3389 = sbr.rel (%p3387) target = $region88
      $region87: #{tpu_custom_call.1} parent=5 // pred_region
        %s3390 = ssub.s32 %s26, 2
        // Predicated region
        $region89: #{tpu_custom_call.1} parent=87 // pred_check
          %p3391 = pneg %p275
        $region90: #{tpu_custom_call.1} parent=87 // pred_check_branch
          %3393 = sbr.rel (%p3391) target = $region92
        $region91: #{tpu_custom_call.1} parent=87 // pred_region
          %s3394 = sand.u32 %s260, 1
          %s3395 = scalar_lea.sflag [#allocation4], %s3394
          %s3396 = sand.u32 %s260, 1
          %s3397 = smul.addr %s3396, 128
          %s3398 = scalar_lea.vmem [#allocation11], %s3397
          %3399 = dma.done %s3395, 2048
        $region92: #{tpu_custom_call.1} parent=87 // pred_fallthru
          _
      $region88: #{tpu_custom_call.1} parent=5 // pred_fallthru
        _
    $region6: #{tpu_custom_call.1} parent=1 // loop_footer
      %s30 = sadd.s32 1, %s26
    $region7: #{tpu_custom_call.1} parent=1 // loop_footer_branch
      %25 = sbr.rel target = $region3
    $region8: #{tpu_custom_call.1} parent=1 // loop_exit
      _
    %3400 = vsyncpa [#allocation3], 1
    %s3401 = scalar_lea.sflag [#allocation3], 1
    %3402 = vsyncpa %s3401, 1
    %3403 = vsyncpa [#allocation6], 1
    %s3404 = scalar_lea.sflag [#allocation6], 1
    %3405 = vsyncpa %s3404, 1
    %3406 = vsyncpa [#allocation9], 1
    %3407 = vsyncpa [#allocation4], 1
    %s3408 = scalar_lea.sflag [#allocation4], 1
    %3409 = vsyncpa %s3408, 1

</llo_original>
